<compile_context>
chip_gen: v7x
topology: tpu7x:2x2x1
jax: 0.10.0
libtpu: 0.0.40
codegen_flags: <defaults>
</compile_context>

<pallas_src>
import jax
import jax.numpy as jnp
from jax.experimental import pallas as pl
from jax.experimental.pallas import tpu as pltpu

NEG_SLOPE = 0.01   # PyTorch nn.LeakyReLU default
LANE = 128         # TPU lane width: pad last layer's output columns to this


def _leaky_relu(x):
    return jnp.where(x > 0, x, NEG_SLOPE * x)


def _round_up(n, m):
    return (n + m - 1) // m * m


def mlp_kernel(x_ref, w1_ref, b1_ref,
               w2_ref, s2_ref, b2_ref,
               w3_ref, s3_ref, b3_ref,
               w4_ref, s4_ref, b4_ref, o_ref):
    """One batch tile through the full 4-layer MLP.

    Layer 1 is fp32. Layers 2-4 use int8 weights: cast int8->bf16 (exact),
    bf16 MXU dot with fp32 accumulation, per-output-channel fp32 scale applied
    to the accumulated result. Bias/activation math stays in fp32.
    """
    # Layer 1 (16 -> 2048): full fp32, preserves input precision; tiny weight tile.
    h = jnp.dot(x_ref[...], w1_ref[...], preferred_element_type=jnp.float32)
    h = _leaky_relu(h + b1_ref[...])

    def qdot(a, wq_ref, s_ref):
        acc = jnp.dot(a.astype(jnp.bfloat16),
                      wq_ref[...].astype(jnp.bfloat16),
                      preferred_element_type=jnp.float32)
        return acc * s_ref[...]

    h = _leaky_relu(qdot(h, w2_ref, s2_ref) + b2_ref[...])
    h = _leaky_relu(qdot(h, w3_ref, s3_ref) + b3_ref[...])
    o_ref[...] = jnp.tanh(qdot(h, w4_ref, s4_ref) + b4_ref[...]).astype(o_ref.dtype)


def mlp_forward(x, params, out_features=3, tile_b=512):
    """x: [B, in_features] fp32. params: prepared (int8 weights + scales, padded w4)."""
    w1, b1, w2q, s2, b2, w3q, s3, b3, w4q, s4, b4 = params
    B, in_f = x.shape
    out_pad = w4q.shape[1]  # 128 (lane-dense padded output width)

    # Batch tiling: multiples of 16 (bf16 sublane packing). Mid-size batches get
    # >=2 grid steps so the "parallel" batch axis can span both v7x TensorCores.
    if B <= 64:
        tb = _round_up(max(B, 1), 16)
    elif B <= tile_b:
        tb = _round_up(pl.cdiv(B, 2), 16)
    else:
        tb = tile_b
    B_pad = _round_up(B, tb)
    if B_pad != B:
        x = jnp.pad(x, ((0, B_pad - B), (0, 0)))

    grid = (B_pad // tb,)
    const2 = lambda i: (0, 0)   # weights/biases/scales: same block every step -> VMEM-resident

    consts = (w1, b1, w2q, s2, b2, w3q, s3, b3, w4q, s4, b4)
    weight_bytes = sum(int(a.size) * a.dtype.itemsize for a in consts)
    flops = 2 * B_pad * (in_f * w1.shape[1]
                         + w2q.shape[0] * w2q.shape[1]
                         + w3q.shape[0] * w3q.shape[1]
                         + w4q.shape[0] * out_pad)
    cost = pl.CostEstimate(
        flops=flops,
        transcendentals=B_pad * out_pad,  # tanh on the padded output slab
        bytes_accessed=weight_bytes
        + int(x.size) * x.dtype.itemsize
        + B_pad * out_pad * 2,            # bf16 output writeback
    )

    out = pl.pallas_call(
        mlp_kernel,
        out_shape=jax.ShapeDtypeStruct((B_pad, out_pad), jnp.bfloat16),
        grid=grid,
        in_specs=[
            pl.BlockSpec((tb, in_f), lambda i: (i, 0)),  # x: tiled over batch
            pl.BlockSpec(w1.shape, const2),
            pl.BlockSpec(b1.shape, const2),
            pl.BlockSpec(w2q.shape, const2),
            pl.BlockSpec(s2.shape, const2),
            pl.BlockSpec(b2.shape, const2),
            pl.BlockSpec(w3q.shape, const2),
            pl.BlockSpec(s3.shape, const2),
            pl.BlockSpec(b3.shape, const2),
            pl.BlockSpec(w4q.shape, const2),
            pl.BlockSpec(s4.shape, const2),
            pl.BlockSpec(b4.shape, const2),
        ],
        out_specs=pl.BlockSpec((tb, out_pad), lambda i: (i, 0)),
        compiler_params=pltpu.CompilerParams(
            dimension_semantics=("parallel",),  # megacore split on v7x (grid >= 2)
            vmem_limit_bytes=32 << 20,          # safe on v7x's 64 MiB/TC VMEM
        ),
        cost_estimate=cost,
    )(x, *consts)

    return out[:B, :out_features].astype(jnp.float32)


def init_params(key, dims):
    """PyTorch-style uniform(-1/sqrt(fan_in), 1/sqrt(fan_in)) init (fp32).

    Weights are [in, out] (transpose of PyTorch's [out, in]); biases [1, out].
    """
    params = []
    for fan_in, fan_out in zip(dims[:-1], dims[1:]):
        key, kw, kb = jax.random.split(key, 3)
        bound = 1.0 / jnp.sqrt(jnp.float32(fan_in))
        w = jax.random.uniform(kw, (fan_in, fan_out), jnp.float32,
                               minval=-bound, maxval=bound)
        b = jax.random.uniform(kb, (1, fan_out), jnp.float32,
                               minval=-bound, maxval=bound)
        params.extend([w, b])
    return params


def _quantize_per_col(w):
    """Symmetric per-output-channel int8 quantization: w ~= q * scale."""
    absmax = jnp.max(jnp.abs(w), axis=0, keepdims=True)
    scale = jnp.where(absmax > 0, absmax / 127.0, 1.0).astype(jnp.float32)
    q = jnp.clip(jnp.round(w / scale), -127, 127).astype(jnp.int8)
    return q, scale


def prepare_params(params_f32):
    """Keep layer 1 fp32; int8-quantize layers 2-4; pad last layer to 128 cols."""
    w1, b1, w2, b2, w3, b3, w4, b4 = params_f32
    out = w4.shape[1]
    pad = LANE - out
    w4p = jnp.pad(w4, ((0, 0), (0, pad)))
    b4p = jnp.pad(b4, ((0, 0), (0, pad)))
    w2q, s2 = _quantize_per_col(w2)
    w3q, s3 = _quantize_per_col(w3)
    w4q, s4 = _quantize_per_col(w4p)
    return [w1, b1, w2q, s2, b2, w3q, s3, b3, w4q, s4, b4p]


def mlp_reference(x, params, out_features):
    """Plain-JAX reference mirroring the kernel's fp32/int8-bf16 mixed precision."""
    w1, b1, w2q, s2, b2, w3q, s3, b3, w4q, s4, b4 = params

    def qdot(a, wq, s):
        return jnp.dot(a.astype(jnp.bfloat16), wq.astype(jnp.bfloat16),
                       preferred_element_type=jnp.float32) * s

    h = jnp.dot(x, w1, preferred_element_type=jnp.float32,
                precision=jax.lax.Precision.HIGHEST)
    h = _leaky_relu(h + b1)
    h = _leaky_relu(qdot(h, w2q, s2) + b2)
    h = _leaky_relu(qdot(h, w3q, s3) + b3)
    return jnp.tanh(qdot(h, w4q, s4) + b4)[:, :out_features]


if __name__ == "__main__":
    key = jax.random.PRNGKey(0)
    k_params, k_x = jax.random.split(key)

    in_features, out_features = 16, 3
    dims = (in_features, 2048, 512, 512, out_features)
    params = prepare_params(init_params(k_params, dims))

    batch = 8
    x = jax.random.normal(k_x, (batch, in_features), jnp.float32)

    fwd = jax.jit(mlp_forward, static_argnames=("out_features", "tile_b"))
    out = jax.block_until_ready(fwd(x, params, out_features=out_features))

    ref = mlp_reference(x, params, out_features)
    assert out.shape == (batch, out_features), out.shape
    max_err = float(jnp.max(jnp.abs(out - ref)))
    assert jnp.allclose(out, ref, atol=1e-2, rtol=1e-2), max_err

    print("KERNEL_OK")
</pallas_src>

<mosaic_0001>
module attributes {stable_mosaic.version = 11 : i64} {
  func.func @mlp_kernel(%arg0: i32, %arg1: memref<16x16xf32, #tpu.memory_space<vmem>>, %arg2: memref<16x2048xf32, #tpu.memory_space<vmem>>, %arg3: memref<1x2048xf32, #tpu.memory_space<vmem>>, %arg4: memref<2048x512xi8, #tpu.memory_space<vmem>>, %arg5: memref<1x512xf32, #tpu.memory_space<vmem>>, %arg6: memref<1x512xf32, #tpu.memory_space<vmem>>, %arg7: memref<512x512xi8, #tpu.memory_space<vmem>>, %arg8: memref<1x512xf32, #tpu.memory_space<vmem>>, %arg9: memref<1x512xf32, #tpu.memory_space<vmem>>, %arg10: memref<512x128xi8, #tpu.memory_space<vmem>>, %arg11: memref<1x128xf32, #tpu.memory_space<vmem>>, %arg12: memref<1x128xf32, #tpu.memory_space<vmem>>, %arg13: memref<16x128xbf16, #tpu.memory_space<vmem>>) attributes {dimension_semantics = [#tpu.dimension_semantics<parallel>], iteration_bounds = array<i64: 1>, scalar_prefetch = 0 : i64, scratch_operands = 0 : i64, tpu.core_type = #tpu.core_type<tc>, window_params = [{transform_indices = @transform_0, window_bounds = array<i64: 16, 16>}, {pipeline_mode = #tpu.pipeline_mode<synchronous>, transform_indices = @transform_1, window_bounds = array<i64: 16, 2048>}, {pipeline_mode = #tpu.pipeline_mode<synchronous>, transform_indices = @transform_2, window_bounds = array<i64: 1, 2048>}, {pipeline_mode = #tpu.pipeline_mode<synchronous>, transform_indices = @transform_3, window_bounds = array<i64: 2048, 512>}, {pipeline_mode = #tpu.pipeline_mode<synchronous>, transform_indices = @transform_4, window_bounds = array<i64: 1, 512>}, {pipeline_mode = #tpu.pipeline_mode<synchronous>, transform_indices = @transform_5, window_bounds = array<i64: 1, 512>}, {pipeline_mode = #tpu.pipeline_mode<synchronous>, transform_indices = @transform_6, window_bounds = array<i64: 512, 512>}, {pipeline_mode = #tpu.pipeline_mode<synchronous>, transform_indices = @transform_7, window_bounds = array<i64: 1, 512>}, {pipeline_mode = #tpu.pipeline_mode<synchronous>, transform_indices = @transform_8, window_bounds = array<i64: 1, 512>}, {pipeline_mode = #tpu.pipeline_mode<synchronous>, transform_indices = @transform_9, window_bounds = array<i64: 512, 128>}, {pipeline_mode = #tpu.pipeline_mode<synchronous>, transform_indices = @transform_10, window_bounds = array<i64: 1, 128>}, {pipeline_mode = #tpu.pipeline_mode<synchronous>, transform_indices = @transform_11, window_bounds = array<i64: 1, 128>}, {transform_indices = @transform_12, window_bounds = array<i64: 16, 128>}]} {
    %c0 = arith.constant 0 : index
    %c0_0 = arith.constant 0 : index
    %0 = vector.load %arg1[%c0, %c0_0] : memref<16x16xf32, #tpu.memory_space<vmem>>, vector<16x16xf32>
    %c0_1 = arith.constant 0 : index
    %c0_2 = arith.constant 0 : index
    %1 = vector.load %arg2[%c0_1, %c0_2] : memref<16x2048xf32, #tpu.memory_space<vmem>>, vector<16x2048xf32>
    %cst = arith.constant dense<0.000000e+00> : vector<16x2048xf32>
    %2 = tpu.matmul %0, %1, %cst {dimension_numbers = #tpu.dot_dimension_numbers<[1], [0], [0], [1], [0, 0, 1, 1], [], []>} : vector<16x16xf32>, vector<16x2048xf32>, vector<16x2048xf32> -> vector<16x2048xf32>
    %c0_3 = arith.constant 0 : index
    %c0_4 = arith.constant 0 : index
    %3 = vector.load %arg3[%c0_3, %c0_4] : memref<1x2048xf32, #tpu.memory_space<vmem>>, vector<1x2048xf32>
    %4 = vector.broadcast %3 : vector<1x2048xf32> to vector<16x2048xf32>
    %5 = arith.addf %2, %4 : vector<16x2048xf32>
    %cst_5 = arith.constant 0.000000e+00 : f32
    %6 = vector.broadcast %cst_5 : f32 to vector<16x2048xf32>
    %7 = arith.cmpf ogt, %5, %6 : vector<16x2048xf32>
    %cst_6 = arith.constant 0.00999999977 : f32
    %8 = vector.broadcast %cst_6 : f32 to vector<16x2048xf32>
    %9 = arith.mulf %8, %5 : vector<16x2048xf32>
    %10 = arith.select %7, %5, %9 : vector<16x2048xi1>, vector<16x2048xf32>
    %11 = arith.truncf %10 : vector<16x2048xf32> to vector<16x2048xbf16>
    %c0_7 = arith.constant 0 : index
    %c0_8 = arith.constant 0 : index
    %12 = vector.load %arg4[%c0_7, %c0_8] : memref<2048x512xi8, #tpu.memory_space<vmem>>, vector<2048x512xi8>
    %13 = arith.sitofp %12 : vector<2048x512xi8> to vector<2048x512xbf16>
    %cst_9 = arith.constant dense<0.000000e+00> : vector<16x512xf32>
    %14 = tpu.matmul %11, %13, %cst_9 {dimension_numbers = #tpu.dot_dimension_numbers<[1], [0], [0], [1], [0, 0, 1, 1], [], []>} : vector<16x2048xbf16>, vector<2048x512xbf16>, vector<16x512xf32> -> vector<16x512xf32>
    %c0_10 = arith.constant 0 : index
    %c0_11 = arith.constant 0 : index
    %15 = vector.load %arg5[%c0_10, %c0_11] : memref<1x512xf32, #tpu.memory_space<vmem>>, vector<1x512xf32>
    %16 = vector.broadcast %15 : vector<1x512xf32> to vector<16x512xf32>
    %17 = arith.mulf %14, %16 : vector<16x512xf32>
    %c0_12 = arith.constant 0 : index
    %c0_13 = arith.constant 0 : index
    %18 = vector.load %arg6[%c0_12, %c0_13] : memref<1x512xf32, #tpu.memory_space<vmem>>, vector<1x512xf32>
    %19 = vector.broadcast %18 : vector<1x512xf32> to vector<16x512xf32>
    %20 = arith.addf %17, %19 : vector<16x512xf32>
    %cst_14 = arith.constant 0.000000e+00 : f32
    %21 = vector.broadcast %cst_14 : f32 to vector<16x512xf32>
    %22 = arith.cmpf ogt, %20, %21 : vector<16x512xf32>
    %cst_15 = arith.constant 0.00999999977 : f32
    %23 = vector.broadcast %cst_15 : f32 to vector<16x512xf32>
    %24 = arith.mulf %23, %20 : vector<16x512xf32>
    %25 = arith.select %22, %20, %24 : vector<16x512xi1>, vector<16x512xf32>
    %26 = arith.truncf %25 : vector<16x512xf32> to vector<16x512xbf16>
    %c0_16 = arith.constant 0 : index
    %c0_17 = arith.constant 0 : index
    %27 = vector.load %arg7[%c0_16, %c0_17] : memref<512x512xi8, #tpu.memory_space<vmem>>, vector<512x512xi8>
    %28 = arith.sitofp %27 : vector<512x512xi8> to vector<512x512xbf16>
    %cst_18 = arith.constant dense<0.000000e+00> : vector<16x512xf32>
    %29 = tpu.matmul %26, %28, %cst_18 {dimension_numbers = #tpu.dot_dimension_numbers<[1], [0], [0], [1], [0, 0, 1, 1], [], []>} : vector<16x512xbf16>, vector<512x512xbf16>, vector<16x512xf32> -> vector<16x512xf32>
    %c0_19 = arith.constant 0 : index
    %c0_20 = arith.constant 0 : index
    %30 = vector.load %arg8[%c0_19, %c0_20] : memref<1x512xf32, #tpu.memory_space<vmem>>, vector<1x512xf32>
    %31 = vector.broadcast %30 : vector<1x512xf32> to vector<16x512xf32>
    %32 = arith.mulf %29, %31 : vector<16x512xf32>
    %c0_21 = arith.constant 0 : index
    %c0_22 = arith.constant 0 : index
    %33 = vector.load %arg9[%c0_21, %c0_22] : memref<1x512xf32, #tpu.memory_space<vmem>>, vector<1x512xf32>
    %34 = vector.broadcast %33 : vector<1x512xf32> to vector<16x512xf32>
    %35 = arith.addf %32, %34 : vector<16x512xf32>
    %cst_23 = arith.constant 0.000000e+00 : f32
    %36 = vector.broadcast %cst_23 : f32 to vector<16x512xf32>
    %37 = arith.cmpf ogt, %35, %36 : vector<16x512xf32>
    %cst_24 = arith.constant 0.00999999977 : f32
    %38 = vector.broadcast %cst_24 : f32 to vector<16x512xf32>
    %39 = arith.mulf %38, %35 : vector<16x512xf32>
    %40 = arith.select %37, %35, %39 : vector<16x512xi1>, vector<16x512xf32>
    %41 = arith.truncf %40 : vector<16x512xf32> to vector<16x512xbf16>
    %c0_25 = arith.constant 0 : index
    %c0_26 = arith.constant 0 : index
    %42 = vector.load %arg10[%c0_25, %c0_26] : memref<512x128xi8, #tpu.memory_space<vmem>>, vector<512x128xi8>
    %43 = arith.sitofp %42 : vector<512x128xi8> to vector<512x128xbf16>
    %cst_27 = arith.constant dense<0.000000e+00> : vector<16x128xf32>
    %44 = tpu.matmul %41, %43, %cst_27 {dimension_numbers = #tpu.dot_dimension_numbers<[1], [0], [0], [1], [0, 0, 1, 1], [], []>} : vector<16x512xbf16>, vector<512x128xbf16>, vector<16x128xf32> -> vector<16x128xf32>
    %c0_28 = arith.constant 0 : index
    %c0_29 = arith.constant 0 : index
    %45 = vector.load %arg11[%c0_28, %c0_29] : memref<1x128xf32, #tpu.memory_space<vmem>>, vector<1x128xf32>
    %46 = vector.broadcast %45 : vector<1x128xf32> to vector<16x128xf32>
    %47 = arith.mulf %44, %46 : vector<16x128xf32>
    %c0_30 = arith.constant 0 : index
    %c0_31 = arith.constant 0 : index
    %48 = vector.load %arg12[%c0_30, %c0_31] : memref<1x128xf32, #tpu.memory_space<vmem>>, vector<1x128xf32>
    %49 = vector.broadcast %48 : vector<1x128xf32> to vector<16x128xf32>
    %50 = arith.addf %47, %49 : vector<16x128xf32>
    %51 = math.tanh %50 : vector<16x128xf32>
    %52 = arith.truncf %51 : vector<16x128xf32> to vector<16x128xbf16>
    %c0_32 = arith.constant 0 : index
    %c0_33 = arith.constant 0 : index
    %53 = vector.load %arg13[%c0_32, %c0_33] : memref<16x128xbf16, #tpu.memory_space<vmem>>, vector<16x128xbf16>
    tpu.vector_store %arg13[%c0_32, %c0_33], %52 {strides = array<i32>} : memref<16x128xbf16, #tpu.memory_space<vmem>>, vector<16x128xbf16>,
    return
  }
  func.func @transform_0(%arg0: i32) -> (i32, i32) {
    %c0_i32 = arith.constant 0 : i32
    %c0_i32_0 = arith.constant 0 : i32
    return %arg0, %c0_i32 : i32, i32
  }
  func.func @transform_1(%arg0: i32) -> (i32, i32) {
    %c0_i32 = arith.constant 0 : i32
    %c0_i32_0 = arith.constant 0 : i32
    %c0_i32_1 = arith.constant 0 : i32
    return %c0_i32, %c0_i32_0 : i32, i32
  }
  func.func @transform_2(%arg0: i32) -> (i32, i32) {
    %c0_i32 = arith.constant 0 : i32
    %c0_i32_0 = arith.constant 0 : i32
    %c0_i32_1 = arith.constant 0 : i32
    return %c0_i32, %c0_i32_0 : i32, i32
  }
  func.func @transform_3(%arg0: i32) -> (i32, i32) {
    %c0_i32 = arith.constant 0 : i32
    %c0_i32_0 = arith.constant 0 : i32
    %c0_i32_1 = arith.constant 0 : i32
    return %c0_i32, %c0_i32_0 : i32, i32
  }
  func.func @transform_4(%arg0: i32) -> (i32, i32) {
    %c0_i32 = arith.constant 0 : i32
    %c0_i32_0 = arith.constant 0 : i32
    %c0_i32_1 = arith.constant 0 : i32
    return %c0_i32, %c0_i32_0 : i32, i32
  }
  func.func @transform_5(%arg0: i32) -> (i32, i32) {
    %c0_i32 = arith.constant 0 : i32
    %c0_i32_0 = arith.constant 0 : i32
    %c0_i32_1 = arith.constant 0 : i32
    return %c0_i32, %c0_i32_0 : i32, i32
  }
  func.func @transform_6(%arg0: i32) -> (i32, i32) {
    %c0_i32 = arith.constant 0 : i32
    %c0_i32_0 = arith.constant 0 : i32
    %c0_i32_1 = arith.constant 0 : i32
    return %c0_i32, %c0_i32_0 : i32, i32
  }
  func.func @transform_7(%arg0: i32) -> (i32, i32) {
    %c0_i32 = arith.constant 0 : i32
    %c0_i32_0 = arith.constant 0 : i32
    %c0_i32_1 = arith.constant 0 : i32
    return %c0_i32, %c0_i32_0 : i32, i32
  }
  func.func @transform_8(%arg0: i32) -> (i32, i32) {
    %c0_i32 = arith.constant 0 : i32
    %c0_i32_0 = arith.constant 0 : i32
    %c0_i32_1 = arith.constant 0 : i32
    return %c0_i32, %c0_i32_0 : i32, i32
  }
  func.func @transform_9(%arg0: i32) -> (i32, i32) {
    %c0_i32 = arith.constant 0 : i32
    %c0_i32_0 = arith.constant 0 : i32
    %c0_i32_1 = arith.constant 0 : i32
    return %c0_i32, %c0_i32_0 : i32, i32
  }
  func.func @transform_10(%arg0: i32) -> (i32, i32) {
    %c0_i32 = arith.constant 0 : i32
    %c0_i32_0 = arith.constant 0 : i32
    %c0_i32_1 = arith.constant 0 : i32
    return %c0_i32, %c0_i32_0 : i32, i32
  }
  func.func @transform_11(%arg0: i32) -> (i32, i32) {
    %c0_i32 = arith.constant 0 : i32
    %c0_i32_0 = arith.constant 0 : i32
    %c0_i32_1 = arith.constant 0 : i32
    return %c0_i32, %c0_i32_0 : i32, i32
  }
  func.func @transform_12(%arg0: i32) -> (i32, i32) {
    %c0_i32 = arith.constant 0 : i32
    %c0_i32_0 = arith.constant 0 : i32
    return %arg0, %c0_i32 : i32, i32
  }
}

</mosaic_0001>

<llo_original>
// kernel: mlp_forward.1
$region0: #{mlp_forward.1}
  #allocation0 [shape = 'u32[]', space=smem, size = 0x4, offset = 0x4, fixed_abs, tag = 'smem constant byte address 0x4 - core index']
  #allocation1 [shape = 'u32[144,128]{1,0:T(1,128)}', space=vmem, size = 0x12000, scoped, tag = 'internal scratch']
  %s0 = inlined_call_operand.vmem [shape: f32[16,16], index: 0, kind: input, shape index: {}]
  %s1 = inlined_call_operand.hbm [shape: f32[16,2048], index: 1, kind: input, shape index: {}]
  %s2 = inlined_call_operand.vmem [shape: f32[1,2048], index: 2, kind: input, shape index: {}]
  %s3 = inlined_call_operand.hbm [shape: s8[2048,512], index: 3, kind: input, shape index: {}]
  %s4 = inlined_call_operand.vmem [shape: f32[1,512], index: 4, kind: input, shape index: {}]
  %s5 = inlined_call_operand.vmem [shape: f32[1,512], index: 5, kind: input, shape index: {}]
  %s6 = inlined_call_operand.hbm [shape: s8[512,512], index: 6, kind: input, shape index: {}]
  %s7 = inlined_call_operand.vmem [shape: f32[1,512], index: 7, kind: input, shape index: {}]
  %s8 = inlined_call_operand.vmem [shape: f32[1,512], index: 8, kind: input, shape index: {}]
  %s9 = inlined_call_operand.hbm [shape: s8[512,128], index: 9, kind: input, shape index: {}]
  %s10 = inlined_call_operand.vmem [shape: f32[1,128], index: 10, kind: input, shape index: {}]
  %s11 = inlined_call_operand.vmem [shape: f32[1,128], index: 11, kind: input, shape index: {}]
  %s12 = inlined_call_operand.vmem [shape: bf16[16,128], index: 12, kind: output, shape index: {}]
  %s13 = sld [smem:[#allocation0]]
  $region74: #{mlp_forward.1} parent=0
    _
  %s15 = ssub.s32 1, %s13
  %s16 = scalar_select 0, %s15, %s13
  $region1: #{mlp_forward.1} parent=0
    #allocation2 [shape = 'u8[131072]{0}', space=vmem, size = 0x20000, scoped, tag = 'input window, operand 1, single buffered']
    #allocation3 [shape = 's32[1]{0}', space=sflag, size = 0x4, scoped, tag = 'scoped memory for mlp_forward.1']
    #allocation4 [shape = 'u8[1048576]{0}', space=vmem, size = 0x100000, scoped, tag = 'input window, operand 3, single buffered']
    #allocation5 [shape = 's32[1]{0}', space=sflag, size = 0x4, scoped, tag = 'scoped memory for mlp_forward.1']
    #allocation6 [shape = 'u8[262144]{0}', space=vmem, size = 0x40000, scoped, tag = 'input window, operand 6, single buffered']
    #allocation7 [shape = 'u8[65536]{0}', space=vmem, size = 0x10000, scoped, tag = 'input window, operand 9, single buffered']
    #allocation8 [shape = 's32[1]{0}', space=sflag, size = 0x4, scoped, tag = 'scoped memory for mlp_forward.1']
    %17 = vsyncpa [#allocation3], 0
    %18 = vsyncpa [#allocation5], 0
    %19 = vsyncpa [#allocation8], 0
    // Predicated region
    $region2: #{mlp_forward.1} parent=1 // pred_check
      _
    $region3: #{mlp_forward.1} parent=1 // pred_check_branch
      %21 = sbr.rel (0) target = $region5
    $region4: #{mlp_forward.1} parent=1 // pred_region
      _
    $region5: #{mlp_forward.1} parent=1 // pred_fallthru
      _
    // Predicated region
    $region6: #{mlp_forward.1} parent=1 // pred_check
      _
    $region7: #{mlp_forward.1} parent=1 // pred_check_branch
      %23 = sbr.rel (0) target = $region9
    $region8: #{mlp_forward.1} parent=1 // pred_region
      %s25 = ssub.s32 4096, 4096
      %26 = vsyncadd [#allocation3], %s25
      %s27 = sshll.u32 [#allocation2], 4
      %s28 = int_to_ptr.vmem [resolvable:$true] %s27
      %33 = dma.hbm_to_vmem [thread:$0]  %s1, 4096, %s28, [#allocation3], 2048, 2048, 128
    $region9: #{mlp_forward.1} parent=1 // pred_fallthru
      _
    // Predicated region
    $region10: #{mlp_forward.1} parent=1 // pred_check
      _
    $region11: #{mlp_forward.1} parent=1 // pred_check_branch
      %35 = sbr.rel (0) target = $region13
    $region12: #{mlp_forward.1} parent=1 // pred_region
      _
    $region13: #{mlp_forward.1} parent=1 // pred_fallthru
      _
    // Predicated region
    $region14: #{mlp_forward.1} parent=1 // pred_check
      _
    $region15: #{mlp_forward.1} parent=1 // pred_check_branch
      %37 = sbr.rel (0) target = $region17
    $region16: #{mlp_forward.1} parent=1 // pred_region
      %s39 = ssub.s32 32768, 32768
      %40 = vsyncadd [#allocation5], %s39
      %s41 = sshll.u32 [#allocation4], 4
      %s42 = int_to_ptr.vmem [resolvable:$true] %s41
      %47 = dma.hbm_to_vmem [thread:$0]  %s3, 32768, %s42, [#allocation5], 512, 512, 32
    $region17: #{mlp_forward.1} parent=1 // pred_fallthru
      _
    // Predicated region
    $region18: #{mlp_forward.1} parent=1 // pred_check
      _
    $region19: #{mlp_forward.1} parent=1 // pred_check_branch
      %49 = sbr.rel (0) target = $region21
    $region20: #{mlp_forward.1} parent=1 // pred_region
      _
    $region21: #{mlp_forward.1} parent=1 // pred_fallthru
      _
    // Predicated region
    $region22: #{mlp_forward.1} parent=1 // pred_check
      _
    $region23: #{mlp_forward.1} parent=1 // pred_check_branch
      %51 = sbr.rel (0) target = $region25
    $region24: #{mlp_forward.1} parent=1 // pred_region
      _
    $region25: #{mlp_forward.1} parent=1 // pred_fallthru
      _
    // Predicated region
    $region26: #{mlp_forward.1} parent=1 // pred_check
      _
    $region27: #{mlp_forward.1} parent=1 // pred_check_branch
      %53 = sbr.rel (0) target = $region29
    $region28: #{mlp_forward.1} parent=1 // pred_region
      %s55 = ssub.s32 8192, 8192
      %56 = vsyncadd [#allocation5], %s55
      %s57 = sshll.u32 [#allocation6], 4
      %s58 = int_to_ptr.vmem [resolvable:$true] %s57
      %63 = dma.hbm_to_vmem [thread:$0]  %s6, 8192, %s58, [#allocation5], 512, 512, 32
    $region29: #{mlp_forward.1} parent=1 // pred_fallthru
      _
    // Predicated region
    $region30: #{mlp_forward.1} parent=1 // pred_check
      _
    $region31: #{mlp_forward.1} parent=1 // pred_check_branch
      %65 = sbr.rel (0) target = $region33
    $region32: #{mlp_forward.1} parent=1 // pred_region
      _
    $region33: #{mlp_forward.1} parent=1 // pred_fallthru
      _
    // Predicated region
    $region34: #{mlp_forward.1} parent=1 // pred_check
      _
    $region35: #{mlp_forward.1} parent=1 // pred_check_branch
      %67 = sbr.rel (0) target = $region37
    $region36: #{mlp_forward.1} parent=1 // pred_region
      _
    $region37: #{mlp_forward.1} parent=1 // pred_fallthru
      _
    // Predicated region
    $region38: #{mlp_forward.1} parent=1 // pred_check
      _
    $region39: #{mlp_forward.1} parent=1 // pred_check_branch
      %69 = sbr.rel (0) target = $region41
    $region40: #{mlp_forward.1} parent=1 // pred_region
      %s71 = ssub.s32 2048, 2048
      %72 = vsyncadd [#allocation8], %s71
      %s73 = sshll.u32 [#allocation7], 4
      %s74 = int_to_ptr.vmem [resolvable:$true] %s73
      %79 = dma.hbm_to_vmem [thread:$0]  %s9, 2048, %s74, [#allocation8], 128, 128, 8
    $region41: #{mlp_forward.1} parent=1 // pred_fallthru
      _
    // Predicated region
    $region42: #{mlp_forward.1} parent=1 // pred_check
      _
    $region43: #{mlp_forward.1} parent=1 // pred_check_branch
      %81 = sbr.rel (0) target = $region45
    $region44: #{mlp_forward.1} parent=1 // pred_region
      _
    $region45: #{mlp_forward.1} parent=1 // pred_fallthru
      _
    // Predicated region
    $region46: #{mlp_forward.1} parent=1 // pred_check
      _
    $region47: #{mlp_forward.1} parent=1 // pred_check_branch
      %83 = sbr.rel (0) target = $region49
    $region48: #{mlp_forward.1} parent=1 // pred_region
      _
    $region49: #{mlp_forward.1} parent=1 // pred_fallthru
      _
    // Predicated region
    $region50: #{mlp_forward.1} parent=1 // pred_check
      _
    $region51: #{mlp_forward.1} parent=1 // pred_check_branch
      %85 = sbr.rel (0) target = $region53
    $region52: #{mlp_forward.1} parent=1 // pred_region
      %86 = dma.done [#allocation3], 4096
    $region53: #{mlp_forward.1} parent=1 // pred_fallthru
      _
    // Predicated region
    $region54: #{mlp_forward.1} parent=1 // pred_check
      _
    $region55: #{mlp_forward.1} parent=1 // pred_check_branch
      %88 = sbr.rel (0) target = $region57
    $region56: #{mlp_forward.1} parent=1 // pred_region
      %89 = dma.done [#allocation5], 32768
    $region57: #{mlp_forward.1} parent=1 // pred_fallthru
      _
    // Predicated region
    $region58: #{mlp_forward.1} parent=1 // pred_check
      _
    $region59: #{mlp_forward.1} parent=1 // pred_check_branch
      %91 = sbr.rel (0) target = $region61
    $region60: #{mlp_forward.1} parent=1 // pred_region
      %92 = dma.done [#allocation5], 8192
    $region61: #{mlp_forward.1} parent=1 // pred_fallthru
      _
    // Predicated region
    $region62: #{mlp_forward.1} parent=1 // pred_check
      _
    $region63: #{mlp_forward.1} parent=1 // pred_check_branch
      %94 = sbr.rel (0) target = $region65
    $region64: #{mlp_forward.1} parent=1 // pred_region
      %95 = dma.done [#allocation8], 2048
    $region65: #{mlp_forward.1} parent=1 // pred_fallthru
      _
    %v97 = vld [vmem:[%s0] sm:$0xff]
    %v98 = vld [vmem:[%s0 + $0x8] sm:$0xff]
    %v99 = vld [vmem:[#allocation2] sm:$0xff]
    %v100 = vld [vmem:[#allocation2 + $0x8] sm:$0xff]
    %v101 = vld [vmem:[#allocation2 + $0x10] sm:$0xff]
    %v102 = vld [vmem:[#allocation2 + $0x18] sm:$0xff]
    %v103 = vld [vmem:[#allocation2 + $0x20] sm:$0xff]
    %v104 = vld [vmem:[#allocation2 + $0x28] sm:$0xff]
    %v105 = vld [vmem:[#allocation2 + $0x30] sm:$0xff]
    %v106 = vld [vmem:[#allocation2 + $0x38] sm:$0xff]
    %v107 = vld [vmem:[#allocation2 + $0x40] sm:$0xff]
    %v108 = vld [vmem:[#allocation2 + $0x48] sm:$0xff]
    %v109 = vld [vmem:[#allocation2 + $0x50] sm:$0xff]
    %v110 = vld [vmem:[#allocation2 + $0x58] sm:$0xff]
    %v111 = vld [vmem:[#allocation2 + $0x60] sm:$0xff]
    %v112 = vld [vmem:[#allocation2 + $0x68] sm:$0xff]
    %v113 = vld [vmem:[#allocation2 + $0x70] sm:$0xff]
    %v114 = vld [vmem:[#allocation2 + $0x78] sm:$0xff]
    %v115 = vld [vmem:[#allocation2 + $0x80] sm:$0xff]
    %v116 = vld [vmem:[#allocation2 + $0x88] sm:$0xff]
    %v117 = vld [vmem:[#allocation2 + $0x90] sm:$0xff]
    %v118 = vld [vmem:[#allocation2 + $0x98] sm:$0xff]
    %v119 = vld [vmem:[#allocation2 + $0xa0] sm:$0xff]
    %v120 = vld [vmem:[#allocation2 + $0xa8] sm:$0xff]
    %v121 = vld [vmem:[#allocation2 + $0xb0] sm:$0xff]
    %v122 = vld [vmem:[#allocation2 + $0xb8] sm:$0xff]
    %v123 = vld [vmem:[#allocation2 + $0xc0] sm:$0xff]
    %v124 = vld [vmem:[#allocation2 + $0xc8] sm:$0xff]
    %v125 = vld [vmem:[#allocation2 + $0xd0] sm:$0xff]
    %v126 = vld [vmem:[#allocation2 + $0xd8] sm:$0xff]
    %v127 = vld [vmem:[#allocation2 + $0xe0] sm:$0xff]
    %v128 = vld [vmem:[#allocation2 + $0xe8] sm:$0xff]
    %v129 = vld [vmem:[#allocation2 + $0xf0] sm:$0xff]
    %v130 = vld [vmem:[#allocation2 + $0xf8] sm:$0xff]
    %v131 = vld [vmem:[%s2] sm:$0xff]
    %v132 = vld [vmem:[%s2 + $0x8] sm:$0xff]
    %v135 = vlaneseq
    %v136 = vshrl.u32 %v135, 7
    %v137 = vsub.s32 0, %v136
    %v138 = vrot.slane %v131, %v137
    %v139 = vlaneseq
    %v140 = vshrl.u32 %v139, 7
    %v141 = vsub.s32 1, %v140
    %v142 = vrot.slane %v131, %v141
    %v143 = vlaneseq
    %v144 = vshrl.u32 %v143, 7
    %v145 = vsub.s32 2, %v144
    %v146 = vrot.slane %v131, %v145
    %v147 = vlaneseq
    %v148 = vshrl.u32 %v147, 7
    %v149 = vsub.s32 3, %v148
    %v150 = vrot.slane %v131, %v149
    %v151 = vlaneseq
    %v152 = vshrl.u32 %v151, 7
    %v153 = vsub.s32 4, %v152
    %v154 = vrot.slane %v131, %v153
    %v155 = vlaneseq
    %v156 = vshrl.u32 %v155, 7
    %v157 = vsub.s32 5, %v156
    %v158 = vrot.slane %v131, %v157
    %v159 = vlaneseq
    %v160 = vshrl.u32 %v159, 7
    %v161 = vsub.s32 6, %v160
    %v162 = vrot.slane %v131, %v161
    %v163 = vlaneseq
    %v164 = vshrl.u32 %v163, 7
    %v165 = vsub.s32 7, %v164
    %v166 = vrot.slane %v131, %v165
    %v167 = vlaneseq
    %v168 = vshrl.u32 %v167, 7
    %v169 = vsub.s32 0, %v168
    %v170 = vrot.slane %v132, %v169
    %v171 = vlaneseq
    %v172 = vshrl.u32 %v171, 7
    %v173 = vsub.s32 1, %v172
    %v174 = vrot.slane %v132, %v173
    %v175 = vlaneseq
    %v176 = vshrl.u32 %v175, 7
    %v177 = vsub.s32 2, %v176
    %v178 = vrot.slane %v132, %v177
    %v179 = vlaneseq
    %v180 = vshrl.u32 %v179, 7
    %v181 = vsub.s32 3, %v180
    %v182 = vrot.slane %v132, %v181
    %v183 = vlaneseq
    %v184 = vshrl.u32 %v183, 7
    %v185 = vsub.s32 4, %v184
    %v186 = vrot.slane %v132, %v185
    %v187 = vlaneseq
    %v188 = vshrl.u32 %v187, 7
    %v189 = vsub.s32 5, %v188
    %v190 = vrot.slane %v132, %v189
    %v191 = vlaneseq
    %v192 = vshrl.u32 %v191, 7
    %v193 = vsub.s32 6, %v192
    %v194 = vrot.slane %v132, %v193
    %v195 = vlaneseq
    %v196 = vshrl.u32 %v195, 7
    %v197 = vsub.s32 7, %v196
    %v198 = vrot.slane %v132, %v197
    %vm215 = vcmask 130048
    %v217 = vsel %vm215, %v97, 0
    %v220 = vsel %vm215, %v98, 0
    %222 = vmatprep.subr.mxu0 %v100
    %223 = vmatpush1.msra.mxu0 %v99
    %224 = vmatprep.subr.mxu0 %v116
    %225 = vmatpush1.msra.mxu0 %v115
    %226 = vmatprep.subr.mxu0 0.0
    %227 = vmatpush1.msra.mxu0 0.0
    %228 = vmatprep.subr.mxu0 0.0
    %229 = vmatpush1.msra.mxu0 0.0
    %230 = vmatprep.subr.mxu0 0.0
    %231 = vmatpush1.msra.mxu0 0.0
    %232 = vmatprep.subr.mxu0 0.0
    %233 = vmatpush1.msra.mxu0 0.0
    %234 = vmatprep.subr.mxu0 0.0
    %235 = vmatpush1.msra.mxu0 0.0
    %236 = vmatprep.subr.mxu0 0.0
    %237 = vmatpush1.msra.mxu0 0.0
    %238 = vmatprep.subr.mxu0 0.0
    %239 = vmatpush1.msra.mxu0 0.0
    %240 = vmatprep.subr.mxu0 0.0
    %241 = vmatpush1.msra.mxu0 0.0
    %242 = vmatprep.subr.mxu0 0.0
    %243 = vmatpush1.msra.mxu0 0.0
    %244 = vmatprep.subr.mxu0 0.0
    %245 = vmatpush1.msra.mxu0 0.0
    %246 = vmatprep.subr.mxu0 0.0
    %247 = vmatpush1.msra.mxu0 0.0
    %248 = vmatprep.subr.mxu0 0.0
    %249 = vmatpush1.msra.mxu0 0.0
    %250 = vmatprep.subr.mxu0 0.0
    %251 = vmatpush1.msra.mxu0 0.0
    %252 = vmatprep.subr.mxu0 0.0
    %253 = vmatpush1.msra.mxu0 0.0
    %254 = vmatprep.subr.mxu0 0.0
    %255 = vmatpush1.msra.mxu0 0.0
    %256 = vmatprep.subr.mxu0 0.0
    %257 = vmatpush1.msra.mxu0 0.0
    %258 = vmatprep.subr.mxu0 0.0
    %259 = vmatpush1.msra.mxu0 0.0
    %260 = vmatprep.subr.mxu0 0.0
    %261 = vmatpush1.msra.mxu0 0.0
    %262 = vmatprep.subr.mxu0 0.0
    %263 = vmatpush1.msra.mxu0 0.0
    %264 = vmatprep.subr.mxu0 0.0
    %265 = vmatpush1.msra.mxu0 0.0
    %266 = vmatprep.subr.mxu0 0.0
    %267 = vmatpush1.msra.mxu0 0.0
    %268 = vmatprep.subr.mxu0 0.0
    %269 = vmatpush1.msra.mxu0 0.0
    %270 = vmatprep.subr.mxu0 0.0
    %271 = vmatpush1.msra.mxu0 0.0
    %272 = vmatprep.subr.mxu0 0.0
    %273 = vmatpush1.msra.mxu0 0.0
    %274 = vmatprep.subr.mxu0 0.0
    %275 = vmatpush1.msra.mxu0 0.0
    %276 = vmatprep.subr.mxu0 0.0
    %277 = vmatpush1.msra.mxu0 0.0
    %278 = vmatprep.subr.mxu0 0.0
    %279 = vmatpush1.msra.mxu0 0.0
    %280 = vmatprep.subr.mxu0 0.0
    %281 = vmatpush1.msra.mxu0 0.0
    %282 = vmatprep.subr.mxu0 0.0
    %283 = vmatpush1.msra.mxu0 0.0
    %284 = vmatprep.subr.mxu0 0.0
    %285 = vmatpush1.msra.mxu0 0.0
    %286 = vmatprep.mubr.f32.mxu0 0.0
    %287 = vmatmul.mubr.f32.gmra.mrb[0].mxu0 %v217
    %v288 = vpop.f32.mrb[0].mxu0
    %v289 = vadd.f32 %v138, %v288
    %v290 = vpop.f32.mrb[0].mxu0
    %v291 = vadd.f32 %v142, %v290
    %292 = vmatprep.mubr.f32.mxu0 0.0
    %293 = vmatmul.mubr.f32.gmra.mrb[0].mxu0 %v220
    %v294 = vpop.f32.mrb[0].mxu0
    %v295 = vadd.f32 %v138, %v294
    %v296 = vpop.f32.mrb[0].mxu0
    %v297 = vadd.f32 %v142, %v296
    %298 = vdwg.mxu0
    %299 = vmatprep.subr.mxu0 %v102
    %300 = vmatpush1.msra.mxu0 %v101
    %301 = vmatprep.subr.mxu0 %v118
    %302 = vmatpush1.msra.mxu0 %v117
    %303 = vmatprep.subr.mxu0 0.0
    %304 = vmatpush1.msra.mxu0 0.0
    %305 = vmatprep.subr.mxu0 0.0
    %306 = vmatpush1.msra.mxu0 0.0
    %307 = vmatprep.subr.mxu0 0.0
    %308 = vmatpush1.msra.mxu0 0.0
    %309 = vmatprep.subr.mxu0 0.0
    %310 = vmatpush1.msra.mxu0 0.0
    %311 = vmatprep.subr.mxu0 0.0
    %312 = vmatpush1.msra.mxu0 0.0
    %313 = vmatprep.subr.mxu0 0.0
    %314 = vmatpush1.msra.mxu0 0.0
    %315 = vmatprep.subr.mxu0 0.0
    %316 = vmatpush1.msra.mxu0 0.0
    %317 = vmatprep.subr.mxu0 0.0
    %318 = vmatpush1.msra.mxu0 0.0
    %319 = vmatprep.subr.mxu0 0.0
    %320 = vmatpush1.msra.mxu0 0.0
    %321 = vmatprep.subr.mxu0 0.0
    %322 = vmatpush1.msra.mxu0 0.0
    %323 = vmatprep.subr.mxu0 0.0
    %324 = vmatpush1.msra.mxu0 0.0
    %325 = vmatprep.subr.mxu0 0.0
    %326 = vmatpush1.msra.mxu0 0.0
    %327 = vmatprep.subr.mxu0 0.0
    %328 = vmatpush1.msra.mxu0 0.0
    %329 = vmatprep.subr.mxu0 0.0
    %330 = vmatpush1.msra.mxu0 0.0
    %331 = vmatprep.subr.mxu0 0.0
    %332 = vmatpush1.msra.mxu0 0.0
    %333 = vmatprep.subr.mxu0 0.0
    %334 = vmatpush1.msra.mxu0 0.0
    %335 = vmatprep.subr.mxu0 0.0
    %336 = vmatpush1.msra.mxu0 0.0
    %337 = vmatprep.subr.mxu0 0.0
    %338 = vmatpush1.msra.mxu0 0.0
    %339 = vmatprep.subr.mxu0 0.0
    %340 = vmatpush1.msra.mxu0 0.0
    %341 = vmatprep.subr.mxu0 0.0
    %342 = vmatpush1.msra.mxu0 0.0
    %343 = vmatprep.subr.mxu0 0.0
    %344 = vmatpush1.msra.mxu0 0.0
    %345 = vmatprep.subr.mxu0 0.0
    %346 = vmatpush1.msra.mxu0 0.0
    %347 = vmatprep.subr.mxu0 0.0
    %348 = vmatpush1.msra.mxu0 0.0
    %349 = vmatprep.subr.mxu0 0.0
    %350 = vmatpush1.msra.mxu0 0.0
    %351 = vmatprep.subr.mxu0 0.0
    %352 = vmatpush1.msra.mxu0 0.0
    %353 = vmatprep.subr.mxu0 0.0
    %354 = vmatpush1.msra.mxu0 0.0
    %355 = vmatprep.subr.mxu0 0.0
    %356 = vmatpush1.msra.mxu0 0.0
    %357 = vmatprep.subr.mxu0 0.0
    %358 = vmatpush1.msra.mxu0 0.0
    %359 = vmatprep.subr.mxu0 0.0
    %360 = vmatpush1.msra.mxu0 0.0
    %361 = vmatprep.subr.mxu0 0.0
    %362 = vmatpush1.msra.mxu0 0.0
    %363 = vmatprep.mubr.f32.mxu0 0.0
    %364 = vmatmul.mubr.f32.gmra.mrb[0].mxu0 %v217
    %v365 = vpop.f32.mrb[0].mxu0
    %v366 = vadd.f32 %v146, %v365
    %v367 = vpop.f32.mrb[0].mxu0
    %v368 = vadd.f32 %v150, %v367
    %369 = vmatprep.mubr.f32.mxu0 0.0
    %370 = vmatmul.mubr.f32.gmra.mrb[0].mxu0 %v220
    %v371 = vpop.f32.mrb[0].mxu0
    %v372 = vadd.f32 %v146, %v371
    %v373 = vpop.f32.mrb[0].mxu0
    %v374 = vadd.f32 %v150, %v373
    %375 = vdwg.mxu0
    %376 = vmatprep.subr.mxu0 %v104
    %377 = vmatpush1.msra.mxu0 %v103
    %378 = vmatprep.subr.mxu0 %v120
    %379 = vmatpush1.msra.mxu0 %v119
    %380 = vmatprep.subr.mxu0 0.0
    %381 = vmatpush1.msra.mxu0 0.0
    %382 = vmatprep.subr.mxu0 0.0
    %383 = vmatpush1.msra.mxu0 0.0
    %384 = vmatprep.subr.mxu0 0.0
    %385 = vmatpush1.msra.mxu0 0.0
    %386 = vmatprep.subr.mxu0 0.0
    %387 = vmatpush1.msra.mxu0 0.0
    %388 = vmatprep.subr.mxu0 0.0
    %389 = vmatpush1.msra.mxu0 0.0
    %390 = vmatprep.subr.mxu0 0.0
    %391 = vmatpush1.msra.mxu0 0.0
    %392 = vmatprep.subr.mxu0 0.0
    %393 = vmatpush1.msra.mxu0 0.0
    %394 = vmatprep.subr.mxu0 0.0
    %395 = vmatpush1.msra.mxu0 0.0
    %396 = vmatprep.subr.mxu0 0.0
    %397 = vmatpush1.msra.mxu0 0.0
    %398 = vmatprep.subr.mxu0 0.0
    %399 = vmatpush1.msra.mxu0 0.0
    %400 = vmatprep.subr.mxu0 0.0
    %401 = vmatpush1.msra.mxu0 0.0
    %402 = vmatprep.subr.mxu0 0.0
    %403 = vmatpush1.msra.mxu0 0.0
    %404 = vmatprep.subr.mxu0 0.0
    %405 = vmatpush1.msra.mxu0 0.0
    %406 = vmatprep.subr.mxu0 0.0
    %407 = vmatpush1.msra.mxu0 0.0
    %408 = vmatprep.subr.mxu0 0.0
    %409 = vmatpush1.msra.mxu0 0.0
    %410 = vmatprep.subr.mxu0 0.0
    %411 = vmatpush1.msra.mxu0 0.0
    %412 = vmatprep.subr.mxu0 0.0
    %413 = vmatpush1.msra.mxu0 0.0
    %414 = vmatprep.subr.mxu0 0.0
    %415 = vmatpush1.msra.mxu0 0.0
    %416 = vmatprep.subr.mxu0 0.0
    %417 = vmatpush1.msra.mxu0 0.0
    %418 = vmatprep.subr.mxu0 0.0
    %419 = vmatpush1.msra.mxu0 0.0
    %420 = vmatprep.subr.mxu0 0.0
    %421 = vmatpush1.msra.mxu0 0.0
    %422 = vmatprep.subr.mxu0 0.0
    %423 = vmatpush1.msra.mxu0 0.0
    %424 = vmatprep.subr.mxu0 0.0
    %425 = vmatpush1.msra.mxu0 0.0
    %426 = vmatprep.subr.mxu0 0.0
    %427 = vmatpush1.msra.mxu0 0.0
    %428 = vmatprep.subr.mxu0 0.0
    %429 = vmatpush1.msra.mxu0 0.0
    %430 = vmatprep.subr.mxu0 0.0
    %431 = vmatpush1.msra.mxu0 0.0
    %432 = vmatprep.subr.mxu0 0.0
    %433 = vmatpush1.msra.mxu0 0.0
    %434 = vmatprep.subr.mxu0 0.0
    %435 = vmatpush1.msra.mxu0 0.0
    %436 = vmatprep.subr.mxu0 0.0
    %437 = vmatpush1.msra.mxu0 0.0
    %438 = vmatprep.subr.mxu0 0.0
    %439 = vmatpush1.msra.mxu0 0.0
    %440 = vmatprep.mubr.f32.mxu0 0.0
    %441 = vmatmul.mubr.f32.gmra.mrb[0].mxu0 %v217
    %v442 = vpop.f32.mrb[0].mxu0
    %v443 = vadd.f32 %v154, %v442
    %v444 = vpop.f32.mrb[0].mxu0
    %v445 = vadd.f32 %v158, %v444
    %446 = vmatprep.mubr.f32.mxu0 0.0
    %447 = vmatmul.mubr.f32.gmra.mrb[0].mxu0 %v220
    %v448 = vpop.f32.mrb[0].mxu0
    %v449 = vadd.f32 %v154, %v448
    %v450 = vpop.f32.mrb[0].mxu0
    %v451 = vadd.f32 %v158, %v450
    %452 = vdwg.mxu0
    %453 = vmatprep.subr.mxu0 %v106
    %454 = vmatpush1.msra.mxu0 %v105
    %455 = vmatprep.subr.mxu0 %v122
    %456 = vmatpush1.msra.mxu0 %v121
    %457 = vmatprep.subr.mxu0 0.0
    %458 = vmatpush1.msra.mxu0 0.0
    %459 = vmatprep.subr.mxu0 0.0
    %460 = vmatpush1.msra.mxu0 0.0
    %461 = vmatprep.subr.mxu0 0.0
    %462 = vmatpush1.msra.mxu0 0.0
    %463 = vmatprep.subr.mxu0 0.0
    %464 = vmatpush1.msra.mxu0 0.0
    %465 = vmatprep.subr.mxu0 0.0
    %466 = vmatpush1.msra.mxu0 0.0
    %467 = vmatprep.subr.mxu0 0.0
    %468 = vmatpush1.msra.mxu0 0.0
    %469 = vmatprep.subr.mxu0 0.0
    %470 = vmatpush1.msra.mxu0 0.0
    %471 = vmatprep.subr.mxu0 0.0
    %472 = vmatpush1.msra.mxu0 0.0
    %473 = vmatprep.subr.mxu0 0.0
    %474 = vmatpush1.msra.mxu0 0.0
    %475 = vmatprep.subr.mxu0 0.0
    %476 = vmatpush1.msra.mxu0 0.0
    %477 = vmatprep.subr.mxu0 0.0
    %478 = vmatpush1.msra.mxu0 0.0
    %479 = vmatprep.subr.mxu0 0.0
    %480 = vmatpush1.msra.mxu0 0.0
    %481 = vmatprep.subr.mxu0 0.0
    %482 = vmatpush1.msra.mxu0 0.0
    %483 = vmatprep.subr.mxu0 0.0
    %484 = vmatpush1.msra.mxu0 0.0
    %485 = vmatprep.subr.mxu0 0.0
    %486 = vmatpush1.msra.mxu0 0.0
    %487 = vmatprep.subr.mxu0 0.0
    %488 = vmatpush1.msra.mxu0 0.0
    %489 = vmatprep.subr.mxu0 0.0
    %490 = vmatpush1.msra.mxu0 0.0
    %491 = vmatprep.subr.mxu0 0.0
    %492 = vmatpush1.msra.mxu0 0.0
    %493 = vmatprep.subr.mxu0 0.0
    %494 = vmatpush1.msra.mxu0 0.0
    %495 = vmatprep.subr.mxu0 0.0
    %496 = vmatpush1.msra.mxu0 0.0
    %497 = vmatprep.subr.mxu0 0.0
    %498 = vmatpush1.msra.mxu0 0.0
    %499 = vmatprep.subr.mxu0 0.0
    %500 = vmatpush1.msra.mxu0 0.0
    %501 = vmatprep.subr.mxu0 0.0
    %502 = vmatpush1.msra.mxu0 0.0
    %503 = vmatprep.subr.mxu0 0.0
    %504 = vmatpush1.msra.mxu0 0.0
    %505 = vmatprep.subr.mxu0 0.0
    %506 = vmatpush1.msra.mxu0 0.0
    %507 = vmatprep.subr.mxu0 0.0
    %508 = vmatpush1.msra.mxu0 0.0
    %509 = vmatprep.subr.mxu0 0.0
    %510 = vmatpush1.msra.mxu0 0.0
    %511 = vmatprep.subr.mxu0 0.0
    %512 = vmatpush1.msra.mxu0 0.0
    %513 = vmatprep.subr.mxu0 0.0
    %514 = vmatpush1.msra.mxu0 0.0
    %515 = vmatprep.subr.mxu0 0.0
    %516 = vmatpush1.msra.mxu0 0.0
    %517 = vmatprep.mubr.f32.mxu0 0.0
    %518 = vmatmul.mubr.f32.gmra.mrb[0].mxu0 %v217
    %v519 = vpop.f32.mrb[0].mxu0
    %v520 = vadd.f32 %v162, %v519
    %v521 = vpop.f32.mrb[0].mxu0
    %v522 = vadd.f32 %v166, %v521
    %523 = vmatprep.mubr.f32.mxu0 0.0
    %524 = vmatmul.mubr.f32.gmra.mrb[0].mxu0 %v220
    %v525 = vpop.f32.mrb[0].mxu0
    %v526 = vadd.f32 %v162, %v525
    %v527 = vpop.f32.mrb[0].mxu0
    %v528 = vadd.f32 %v166, %v527
    %529 = vdwg.mxu0
    %530 = vmatprep.subr.mxu0 %v108
    %531 = vmatpush1.msra.mxu0 %v107
    %532 = vmatprep.subr.mxu0 %v124
    %533 = vmatpush1.msra.mxu0 %v123
    %534 = vmatprep.subr.mxu0 0.0
    %535 = vmatpush1.msra.mxu0 0.0
    %536 = vmatprep.subr.mxu0 0.0
    %537 = vmatpush1.msra.mxu0 0.0
    %538 = vmatprep.subr.mxu0 0.0
    %539 = vmatpush1.msra.mxu0 0.0
    %540 = vmatprep.subr.mxu0 0.0
    %541 = vmatpush1.msra.mxu0 0.0
    %542 = vmatprep.subr.mxu0 0.0
    %543 = vmatpush1.msra.mxu0 0.0
    %544 = vmatprep.subr.mxu0 0.0
    %545 = vmatpush1.msra.mxu0 0.0
    %546 = vmatprep.subr.mxu0 0.0
    %547 = vmatpush1.msra.mxu0 0.0
    %548 = vmatprep.subr.mxu0 0.0
    %549 = vmatpush1.msra.mxu0 0.0
    %550 = vmatprep.subr.mxu0 0.0
    %551 = vmatpush1.msra.mxu0 0.0
    %552 = vmatprep.subr.mxu0 0.0
    %553 = vmatpush1.msra.mxu0 0.0
    %554 = vmatprep.subr.mxu0 0.0
    %555 = vmatpush1.msra.mxu0 0.0
    %556 = vmatprep.subr.mxu0 0.0
    %557 = vmatpush1.msra.mxu0 0.0
    %558 = vmatprep.subr.mxu0 0.0
    %559 = vmatpush1.msra.mxu0 0.0
    %560 = vmatprep.subr.mxu0 0.0
    %561 = vmatpush1.msra.mxu0 0.0
    %562 = vmatprep.subr.mxu0 0.0
    %563 = vmatpush1.msra.mxu0 0.0
    %564 = vmatprep.subr.mxu0 0.0
    %565 = vmatpush1.msra.mxu0 0.0
    %566 = vmatprep.subr.mxu0 0.0
    %567 = vmatpush1.msra.mxu0 0.0
    %568 = vmatprep.subr.mxu0 0.0
    %569 = vmatpush1.msra.mxu0 0.0
    %570 = vmatprep.subr.mxu0 0.0
    %571 = vmatpush1.msra.mxu0 0.0
    %572 = vmatprep.subr.mxu0 0.0
    %573 = vmatpush1.msra.mxu0 0.0
    %574 = vmatprep.subr.mxu0 0.0
    %575 = vmatpush1.msra.mxu0 0.0
    %576 = vmatprep.subr.mxu0 0.0
    %577 = vmatpush1.msra.mxu0 0.0
    %578 = vmatprep.subr.mxu0 0.0
    %579 = vmatpush1.msra.mxu0 0.0
    %580 = vmatprep.subr.mxu0 0.0
    %581 = vmatpush1.msra.mxu0 0.0
    %582 = vmatprep.subr.mxu0 0.0
    %583 = vmatpush1.msra.mxu0 0.0
    %584 = vmatprep.subr.mxu0 0.0
    %585 = vmatpush1.msra.mxu0 0.0
    %586 = vmatprep.subr.mxu0 0.0
    %587 = vmatpush1.msra.mxu0 0.0
    %588 = vmatprep.subr.mxu0 0.0
    %589 = vmatpush1.msra.mxu0 0.0
    %590 = vmatprep.subr.mxu0 0.0
    %591 = vmatpush1.msra.mxu0 0.0
    %592 = vmatprep.subr.mxu0 0.0
    %593 = vmatpush1.msra.mxu0 0.0
    %594 = vmatprep.mubr.f32.mxu0 0.0
    %595 = vmatmul.mubr.f32.gmra.mrb[0].mxu0 %v217
    %v596 = vpop.f32.mrb[0].mxu0
    %v597 = vadd.f32 %v170, %v596
    %v598 = vpop.f32.mrb[0].mxu0
    %v599 = vadd.f32 %v174, %v598
    %600 = vmatprep.mubr.f32.mxu0 0.0
    %601 = vmatmul.mubr.f32.gmra.mrb[0].mxu0 %v220
    %v602 = vpop.f32.mrb[0].mxu0
    %v603 = vadd.f32 %v170, %v602
    %v604 = vpop.f32.mrb[0].mxu0
    %v605 = vadd.f32 %v174, %v604
    %606 = vdwg.mxu0
    %607 = vmatprep.subr.mxu0 %v110
    %608 = vmatpush1.msra.mxu0 %v109
    %609 = vmatprep.subr.mxu0 %v126
    %610 = vmatpush1.msra.mxu0 %v125
    %611 = vmatprep.subr.mxu0 0.0
    %612 = vmatpush1.msra.mxu0 0.0
    %613 = vmatprep.subr.mxu0 0.0
    %614 = vmatpush1.msra.mxu0 0.0
    %615 = vmatprep.subr.mxu0 0.0
    %616 = vmatpush1.msra.mxu0 0.0
    %617 = vmatprep.subr.mxu0 0.0
    %618 = vmatpush1.msra.mxu0 0.0
    %619 = vmatprep.subr.mxu0 0.0
    %620 = vmatpush1.msra.mxu0 0.0
    %621 = vmatprep.subr.mxu0 0.0
    %622 = vmatpush1.msra.mxu0 0.0
    %623 = vmatprep.subr.mxu0 0.0
    %624 = vmatpush1.msra.mxu0 0.0
    %625 = vmatprep.subr.mxu0 0.0
    %626 = vmatpush1.msra.mxu0 0.0
    %627 = vmatprep.subr.mxu0 0.0
    %628 = vmatpush1.msra.mxu0 0.0
    %629 = vmatprep.subr.mxu0 0.0
    %630 = vmatpush1.msra.mxu0 0.0
    %631 = vmatprep.subr.mxu0 0.0
    %632 = vmatpush1.msra.mxu0 0.0
    %633 = vmatprep.subr.mxu0 0.0
    %634 = vmatpush1.msra.mxu0 0.0
    %635 = vmatprep.subr.mxu0 0.0
    %636 = vmatpush1.msra.mxu0 0.0
    %637 = vmatprep.subr.mxu0 0.0
    %638 = vmatpush1.msra.mxu0 0.0
    %639 = vmatprep.subr.mxu0 0.0
    %640 = vmatpush1.msra.mxu0 0.0
    %641 = vmatprep.subr.mxu0 0.0
    %642 = vmatpush1.msra.mxu0 0.0
    %643 = vmatprep.subr.mxu0 0.0
    %644 = vmatpush1.msra.mxu0 0.0
    %645 = vmatprep.subr.mxu0 0.0
    %646 = vmatpush1.msra.mxu0 0.0
    %647 = vmatprep.subr.mxu0 0.0
    %648 = vmatpush1.msra.mxu0 0.0
    %649 = vmatprep.subr.mxu0 0.0
    %650 = vmatpush1.msra.mxu0 0.0
    %651 = vmatprep.subr.mxu0 0.0
    %652 = vmatpush1.msra.mxu0 0.0
    %653 = vmatprep.subr.mxu0 0.0
    %654 = vmatpush1.msra.mxu0 0.0
    %655 = vmatprep.subr.mxu0 0.0
    %656 = vmatpush1.msra.mxu0 0.0
    %657 = vmatprep.subr.mxu0 0.0
    %658 = vmatpush1.msra.mxu0 0.0
    %659 = vmatprep.subr.mxu0 0.0
    %660 = vmatpush1.msra.mxu0 0.0
    %661 = vmatprep.subr.mxu0 0.0
    %662 = vmatpush1.msra.mxu0 0.0
    %663 = vmatprep.subr.mxu0 0.0
    %664 = vmatpush1.msra.mxu0 0.0
    %665 = vmatprep.subr.mxu0 0.0
    %666 = vmatpush1.msra.mxu0 0.0
    %667 = vmatprep.subr.mxu0 0.0
    %668 = vmatpush1.msra.mxu0 0.0
    %669 = vmatprep.subr.mxu0 0.0
    %670 = vmatpush1.msra.mxu0 0.0
    %671 = vmatprep.mubr.f32.mxu0 0.0
    %672 = vmatmul.mubr.f32.gmra.mrb[0].mxu0 %v217
    %v673 = vpop.f32.mrb[0].mxu0
    %v674 = vadd.f32 %v178, %v673
    %v675 = vpop.f32.mrb[0].mxu0
    %v676 = vadd.f32 %v182, %v675
    %677 = vmatprep.mubr.f32.mxu0 0.0
    %678 = vmatmul.mubr.f32.gmra.mrb[0].mxu0 %v220
    %v679 = vpop.f32.mrb[0].mxu0
    %v680 = vadd.f32 %v178, %v679
    %v681 = vpop.f32.mrb[0].mxu0
    %v682 = vadd.f32 %v182, %v681
    %683 = vdwg.mxu0
    %684 = vmatprep.subr.mxu0 %v112
    %685 = vmatpush1.msra.mxu0 %v111
    %686 = vmatprep.subr.mxu0 %v128
    %687 = vmatpush1.msra.mxu0 %v127
    %688 = vmatprep.subr.mxu0 0.0
    %689 = vmatpush1.msra.mxu0 0.0
    %690 = vmatprep.subr.mxu0 0.0
    %691 = vmatpush1.msra.mxu0 0.0
    %692 = vmatprep.subr.mxu0 0.0
    %693 = vmatpush1.msra.mxu0 0.0
    %694 = vmatprep.subr.mxu0 0.0
    %695 = vmatpush1.msra.mxu0 0.0
    %696 = vmatprep.subr.mxu0 0.0
    %697 = vmatpush1.msra.mxu0 0.0
    %698 = vmatprep.subr.mxu0 0.0
    %699 = vmatpush1.msra.mxu0 0.0
    %700 = vmatprep.subr.mxu0 0.0
    %701 = vmatpush1.msra.mxu0 0.0
    %702 = vmatprep.subr.mxu0 0.0
    %703 = vmatpush1.msra.mxu0 0.0
    %704 = vmatprep.subr.mxu0 0.0
    %705 = vmatpush1.msra.mxu0 0.0
    %706 = vmatprep.subr.mxu0 0.0
    %707 = vmatpush1.msra.mxu0 0.0
    %708 = vmatprep.subr.mxu0 0.0
    %709 = vmatpush1.msra.mxu0 0.0
    %710 = vmatprep.subr.mxu0 0.0
    %711 = vmatpush1.msra.mxu0 0.0
    %712 = vmatprep.subr.mxu0 0.0
    %713 = vmatpush1.msra.mxu0 0.0
    %714 = vmatprep.subr.mxu0 0.0
    %715 = vmatpush1.msra.mxu0 0.0
    %716 = vmatprep.subr.mxu0 0.0
    %717 = vmatpush1.msra.mxu0 0.0
    %718 = vmatprep.subr.mxu0 0.0
    %719 = vmatpush1.msra.mxu0 0.0
    %720 = vmatprep.subr.mxu0 0.0
    %721 = vmatpush1.msra.mxu0 0.0
    %722 = vmatprep.subr.mxu0 0.0
    %723 = vmatpush1.msra.mxu0 0.0
    %724 = vmatprep.subr.mxu0 0.0
    %725 = vmatpush1.msra.mxu0 0.0
    %726 = vmatprep.subr.mxu0 0.0
    %727 = vmatpush1.msra.mxu0 0.0
    %728 = vmatprep.subr.mxu0 0.0
    %729 = vmatpush1.msra.mxu0 0.0
    %730 = vmatprep.subr.mxu0 0.0
    %731 = vmatpush1.msra.mxu0 0.0
    %732 = vmatprep.subr.mxu0 0.0
    %733 = vmatpush1.msra.mxu0 0.0
    %734 = vmatprep.subr.mxu0 0.0
    %735 = vmatpush1.msra.mxu0 0.0
    %736 = vmatprep.subr.mxu0 0.0
    %737 = vmatpush1.msra.mxu0 0.0
    %738 = vmatprep.subr.mxu0 0.0
    %739 = vmatpush1.msra.mxu0 0.0
    %740 = vmatprep.subr.mxu0 0.0
    %741 = vmatpush1.msra.mxu0 0.0
    %742 = vmatprep.subr.mxu0 0.0
    %743 = vmatpush1.msra.mxu0 0.0
    %744 = vmatprep.subr.mxu0 0.0
    %745 = vmatpush1.msra.mxu0 0.0
    %746 = vmatprep.subr.mxu0 0.0
    %747 = vmatpush1.msra.mxu0 0.0
    %748 = vmatprep.mubr.f32.mxu0 0.0
    %749 = vmatmul.mubr.f32.gmra.mrb[0].mxu0 %v217
    %v750 = vpop.f32.mrb[0].mxu0
    %v751 = vadd.f32 %v186, %v750
    %v752 = vpop.f32.mrb[0].mxu0
    %v753 = vadd.f32 %v190, %v752
    %754 = vmatprep.mubr.f32.mxu0 0.0
    %755 = vmatmul.mubr.f32.gmra.mrb[0].mxu0 %v220
    %v756 = vpop.f32.mrb[0].mxu0
    %v757 = vadd.f32 %v186, %v756
    %v758 = vpop.f32.mrb[0].mxu0
    %v759 = vadd.f32 %v190, %v758
    %760 = vdwg.mxu0
    %761 = vmatprep.subr.mxu0 %v114
    %762 = vmatpush1.msra.mxu0 %v113
    %763 = vmatprep.subr.mxu0 %v130
    %764 = vmatpush1.msra.mxu0 %v129
    %765 = vmatprep.subr.mxu0 0.0
    %766 = vmatpush1.msra.mxu0 0.0
    %767 = vmatprep.subr.mxu0 0.0
    %768 = vmatpush1.msra.mxu0 0.0
    %769 = vmatprep.subr.mxu0 0.0
    %770 = vmatpush1.msra.mxu0 0.0
    %771 = vmatprep.subr.mxu0 0.0
    %772 = vmatpush1.msra.mxu0 0.0
    %773 = vmatprep.subr.mxu0 0.0
    %774 = vmatpush1.msra.mxu0 0.0
    %775 = vmatprep.subr.mxu0 0.0
    %776 = vmatpush1.msra.mxu0 0.0
    %777 = vmatprep.subr.mxu0 0.0
    %778 = vmatpush1.msra.mxu0 0.0
    %779 = vmatprep.subr.mxu0 0.0
    %780 = vmatpush1.msra.mxu0 0.0
    %781 = vmatprep.subr.mxu0 0.0
    %782 = vmatpush1.msra.mxu0 0.0
    %783 = vmatprep.subr.mxu0 0.0
    %784 = vmatpush1.msra.mxu0 0.0
    %785 = vmatprep.subr.mxu0 0.0
    %786 = vmatpush1.msra.mxu0 0.0
    %787 = vmatprep.subr.mxu0 0.0
    %788 = vmatpush1.msra.mxu0 0.0
    %789 = vmatprep.subr.mxu0 0.0
    %790 = vmatpush1.msra.mxu0 0.0
    %791 = vmatprep.subr.mxu0 0.0
    %792 = vmatpush1.msra.mxu0 0.0
    %793 = vmatprep.subr.mxu0 0.0
    %794 = vmatpush1.msra.mxu0 0.0
    %795 = vmatprep.subr.mxu0 0.0
    %796 = vmatpush1.msra.mxu0 0.0
    %797 = vmatprep.subr.mxu0 0.0
    %798 = vmatpush1.msra.mxu0 0.0
    %799 = vmatprep.subr.mxu0 0.0
    %800 = vmatpush1.msra.mxu0 0.0
    %801 = vmatprep.subr.mxu0 0.0
    %802 = vmatpush1.msra.mxu0 0.0
    %803 = vmatprep.subr.mxu0 0.0
    %804 = vmatpush1.msra.mxu0 0.0
    %805 = vmatprep.subr.mxu0 0.0
    %806 = vmatpush1.msra.mxu0 0.0
    %807 = vmatprep.subr.mxu0 0.0
    %808 = vmatpush1.msra.mxu0 0.0
    %809 = vmatprep.subr.mxu0 0.0
    %810 = vmatpush1.msra.mxu0 0.0
    %811 = vmatprep.subr.mxu0 0.0
    %812 = vmatpush1.msra.mxu0 0.0
    %813 = vmatprep.subr.mxu0 0.0
    %814 = vmatpush1.msra.mxu0 0.0
    %815 = vmatprep.subr.mxu0 0.0
    %816 = vmatpush1.msra.mxu0 0.0
    %817 = vmatprep.subr.mxu0 0.0
    %818 = vmatpush1.msra.mxu0 0.0
    %819 = vmatprep.subr.mxu0 0.0
    %820 = vmatpush1.msra.mxu0 0.0
    %821 = vmatprep.subr.mxu0 0.0
    %822 = vmatpush1.msra.mxu0 0.0
    %823 = vmatprep.subr.mxu0 0.0
    %824 = vmatpush1.msra.mxu0 0.0
    %825 = vmatprep.mubr.f32.mxu0 0.0
    %826 = vmatmul.mubr.f32.gmra.mrb[0].mxu0 %v217
    %v827 = vpop.f32.mrb[0].mxu0
    %v828 = vadd.f32 %v194, %v827
    %v829 = vpop.f32.mrb[0].mxu0
    %v830 = vadd.f32 %v198, %v829
    %831 = vmatprep.mubr.f32.mxu0 0.0
    %832 = vmatmul.mubr.f32.gmra.mrb[0].mxu0 %v220
    %v833 = vpop.f32.mrb[0].mxu0
    %v834 = vadd.f32 %v194, %v833
    %v835 = vpop.f32.mrb[0].mxu0
    %v836 = vadd.f32 %v198, %v835
    %837 = vdwg.mxu0
    %vm838 = vcmp.gt.f32.partialorder %v289, 0.0
    %vm839 = vcmp.gt.f32.partialorder %v291, 0.0
    %vm840 = vcmp.gt.f32.partialorder %v366, 0.0
    %vm841 = vcmp.gt.f32.partialorder %v368, 0.0
    %vm842 = vcmp.gt.f32.partialorder %v443, 0.0
    %vm843 = vcmp.gt.f32.partialorder %v445, 0.0
    %vm844 = vcmp.gt.f32.partialorder %v520, 0.0
    %vm845 = vcmp.gt.f32.partialorder %v522, 0.0
    %vm846 = vcmp.gt.f32.partialorder %v597, 0.0
    %vm847 = vcmp.gt.f32.partialorder %v599, 0.0
    %vm848 = vcmp.gt.f32.partialorder %v674, 0.0
    %vm849 = vcmp.gt.f32.partialorder %v676, 0.0
    %vm850 = vcmp.gt.f32.partialorder %v751, 0.0
    %vm851 = vcmp.gt.f32.partialorder %v753, 0.0
    %vm852 = vcmp.gt.f32.partialorder %v828, 0.0
    %vm853 = vcmp.gt.f32.partialorder %v830, 0.0
    %vm854 = vcmp.gt.f32.partialorder %v295, 0.0
    %vm855 = vcmp.gt.f32.partialorder %v297, 0.0
    %vm856 = vcmp.gt.f32.partialorder %v372, 0.0
    %vm857 = vcmp.gt.f32.partialorder %v374, 0.0
    %vm858 = vcmp.gt.f32.partialorder %v449, 0.0
    %vm859 = vcmp.gt.f32.partialorder %v451, 0.0
    %vm860 = vcmp.gt.f32.partialorder %v526, 0.0
    %vm861 = vcmp.gt.f32.partialorder %v528, 0.0
    %vm862 = vcmp.gt.f32.partialorder %v603, 0.0
    %vm863 = vcmp.gt.f32.partialorder %v605, 0.0
    %vm864 = vcmp.gt.f32.partialorder %v680, 0.0
    %vm865 = vcmp.gt.f32.partialorder %v682, 0.0
    %vm866 = vcmp.gt.f32.partialorder %v757, 0.0
    %vm867 = vcmp.gt.f32.partialorder %v759, 0.0
    %vm868 = vcmp.gt.f32.partialorder %v834, 0.0
    %vm869 = vcmp.gt.f32.partialorder %v836, 0.0
    %v870 = vmul.f32 %v289, 0.01
    %v871 = vmul.f32 %v291, 0.01
    %v872 = vmul.f32 %v366, 0.01
    %v873 = vmul.f32 %v368, 0.01
    %v874 = vmul.f32 %v443, 0.01
    %v875 = vmul.f32 %v445, 0.01
    %v876 = vmul.f32 %v520, 0.01
    %v877 = vmul.f32 %v522, 0.01
    %v878 = vmul.f32 %v597, 0.01
    %v879 = vmul.f32 %v599, 0.01
    %v880 = vmul.f32 %v674, 0.01
    %v881 = vmul.f32 %v676, 0.01
    %v882 = vmul.f32 %v751, 0.01
    %v883 = vmul.f32 %v753, 0.01
    %v884 = vmul.f32 %v828, 0.01
    %v885 = vmul.f32 %v830, 0.01
    %v886 = vmul.f32 %v295, 0.01
    %v887 = vmul.f32 %v297, 0.01
    %v888 = vmul.f32 %v372, 0.01
    %v889 = vmul.f32 %v374, 0.01
    %v890 = vmul.f32 %v449, 0.01
    %v891 = vmul.f32 %v451, 0.01
    %v892 = vmul.f32 %v526, 0.01
    %v893 = vmul.f32 %v528, 0.01
    %v894 = vmul.f32 %v603, 0.01
    %v895 = vmul.f32 %v605, 0.01
    %v896 = vmul.f32 %v680, 0.01
    %v897 = vmul.f32 %v682, 0.01
    %v898 = vmul.f32 %v757, 0.01
    %v899 = vmul.f32 %v759, 0.01
    %v900 = vmul.f32 %v834, 0.01
    %v901 = vmul.f32 %v836, 0.01
    %v902 = vsel %vm838, %v289, %v870
    %v903 = vsel %vm839, %v291, %v871
    %v904 = vsel %vm840, %v366, %v872
    %v905 = vsel %vm841, %v368, %v873
    %v906 = vsel %vm842, %v443, %v874
    %v907 = vsel %vm843, %v445, %v875
    %v908 = vsel %vm844, %v520, %v876
    %v909 = vsel %vm845, %v522, %v877
    %v910 = vsel %vm846, %v597, %v878
    %v911 = vsel %vm847, %v599, %v879
    %v912 = vsel %vm848, %v674, %v880
    %v913 = vsel %vm849, %v676, %v881
    %v914 = vsel %vm850, %v751, %v882
    %v915 = vsel %vm851, %v753, %v883
    %v916 = vsel %vm852, %v828, %v884
    %v917 = vsel %vm853, %v830, %v885
    %v918 = vsel %vm854, %v295, %v886
    %v919 = vsel %vm855, %v297, %v887
    %v920 = vsel %vm856, %v372, %v888
    %v921 = vsel %vm857, %v374, %v889
    %v922 = vsel %vm858, %v449, %v890
    %v923 = vsel %vm859, %v451, %v891
    %v924 = vsel %vm860, %v526, %v892
    %v925 = vsel %vm861, %v528, %v893
    %v926 = vsel %vm862, %v603, %v894
    %v927 = vsel %vm863, %v605, %v895
    %v928 = vsel %vm864, %v680, %v896
    %v929 = vsel %vm865, %v682, %v897
    %v930 = vsel %vm866, %v757, %v898
    %v931 = vsel %vm867, %v759, %v899
    %v932 = vsel %vm868, %v834, %v900
    %v933 = vsel %vm869, %v836, %v901
    %v934 = vpack.c.bf16 %v918, %v902
    %v935 = vpack.c.bf16 %v919, %v903
    %v936 = vpack.c.bf16 %v920, %v904
    %v937 = vpack.c.bf16 %v921, %v905
    %v938 = vpack.c.bf16 %v922, %v906
    %v939 = vpack.c.bf16 %v923, %v907
    %v940 = vpack.c.bf16 %v924, %v908
    %v941 = vpack.c.bf16 %v925, %v909
    %v942 = vpack.c.bf16 %v926, %v910
    %v943 = vpack.c.bf16 %v927, %v911
    %v944 = vpack.c.bf16 %v928, %v912
    %v945 = vpack.c.bf16 %v929, %v913
    %v946 = vpack.c.bf16 %v930, %v914
    %v947 = vpack.c.bf16 %v931, %v915
    %v948 = vpack.c.bf16 %v932, %v916
    %v949 = vpack.c.bf16 %v933, %v917
    %v950 = vld [vmem:[#allocation4] sm:$0xff]
    %v951 = vld [vmem:[#allocation4 + $0x8] sm:$0xff]
    %v952 = vld [vmem:[#allocation4 + $0x10] sm:$0xff]
    %v953 = vld [vmem:[#allocation4 + $0x18] sm:$0xff]
    %v954 = vld [vmem:[#allocation4 + $0x20] sm:$0xff]
    %v955 = vld [vmem:[#allocation4 + $0x28] sm:$0xff]
    %v956 = vld [vmem:[#allocation4 + $0x30] sm:$0xff]
    %v957 = vld [vmem:[#allocation4 + $0x38] sm:$0xff]
    %v958 = vld [vmem:[#allocation4 + $0x40] sm:$0xff]
    %v959 = vld [vmem:[#allocation4 + $0x48] sm:$0xff]
    %v960 = vld [vmem:[#allocation4 + $0x50] sm:$0xff]
    %v961 = vld [vmem:[#allocation4 + $0x58] sm:$0xff]
    %v962 = vld [vmem:[#allocation4 + $0x60] sm:$0xff]
    %v963 = vld [vmem:[#allocation4 + $0x68] sm:$0xff]
    %v964 = vld [vmem:[#allocation4 + $0x70] sm:$0xff]
    %v965 = vld [vmem:[#allocation4 + $0x78] sm:$0xff]
    %v966 = vld [vmem:[#allocation4 + $0x80] sm:$0xff]
    %v967 = vld [vmem:[#allocation4 + $0x88] sm:$0xff]
    %v968 = vld [vmem:[#allocation4 + $0x90] sm:$0xff]
    %v969 = vld [vmem:[#allocation4 + $0x98] sm:$0xff]
    %v970 = vld [vmem:[#allocation4 + $0xa0] sm:$0xff]
    %v971 = vld [vmem:[#allocation4 + $0xa8] sm:$0xff]
    %v972 = vld [vmem:[#allocation4 + $0xb0] sm:$0xff]
    %v973 = vld [vmem:[#allocation4 + $0xb8] sm:$0xff]
    %v974 = vld [vmem:[#allocation4 + $0xc0] sm:$0xff]
    %v975 = vld [vmem:[#allocation4 + $0xc8] sm:$0xff]
    %v976 = vld [vmem:[#allocation4 + $0xd0] sm:$0xff]
    %v977 = vld [vmem:[#allocation4 + $0xd8] sm:$0xff]
    %v978 = vld [vmem:[#allocation4 + $0xe0] sm:$0xff]
    %v979 = vld [vmem:[#allocation4 + $0xe8] sm:$0xff]
    %v980 = vld [vmem:[#allocation4 + $0xf0] sm:$0xff]
    %v981 = vld [vmem:[#allocation4 + $0xf8] sm:$0xff]
    %v982 = vld [vmem:[#allocation4 + $0x100] sm:$0xff]
    %v983 = vld [vmem:[#allocation4 + $0x108] sm:$0xff]
    %v984 = vld [vmem:[#allocation4 + $0x110] sm:$0xff]
    %v985 = vld [vmem:[#allocation4 + $0x118] sm:$0xff]
    %v986 = vld [vmem:[#allocation4 + $0x120] sm:$0xff]
    %v987 = vld [vmem:[#allocation4 + $0x128] sm:$0xff]
    %v988 = vld [vmem:[#allocation4 + $0x130] sm:$0xff]
    %v989 = vld [vmem:[#allocation4 + $0x138] sm:$0xff]
    %v990 = vld [vmem:[#allocation4 + $0x140] sm:$0xff]
    %v991 = vld [vmem:[#allocation4 + $0x148] sm:$0xff]
    %v992 = vld [vmem:[#allocation4 + $0x150] sm:$0xff]
    %v993 = vld [vmem:[#allocation4 + $0x158] sm:$0xff]
    %v994 = vld [vmem:[#allocation4 + $0x160] sm:$0xff]
    %v995 = vld [vmem:[#allocation4 + $0x168] sm:$0xff]
    %v996 = vld [vmem:[#allocation4 + $0x170] sm:$0xff]
    %v997 = vld [vmem:[#allocation4 + $0x178] sm:$0xff]
    %v998 = vld [vmem:[#allocation4 + $0x180] sm:$0xff]
    %v999 = vld [vmem:[#allocation4 + $0x188] sm:$0xff]
    %v1000 = vld [vmem:[#allocation4 + $0x190] sm:$0xff]
    %v1001 = vld [vmem:[#allocation4 + $0x198] sm:$0xff]
    %v1002 = vld [vmem:[#allocation4 + $0x1a0] sm:$0xff]
    %v1003 = vld [vmem:[#allocation4 + $0x1a8] sm:$0xff]
    %v1004 = vld [vmem:[#allocation4 + $0x1b0] sm:$0xff]
    %v1005 = vld [vmem:[#allocation4 + $0x1b8] sm:$0xff]
    %v1006 = vld [vmem:[#allocation4 + $0x1c0] sm:$0xff]
    %v1007 = vld [vmem:[#allocation4 + $0x1c8] sm:$0xff]
    %v1008 = vld [vmem:[#allocation4 + $0x1d0] sm:$0xff]
    %v1009 = vld [vmem:[#allocation4 + $0x1d8] sm:$0xff]
    %v1010 = vld [vmem:[#allocation4 + $0x1e0] sm:$0xff]
    %v1011 = vld [vmem:[#allocation4 + $0x1e8] sm:$0xff]
    %v1012 = vld [vmem:[#allocation4 + $0x1f0] sm:$0xff]
    %v1013 = vld [vmem:[#allocation4 + $0x1f8] sm:$0xff]
    %v1014 = vld [vmem:[#allocation4 + $0x200] sm:$0xff]
    %v1015 = vld [vmem:[#allocation4 + $0x208] sm:$0xff]
    %v1016 = vld [vmem:[#allocation4 + $0x210] sm:$0xff]
    %v1017 = vld [vmem:[#allocation4 + $0x218] sm:$0xff]
    %v1018 = vld [vmem:[#allocation4 + $0x220] sm:$0xff]
    %v1019 = vld [vmem:[#allocation4 + $0x228] sm:$0xff]
    %v1020 = vld [vmem:[#allocation4 + $0x230] sm:$0xff]
    %v1021 = vld [vmem:[#allocation4 + $0x238] sm:$0xff]
    %v1022 = vld [vmem:[#allocation4 + $0x240] sm:$0xff]
    %v1023 = vld [vmem:[#allocation4 + $0x248] sm:$0xff]
    %v1024 = vld [vmem:[#allocation4 + $0x250] sm:$0xff]
    %v1025 = vld [vmem:[#allocation4 + $0x258] sm:$0xff]
    %v1026 = vld [vmem:[#allocation4 + $0x260] sm:$0xff]
    %v1027 = vld [vmem:[#allocation4 + $0x268] sm:$0xff]
    %v1028 = vld [vmem:[#allocation4 + $0x270] sm:$0xff]
    %v1029 = vld [vmem:[#allocation4 + $0x278] sm:$0xff]
    %v1030 = vld [vmem:[#allocation4 + $0x280] sm:$0xff]
    %v1031 = vld [vmem:[#allocation4 + $0x288] sm:$0xff]
    %v1032 = vld [vmem:[#allocation4 + $0x290] sm:$0xff]
    %v1033 = vld [vmem:[#allocation4 + $0x298] sm:$0xff]
    %v1034 = vld [vmem:[#allocation4 + $0x2a0] sm:$0xff]
    %v1035 = vld [vmem:[#allocation4 + $0x2a8] sm:$0xff]
    %v1036 = vld [vmem:[#allocation4 + $0x2b0] sm:$0xff]
    %v1037 = vld [vmem:[#allocation4 + $0x2b8] sm:$0xff]
    %v1038 = vld [vmem:[#allocation4 + $0x2c0] sm:$0xff]
    %v1039 = vld [vmem:[#allocation4 + $0x2c8] sm:$0xff]
    %v1040 = vld [vmem:[#allocation4 + $0x2d0] sm:$0xff]
    %v1041 = vld [vmem:[#allocation4 + $0x2d8] sm:$0xff]
    %v1042 = vld [vmem:[#allocation4 + $0x2e0] sm:$0xff]
    %v1043 = vld [vmem:[#allocation4 + $0x2e8] sm:$0xff]
    %v1044 = vld [vmem:[#allocation4 + $0x2f0] sm:$0xff]
    %v1045 = vld [vmem:[#allocation4 + $0x2f8] sm:$0xff]
    %v1046 = vld [vmem:[#allocation4 + $0x300] sm:$0xff]
    %v1047 = vld [vmem:[#allocation4 + $0x308] sm:$0xff]
    %v1048 = vld [vmem:[#allocation4 + $0x310] sm:$0xff]
    %v1049 = vld [vmem:[#allocation4 + $0x318] sm:$0xff]
    %v1050 = vld [vmem:[#allocation4 + $0x320] sm:$0xff]
    %v1051 = vld [vmem:[#allocation4 + $0x328] sm:$0xff]
    %v1052 = vld [vmem:[#allocation4 + $0x330] sm:$0xff]
    %v1053 = vld [vmem:[#allocation4 + $0x338] sm:$0xff]
    %v1054 = vld [vmem:[#allocation4 + $0x340] sm:$0xff]
    %v1055 = vld [vmem:[#allocation4 + $0x348] sm:$0xff]
    %v1056 = vld [vmem:[#allocation4 + $0x350] sm:$0xff]
    %v1057 = vld [vmem:[#allocation4 + $0x358] sm:$0xff]
    %v1058 = vld [vmem:[#allocation4 + $0x360] sm:$0xff]
    %v1059 = vld [vmem:[#allocation4 + $0x368] sm:$0xff]
    %v1060 = vld [vmem:[#allocation4 + $0x370] sm:$0xff]
    %v1061 = vld [vmem:[#allocation4 + $0x378] sm:$0xff]
    %v1062 = vld [vmem:[#allocation4 + $0x380] sm:$0xff]
    %v1063 = vld [vmem:[#allocation4 + $0x388] sm:$0xff]
    %v1064 = vld [vmem:[#allocation4 + $0x390] sm:$0xff]
    %v1065 = vld [vmem:[#allocation4 + $0x398] sm:$0xff]
    %v1066 = vld [vmem:[#allocation4 + $0x3a0] sm:$0xff]
    %v1067 = vld [vmem:[#allocation4 + $0x3a8] sm:$0xff]
    %v1068 = vld [vmem:[#allocation4 + $0x3b0] sm:$0xff]
    %v1069 = vld [vmem:[#allocation4 + $0x3b8] sm:$0xff]
    %v1070 = vld [vmem:[#allocation4 + $0x3c0] sm:$0xff]
    %v1071 = vld [vmem:[#allocation4 + $0x3c8] sm:$0xff]
    %v1072 = vld [vmem:[#allocation4 + $0x3d0] sm:$0xff]
    %v1073 = vld [vmem:[#allocation4 + $0x3d8] sm:$0xff]
    %v1074 = vld [vmem:[#allocation4 + $0x3e0] sm:$0xff]
    %v1075 = vld [vmem:[#allocation4 + $0x3e8] sm:$0xff]
    %v1076 = vld [vmem:[#allocation4 + $0x3f0] sm:$0xff]
    %v1077 = vld [vmem:[#allocation4 + $0x3f8] sm:$0xff]
    %v1078 = vld [vmem:[#allocation4 + $0x400] sm:$0xff]
    %v1079 = vld [vmem:[#allocation4 + $0x408] sm:$0xff]
    %v1080 = vld [vmem:[#allocation4 + $0x410] sm:$0xff]
    %v1081 = vld [vmem:[#allocation4 + $0x418] sm:$0xff]
    %v1082 = vld [vmem:[#allocation4 + $0x420] sm:$0xff]
    %v1083 = vld [vmem:[#allocation4 + $0x428] sm:$0xff]
    %v1084 = vld [vmem:[#allocation4 + $0x430] sm:$0xff]
    %v1085 = vld [vmem:[#allocation4 + $0x438] sm:$0xff]
    %v1086 = vld [vmem:[#allocation4 + $0x440] sm:$0xff]
    %v1087 = vld [vmem:[#allocation4 + $0x448] sm:$0xff]
    %v1088 = vld [vmem:[#allocation4 + $0x450] sm:$0xff]
    %v1089 = vld [vmem:[#allocation4 + $0x458] sm:$0xff]
    %v1090 = vld [vmem:[#allocation4 + $0x460] sm:$0xff]
    %v1091 = vld [vmem:[#allocation4 + $0x468] sm:$0xff]
    %v1092 = vld [vmem:[#allocation4 + $0x470] sm:$0xff]
    %v1093 = vld [vmem:[#allocation4 + $0x478] sm:$0xff]
    %v1094 = vld [vmem:[#allocation4 + $0x480] sm:$0xff]
    %v1095 = vld [vmem:[#allocation4 + $0x488] sm:$0xff]
    %v1096 = vld [vmem:[#allocation4 + $0x490] sm:$0xff]
    %v1097 = vld [vmem:[#allocation4 + $0x498] sm:$0xff]
    %v1098 = vld [vmem:[#allocation4 + $0x4a0] sm:$0xff]
    %v1099 = vld [vmem:[#allocation4 + $0x4a8] sm:$0xff]
    %v1100 = vld [vmem:[#allocation4 + $0x4b0] sm:$0xff]
    %v1101 = vld [vmem:[#allocation4 + $0x4b8] sm:$0xff]
    %v1102 = vld [vmem:[#allocation4 + $0x4c0] sm:$0xff]
    %v1103 = vld [vmem:[#allocation4 + $0x4c8] sm:$0xff]
    %v1104 = vld [vmem:[#allocation4 + $0x4d0] sm:$0xff]
    %v1105 = vld [vmem:[#allocation4 + $0x4d8] sm:$0xff]
    %v1106 = vld [vmem:[#allocation4 + $0x4e0] sm:$0xff]
    %v1107 = vld [vmem:[#allocation4 + $0x4e8] sm:$0xff]
    %v1108 = vld [vmem:[#allocation4 + $0x4f0] sm:$0xff]
    %v1109 = vld [vmem:[#allocation4 + $0x4f8] sm:$0xff]
    %v1110 = vld [vmem:[#allocation4 + $0x500] sm:$0xff]
    %v1111 = vld [vmem:[#allocation4 + $0x508] sm:$0xff]
    %v1112 = vld [vmem:[#allocation4 + $0x510] sm:$0xff]
    %v1113 = vld [vmem:[#allocation4 + $0x518] sm:$0xff]
    %v1114 = vld [vmem:[#allocation4 + $0x520] sm:$0xff]
    %v1115 = vld [vmem:[#allocation4 + $0x528] sm:$0xff]
    %v1116 = vld [vmem:[#allocation4 + $0x530] sm:$0xff]
    %v1117 = vld [vmem:[#allocation4 + $0x538] sm:$0xff]
    %v1118 = vld [vmem:[#allocation4 + $0x540] sm:$0xff]
    %v1119 = vld [vmem:[#allocation4 + $0x548] sm:$0xff]
    %v1120 = vld [vmem:[#allocation4 + $0x550] sm:$0xff]
    %v1121 = vld [vmem:[#allocation4 + $0x558] sm:$0xff]
    %v1122 = vld [vmem:[#allocation4 + $0x560] sm:$0xff]
    %v1123 = vld [vmem:[#allocation4 + $0x568] sm:$0xff]
    %v1124 = vld [vmem:[#allocation4 + $0x570] sm:$0xff]
    %v1125 = vld [vmem:[#allocation4 + $0x578] sm:$0xff]
    %v1126 = vld [vmem:[#allocation4 + $0x580] sm:$0xff]
    %v1127 = vld [vmem:[#allocation4 + $0x588] sm:$0xff]
    %v1128 = vld [vmem:[#allocation4 + $0x590] sm:$0xff]
    %v1129 = vld [vmem:[#allocation4 + $0x598] sm:$0xff]
    %v1130 = vld [vmem:[#allocation4 + $0x5a0] sm:$0xff]
    %v1131 = vld [vmem:[#allocation4 + $0x5a8] sm:$0xff]
    %v1132 = vld [vmem:[#allocation4 + $0x5b0] sm:$0xff]
    %v1133 = vld [vmem:[#allocation4 + $0x5b8] sm:$0xff]
    %v1134 = vld [vmem:[#allocation4 + $0x5c0] sm:$0xff]
    %v1135 = vld [vmem:[#allocation4 + $0x5c8] sm:$0xff]
    %v1136 = vld [vmem:[#allocation4 + $0x5d0] sm:$0xff]
    %v1137 = vld [vmem:[#allocation4 + $0x5d8] sm:$0xff]
    %v1138 = vld [vmem:[#allocation4 + $0x5e0] sm:$0xff]
    %v1139 = vld [vmem:[#allocation4 + $0x5e8] sm:$0xff]
    %v1140 = vld [vmem:[#allocation4 + $0x5f0] sm:$0xff]
    %v1141 = vld [vmem:[#allocation4 + $0x5f8] sm:$0xff]
    %v1142 = vld [vmem:[#allocation4 + $0x600] sm:$0xff]
    %v1143 = vld [vmem:[#allocation4 + $0x608] sm:$0xff]
    %v1144 = vld [vmem:[#allocation4 + $0x610] sm:$0xff]
    %v1145 = vld [vmem:[#allocation4 + $0x618] sm:$0xff]
    %v1146 = vld [vmem:[#allocation4 + $0x620] sm:$0xff]
    %v1147 = vld [vmem:[#allocation4 + $0x628] sm:$0xff]
    %v1148 = vld [vmem:[#allocation4 + $0x630] sm:$0xff]
    %v1149 = vld [vmem:[#allocation4 + $0x638] sm:$0xff]
    %v1150 = vld [vmem:[#allocation4 + $0x640] sm:$0xff]
    %v1151 = vld [vmem:[#allocation4 + $0x648] sm:$0xff]
    %v1152 = vld [vmem:[#allocation4 + $0x650] sm:$0xff]
    %v1153 = vld [vmem:[#allocation4 + $0x658] sm:$0xff]
    %v1154 = vld [vmem:[#allocation4 + $0x660] sm:$0xff]
    %v1155 = vld [vmem:[#allocation4 + $0x668] sm:$0xff]
    %v1156 = vld [vmem:[#allocation4 + $0x670] sm:$0xff]
    %v1157 = vld [vmem:[#allocation4 + $0x678] sm:$0xff]
    %v1158 = vld [vmem:[#allocation4 + $0x680] sm:$0xff]
    %v1159 = vld [vmem:[#allocation4 + $0x688] sm:$0xff]
    %v1160 = vld [vmem:[#allocation4 + $0x690] sm:$0xff]
    %v1161 = vld [vmem:[#allocation4 + $0x698] sm:$0xff]
    %v1162 = vld [vmem:[#allocation4 + $0x6a0] sm:$0xff]
    %v1163 = vld [vmem:[#allocation4 + $0x6a8] sm:$0xff]
    %v1164 = vld [vmem:[#allocation4 + $0x6b0] sm:$0xff]
    %v1165 = vld [vmem:[#allocation4 + $0x6b8] sm:$0xff]
    %v1166 = vld [vmem:[#allocation4 + $0x6c0] sm:$0xff]
    %v1167 = vld [vmem:[#allocation4 + $0x6c8] sm:$0xff]
    %v1168 = vld [vmem:[#allocation4 + $0x6d0] sm:$0xff]
    %v1169 = vld [vmem:[#allocation4 + $0x6d8] sm:$0xff]
    %v1170 = vld [vmem:[#allocation4 + $0x6e0] sm:$0xff]
    %v1171 = vld [vmem:[#allocation4 + $0x6e8] sm:$0xff]
    %v1172 = vld [vmem:[#allocation4 + $0x6f0] sm:$0xff]
    %v1173 = vld [vmem:[#allocation4 + $0x6f8] sm:$0xff]
    %v1174 = vld [vmem:[#allocation4 + $0x700] sm:$0xff]
    %v1175 = vld [vmem:[#allocation4 + $0x708] sm:$0xff]
    %v1176 = vld [vmem:[#allocation4 + $0x710] sm:$0xff]
    %v1177 = vld [vmem:[#allocation4 + $0x718] sm:$0xff]
    %v1178 = vld [vmem:[#allocation4 + $0x720] sm:$0xff]
    %v1179 = vld [vmem:[#allocation4 + $0x728] sm:$0xff]
    %v1180 = vld [vmem:[#allocation4 + $0x730] sm:$0xff]
    %v1181 = vld [vmem:[#allocation4 + $0x738] sm:$0xff]
    %v1182 = vld [vmem:[#allocation4 + $0x740] sm:$0xff]
    %v1183 = vld [vmem:[#allocation4 + $0x748] sm:$0xff]
    %v1184 = vld [vmem:[#allocation4 + $0x750] sm:$0xff]
    %v1185 = vld [vmem:[#allocation4 + $0x758] sm:$0xff]
    %v1186 = vld [vmem:[#allocation4 + $0x760] sm:$0xff]
    %v1187 = vld [vmem:[#allocation4 + $0x768] sm:$0xff]
    %v1188 = vld [vmem:[#allocation4 + $0x770] sm:$0xff]
    %v1189 = vld [vmem:[#allocation4 + $0x778] sm:$0xff]
    %v1190 = vld [vmem:[#allocation4 + $0x780] sm:$0xff]
    %v1191 = vld [vmem:[#allocation4 + $0x788] sm:$0xff]
    %v1192 = vld [vmem:[#allocation4 + $0x790] sm:$0xff]
    %v1193 = vld [vmem:[#allocation4 + $0x798] sm:$0xff]
    %v1194 = vld [vmem:[#allocation4 + $0x7a0] sm:$0xff]
    %v1195 = vld [vmem:[#allocation4 + $0x7a8] sm:$0xff]
    %v1196 = vld [vmem:[#allocation4 + $0x7b0] sm:$0xff]
    %v1197 = vld [vmem:[#allocation4 + $0x7b8] sm:$0xff]
    %v1198 = vld [vmem:[#allocation4 + $0x7c0] sm:$0xff]
    %v1199 = vld [vmem:[#allocation4 + $0x7c8] sm:$0xff]
    %v1200 = vld [vmem:[#allocation4 + $0x7d0] sm:$0xff]
    %v1201 = vld [vmem:[#allocation4 + $0x7d8] sm:$0xff]
    %v1202 = vld [vmem:[#allocation4 + $0x7e0] sm:$0xff]
    %v1203 = vld [vmem:[#allocation4 + $0x7e8] sm:$0xff]
    %v1204 = vld [vmem:[#allocation4 + $0x7f0] sm:$0xff]
    %v1205 = vld [vmem:[#allocation4 + $0x7f8] sm:$0xff]
    %v1206 = vunpack.c.l.s8.bf16 %v950
    %v1207 = vunpack.c.l.s8.bf16 %v951
    %v1208 = vunpack.c.l.s8.bf16 %v952
    %v1209 = vunpack.c.l.s8.bf16 %v953
    %v1210 = vunpack.c.h.s8.bf16 %v950
    %v1211 = vunpack.c.h.s8.bf16 %v951
    %v1212 = vunpack.c.h.s8.bf16 %v952
    %v1213 = vunpack.c.h.s8.bf16 %v953
    %v1214 = vunpack.c.l.s8.bf16 %v954
    %v1215 = vunpack.c.l.s8.bf16 %v955
    %v1216 = vunpack.c.l.s8.bf16 %v956
    %v1217 = vunpack.c.l.s8.bf16 %v957
    %v1218 = vunpack.c.h.s8.bf16 %v954
    %v1219 = vunpack.c.h.s8.bf16 %v955
    %v1220 = vunpack.c.h.s8.bf16 %v956
    %v1221 = vunpack.c.h.s8.bf16 %v957
    %v1222 = vunpack.c.l.s8.bf16 %v958
    %v1223 = vunpack.c.l.s8.bf16 %v959
    %v1224 = vunpack.c.l.s8.bf16 %v960
    %v1225 = vunpack.c.l.s8.bf16 %v961
    %v1226 = vunpack.c.h.s8.bf16 %v958
    %v1227 = vunpack.c.h.s8.bf16 %v959
    %v1228 = vunpack.c.h.s8.bf16 %v960
    %v1229 = vunpack.c.h.s8.bf16 %v961
    %v1230 = vunpack.c.l.s8.bf16 %v962
    %v1231 = vunpack.c.l.s8.bf16 %v963
    %v1232 = vunpack.c.l.s8.bf16 %v964
    %v1233 = vunpack.c.l.s8.bf16 %v965
    %v1234 = vunpack.c.h.s8.bf16 %v962
    %v1235 = vunpack.c.h.s8.bf16 %v963
    %v1236 = vunpack.c.h.s8.bf16 %v964
    %v1237 = vunpack.c.h.s8.bf16 %v965
    %v1238 = vunpack.c.l.s8.bf16 %v966
    %v1239 = vunpack.c.l.s8.bf16 %v967
    %v1240 = vunpack.c.l.s8.bf16 %v968
    %v1241 = vunpack.c.l.s8.bf16 %v969
    %v1242 = vunpack.c.h.s8.bf16 %v966
    %v1243 = vunpack.c.h.s8.bf16 %v967
    %v1244 = vunpack.c.h.s8.bf16 %v968
    %v1245 = vunpack.c.h.s8.bf16 %v969
    %v1246 = vunpack.c.l.s8.bf16 %v970
    %v1247 = vunpack.c.l.s8.bf16 %v971
    %v1248 = vunpack.c.l.s8.bf16 %v972
    %v1249 = vunpack.c.l.s8.bf16 %v973
    %v1250 = vunpack.c.h.s8.bf16 %v970
    %v1251 = vunpack.c.h.s8.bf16 %v971
    %v1252 = vunpack.c.h.s8.bf16 %v972
    %v1253 = vunpack.c.h.s8.bf16 %v973
    %v1254 = vunpack.c.l.s8.bf16 %v974
    %v1255 = vunpack.c.l.s8.bf16 %v975
    %v1256 = vunpack.c.l.s8.bf16 %v976
    %v1257 = vunpack.c.l.s8.bf16 %v977
    %v1258 = vunpack.c.h.s8.bf16 %v974
    %v1259 = vunpack.c.h.s8.bf16 %v975
    %v1260 = vunpack.c.h.s8.bf16 %v976
    %v1261 = vunpack.c.h.s8.bf16 %v977
    %v1262 = vunpack.c.l.s8.bf16 %v978
    %v1263 = vunpack.c.l.s8.bf16 %v979
    %v1264 = vunpack.c.l.s8.bf16 %v980
    %v1265 = vunpack.c.l.s8.bf16 %v981
    %v1266 = vunpack.c.h.s8.bf16 %v978
    %v1267 = vunpack.c.h.s8.bf16 %v979
    %v1268 = vunpack.c.h.s8.bf16 %v980
    %v1269 = vunpack.c.h.s8.bf16 %v981
    %v1270 = vunpack.c.l.s8.bf16 %v982
    %v1271 = vunpack.c.l.s8.bf16 %v983
    %v1272 = vunpack.c.l.s8.bf16 %v984
    %v1273 = vunpack.c.l.s8.bf16 %v985
    %v1274 = vunpack.c.h.s8.bf16 %v982
    %v1275 = vunpack.c.h.s8.bf16 %v983
    %v1276 = vunpack.c.h.s8.bf16 %v984
    %v1277 = vunpack.c.h.s8.bf16 %v985
    %v1278 = vunpack.c.l.s8.bf16 %v986
    %v1279 = vunpack.c.l.s8.bf16 %v987
    %v1280 = vunpack.c.l.s8.bf16 %v988
    %v1281 = vunpack.c.l.s8.bf16 %v989
    %v1282 = vunpack.c.h.s8.bf16 %v986
    %v1283 = vunpack.c.h.s8.bf16 %v987
    %v1284 = vunpack.c.h.s8.bf16 %v988
    %v1285 = vunpack.c.h.s8.bf16 %v989
    %v1286 = vunpack.c.l.s8.bf16 %v990
    %v1287 = vunpack.c.l.s8.bf16 %v991
    %v1288 = vunpack.c.l.s8.bf16 %v992
    %v1289 = vunpack.c.l.s8.bf16 %v993
    %v1290 = vunpack.c.h.s8.bf16 %v990
    %v1291 = vunpack.c.h.s8.bf16 %v991
    %v1292 = vunpack.c.h.s8.bf16 %v992
    %v1293 = vunpack.c.h.s8.bf16 %v993
    %v1294 = vunpack.c.l.s8.bf16 %v994
    %v1295 = vunpack.c.l.s8.bf16 %v995
    %v1296 = vunpack.c.l.s8.bf16 %v996
    %v1297 = vunpack.c.l.s8.bf16 %v997
    %v1298 = vunpack.c.h.s8.bf16 %v994
    %v1299 = vunpack.c.h.s8.bf16 %v995
    %v1300 = vunpack.c.h.s8.bf16 %v996
    %v1301 = vunpack.c.h.s8.bf16 %v997
    %v1302 = vunpack.c.l.s8.bf16 %v998
    %v1303 = vunpack.c.l.s8.bf16 %v999
    %v1304 = vunpack.c.l.s8.bf16 %v1000
    %v1305 = vunpack.c.l.s8.bf16 %v1001
    %v1306 = vunpack.c.h.s8.bf16 %v998
    %v1307 = vunpack.c.h.s8.bf16 %v999
    %v1308 = vunpack.c.h.s8.bf16 %v1000
    %v1309 = vunpack.c.h.s8.bf16 %v1001
    %v1310 = vunpack.c.l.s8.bf16 %v1002
    %v1311 = vunpack.c.l.s8.bf16 %v1003
    %v1312 = vunpack.c.l.s8.bf16 %v1004
    %v1313 = vunpack.c.l.s8.bf16 %v1005
    %v1314 = vunpack.c.h.s8.bf16 %v1002
    %v1315 = vunpack.c.h.s8.bf16 %v1003
    %v1316 = vunpack.c.h.s8.bf16 %v1004
    %v1317 = vunpack.c.h.s8.bf16 %v1005
    %v1318 = vunpack.c.l.s8.bf16 %v1006
    %v1319 = vunpack.c.l.s8.bf16 %v1007
    %v1320 = vunpack.c.l.s8.bf16 %v1008
    %v1321 = vunpack.c.l.s8.bf16 %v1009
    %v1322 = vunpack.c.h.s8.bf16 %v1006
    %v1323 = vunpack.c.h.s8.bf16 %v1007
    %v1324 = vunpack.c.h.s8.bf16 %v1008
    %v1325 = vunpack.c.h.s8.bf16 %v1009
    %v1326 = vunpack.c.l.s8.bf16 %v1010
    %v1327 = vunpack.c.l.s8.bf16 %v1011
    %v1328 = vunpack.c.l.s8.bf16 %v1012
    %v1329 = vunpack.c.l.s8.bf16 %v1013
    %v1330 = vunpack.c.h.s8.bf16 %v1010
    %v1331 = vunpack.c.h.s8.bf16 %v1011
    %v1332 = vunpack.c.h.s8.bf16 %v1012
    %v1333 = vunpack.c.h.s8.bf16 %v1013
    %v1334 = vunpack.c.l.s8.bf16 %v1014
    %v1335 = vunpack.c.l.s8.bf16 %v1015
    %v1336 = vunpack.c.l.s8.bf16 %v1016
    %v1337 = vunpack.c.l.s8.bf16 %v1017
    %v1338 = vunpack.c.h.s8.bf16 %v1014
    %v1339 = vunpack.c.h.s8.bf16 %v1015
    %v1340 = vunpack.c.h.s8.bf16 %v1016
    %v1341 = vunpack.c.h.s8.bf16 %v1017
    %v1342 = vunpack.c.l.s8.bf16 %v1018
    %v1343 = vunpack.c.l.s8.bf16 %v1019
    %v1344 = vunpack.c.l.s8.bf16 %v1020
    %v1345 = vunpack.c.l.s8.bf16 %v1021
    %v1346 = vunpack.c.h.s8.bf16 %v1018
    %v1347 = vunpack.c.h.s8.bf16 %v1019
    %v1348 = vunpack.c.h.s8.bf16 %v1020
    %v1349 = vunpack.c.h.s8.bf16 %v1021
    %v1350 = vunpack.c.l.s8.bf16 %v1022
    %v1351 = vunpack.c.l.s8.bf16 %v1023
    %v1352 = vunpack.c.l.s8.bf16 %v1024
    %v1353 = vunpack.c.l.s8.bf16 %v1025
    %v1354 = vunpack.c.h.s8.bf16 %v1022
    %v1355 = vunpack.c.h.s8.bf16 %v1023
    %v1356 = vunpack.c.h.s8.bf16 %v1024
    %v1357 = vunpack.c.h.s8.bf16 %v1025
    %v1358 = vunpack.c.l.s8.bf16 %v1026
    %v1359 = vunpack.c.l.s8.bf16 %v1027
    %v1360 = vunpack.c.l.s8.bf16 %v1028
    %v1361 = vunpack.c.l.s8.bf16 %v1029
    %v1362 = vunpack.c.h.s8.bf16 %v1026
    %v1363 = vunpack.c.h.s8.bf16 %v1027
    %v1364 = vunpack.c.h.s8.bf16 %v1028
    %v1365 = vunpack.c.h.s8.bf16 %v1029
    %v1366 = vunpack.c.l.s8.bf16 %v1030
    %v1367 = vunpack.c.l.s8.bf16 %v1031
    %v1368 = vunpack.c.l.s8.bf16 %v1032
    %v1369 = vunpack.c.l.s8.bf16 %v1033
    %v1370 = vunpack.c.h.s8.bf16 %v1030
    %v1371 = vunpack.c.h.s8.bf16 %v1031
    %v1372 = vunpack.c.h.s8.bf16 %v1032
    %v1373 = vunpack.c.h.s8.bf16 %v1033
    %v1374 = vunpack.c.l.s8.bf16 %v1034
    %v1375 = vunpack.c.l.s8.bf16 %v1035
    %v1376 = vunpack.c.l.s8.bf16 %v1036
    %v1377 = vunpack.c.l.s8.bf16 %v1037
    %v1378 = vunpack.c.h.s8.bf16 %v1034
    %v1379 = vunpack.c.h.s8.bf16 %v1035
    %v1380 = vunpack.c.h.s8.bf16 %v1036
    %v1381 = vunpack.c.h.s8.bf16 %v1037
    %v1382 = vunpack.c.l.s8.bf16 %v1038
    %v1383 = vunpack.c.l.s8.bf16 %v1039
    %v1384 = vunpack.c.l.s8.bf16 %v1040
    %v1385 = vunpack.c.l.s8.bf16 %v1041
    %v1386 = vunpack.c.h.s8.bf16 %v1038
    %v1387 = vunpack.c.h.s8.bf16 %v1039
    %v1388 = vunpack.c.h.s8.bf16 %v1040
    %v1389 = vunpack.c.h.s8.bf16 %v1041
    %v1390 = vunpack.c.l.s8.bf16 %v1042
    %v1391 = vunpack.c.l.s8.bf16 %v1043
    %v1392 = vunpack.c.l.s8.bf16 %v1044
    %v1393 = vunpack.c.l.s8.bf16 %v1045
    %v1394 = vunpack.c.h.s8.bf16 %v1042
    %v1395 = vunpack.c.h.s8.bf16 %v1043
    %v1396 = vunpack.c.h.s8.bf16 %v1044
    %v1397 = vunpack.c.h.s8.bf16 %v1045
    %v1398 = vunpack.c.l.s8.bf16 %v1046
    %v1399 = vunpack.c.l.s8.bf16 %v1047
    %v1400 = vunpack.c.l.s8.bf16 %v1048
    %v1401 = vunpack.c.l.s8.bf16 %v1049
    %v1402 = vunpack.c.h.s8.bf16 %v1046
    %v1403 = vunpack.c.h.s8.bf16 %v1047
    %v1404 = vunpack.c.h.s8.bf16 %v1048
    %v1405 = vunpack.c.h.s8.bf16 %v1049
    %v1406 = vunpack.c.l.s8.bf16 %v1050
    %v1407 = vunpack.c.l.s8.bf16 %v1051
    %v1408 = vunpack.c.l.s8.bf16 %v1052
    %v1409 = vunpack.c.l.s8.bf16 %v1053
    %v1410 = vunpack.c.h.s8.bf16 %v1050
    %v1411 = vunpack.c.h.s8.bf16 %v1051
    %v1412 = vunpack.c.h.s8.bf16 %v1052
    %v1413 = vunpack.c.h.s8.bf16 %v1053
    %v1414 = vunpack.c.l.s8.bf16 %v1054
    %v1415 = vunpack.c.l.s8.bf16 %v1055
    %v1416 = vunpack.c.l.s8.bf16 %v1056
    %v1417 = vunpack.c.l.s8.bf16 %v1057
    %v1418 = vunpack.c.h.s8.bf16 %v1054
    %v1419 = vunpack.c.h.s8.bf16 %v1055
    %v1420 = vunpack.c.h.s8.bf16 %v1056
    %v1421 = vunpack.c.h.s8.bf16 %v1057
    %v1422 = vunpack.c.l.s8.bf16 %v1058
    %v1423 = vunpack.c.l.s8.bf16 %v1059
    %v1424 = vunpack.c.l.s8.bf16 %v1060
    %v1425 = vunpack.c.l.s8.bf16 %v1061
    %v1426 = vunpack.c.h.s8.bf16 %v1058
    %v1427 = vunpack.c.h.s8.bf16 %v1059
    %v1428 = vunpack.c.h.s8.bf16 %v1060
    %v1429 = vunpack.c.h.s8.bf16 %v1061
    %v1430 = vunpack.c.l.s8.bf16 %v1062
    %v1431 = vunpack.c.l.s8.bf16 %v1063
    %v1432 = vunpack.c.l.s8.bf16 %v1064
    %v1433 = vunpack.c.l.s8.bf16 %v1065
    %v1434 = vunpack.c.h.s8.bf16 %v1062
    %v1435 = vunpack.c.h.s8.bf16 %v1063
    %v1436 = vunpack.c.h.s8.bf16 %v1064
    %v1437 = vunpack.c.h.s8.bf16 %v1065
    %v1438 = vunpack.c.l.s8.bf16 %v1066
    %v1439 = vunpack.c.l.s8.bf16 %v1067
    %v1440 = vunpack.c.l.s8.bf16 %v1068
    %v1441 = vunpack.c.l.s8.bf16 %v1069
    %v1442 = vunpack.c.h.s8.bf16 %v1066
    %v1443 = vunpack.c.h.s8.bf16 %v1067
    %v1444 = vunpack.c.h.s8.bf16 %v1068
    %v1445 = vunpack.c.h.s8.bf16 %v1069
    %v1446 = vunpack.c.l.s8.bf16 %v1070
    %v1447 = vunpack.c.l.s8.bf16 %v1071
    %v1448 = vunpack.c.l.s8.bf16 %v1072
    %v1449 = vunpack.c.l.s8.bf16 %v1073
    %v1450 = vunpack.c.h.s8.bf16 %v1070
    %v1451 = vunpack.c.h.s8.bf16 %v1071
    %v1452 = vunpack.c.h.s8.bf16 %v1072
    %v1453 = vunpack.c.h.s8.bf16 %v1073
    %v1454 = vunpack.c.l.s8.bf16 %v1074
    %v1455 = vunpack.c.l.s8.bf16 %v1075
    %v1456 = vunpack.c.l.s8.bf16 %v1076
    %v1457 = vunpack.c.l.s8.bf16 %v1077
    %v1458 = vunpack.c.h.s8.bf16 %v1074
    %v1459 = vunpack.c.h.s8.bf16 %v1075
    %v1460 = vunpack.c.h.s8.bf16 %v1076
    %v1461 = vunpack.c.h.s8.bf16 %v1077
    %v1462 = vunpack.c.l.s8.bf16 %v1078
    %v1463 = vunpack.c.l.s8.bf16 %v1079
    %v1464 = vunpack.c.l.s8.bf16 %v1080
    %v1465 = vunpack.c.l.s8.bf16 %v1081
    %v1466 = vunpack.c.h.s8.bf16 %v1078
    %v1467 = vunpack.c.h.s8.bf16 %v1079
    %v1468 = vunpack.c.h.s8.bf16 %v1080
    %v1469 = vunpack.c.h.s8.bf16 %v1081
    %v1470 = vunpack.c.l.s8.bf16 %v1082
    %v1471 = vunpack.c.l.s8.bf16 %v1083
    %v1472 = vunpack.c.l.s8.bf16 %v1084
    %v1473 = vunpack.c.l.s8.bf16 %v1085
    %v1474 = vunpack.c.h.s8.bf16 %v1082
    %v1475 = vunpack.c.h.s8.bf16 %v1083
    %v1476 = vunpack.c.h.s8.bf16 %v1084
    %v1477 = vunpack.c.h.s8.bf16 %v1085
    %v1478 = vunpack.c.l.s8.bf16 %v1086
    %v1479 = vunpack.c.l.s8.bf16 %v1087
    %v1480 = vunpack.c.l.s8.bf16 %v1088
    %v1481 = vunpack.c.l.s8.bf16 %v1089
    %v1482 = vunpack.c.h.s8.bf16 %v1086
    %v1483 = vunpack.c.h.s8.bf16 %v1087
    %v1484 = vunpack.c.h.s8.bf16 %v1088
    %v1485 = vunpack.c.h.s8.bf16 %v1089
    %v1486 = vunpack.c.l.s8.bf16 %v1090
    %v1487 = vunpack.c.l.s8.bf16 %v1091
    %v1488 = vunpack.c.l.s8.bf16 %v1092
    %v1489 = vunpack.c.l.s8.bf16 %v1093
    %v1490 = vunpack.c.h.s8.bf16 %v1090
    %v1491 = vunpack.c.h.s8.bf16 %v1091
    %v1492 = vunpack.c.h.s8.bf16 %v1092
    %v1493 = vunpack.c.h.s8.bf16 %v1093
    %v1494 = vunpack.c.l.s8.bf16 %v1094
    %v1495 = vunpack.c.l.s8.bf16 %v1095
    %v1496 = vunpack.c.l.s8.bf16 %v1096
    %v1497 = vunpack.c.l.s8.bf16 %v1097
    %v1498 = vunpack.c.h.s8.bf16 %v1094
    %v1499 = vunpack.c.h.s8.bf16 %v1095
    %v1500 = vunpack.c.h.s8.bf16 %v1096
    %v1501 = vunpack.c.h.s8.bf16 %v1097
    %v1502 = vunpack.c.l.s8.bf16 %v1098
    %v1503 = vunpack.c.l.s8.bf16 %v1099
    %v1504 = vunpack.c.l.s8.bf16 %v1100
    %v1505 = vunpack.c.l.s8.bf16 %v1101
    %v1506 = vunpack.c.h.s8.bf16 %v1098
    %v1507 = vunpack.c.h.s8.bf16 %v1099
    %v1508 = vunpack.c.h.s8.bf16 %v1100
    %v1509 = vunpack.c.h.s8.bf16 %v1101
    %v1510 = vunpack.c.l.s8.bf16 %v1102
    %v1511 = vunpack.c.l.s8.bf16 %v1103
    %v1512 = vunpack.c.l.s8.bf16 %v1104
    %v1513 = vunpack.c.l.s8.bf16 %v1105
    %v1514 = vunpack.c.h.s8.bf16 %v1102
    %v1515 = vunpack.c.h.s8.bf16 %v1103
    %v1516 = vunpack.c.h.s8.bf16 %v1104
    %v1517 = vunpack.c.h.s8.bf16 %v1105
    %v1518 = vunpack.c.l.s8.bf16 %v1106
    %v1519 = vunpack.c.l.s8.bf16 %v1107
    %v1520 = vunpack.c.l.s8.bf16 %v1108
    %v1521 = vunpack.c.l.s8.bf16 %v1109
    %v1522 = vunpack.c.h.s8.bf16 %v1106
    %v1523 = vunpack.c.h.s8.bf16 %v1107
    %v1524 = vunpack.c.h.s8.bf16 %v1108
    %v1525 = vunpack.c.h.s8.bf16 %v1109
    %v1526 = vunpack.c.l.s8.bf16 %v1110
    %v1527 = vunpack.c.l.s8.bf16 %v1111
    %v1528 = vunpack.c.l.s8.bf16 %v1112
    %v1529 = vunpack.c.l.s8.bf16 %v1113
    %v1530 = vunpack.c.h.s8.bf16 %v1110
    %v1531 = vunpack.c.h.s8.bf16 %v1111
    %v1532 = vunpack.c.h.s8.bf16 %v1112
    %v1533 = vunpack.c.h.s8.bf16 %v1113
    %v1534 = vunpack.c.l.s8.bf16 %v1114
    %v1535 = vunpack.c.l.s8.bf16 %v1115
    %v1536 = vunpack.c.l.s8.bf16 %v1116
    %v1537 = vunpack.c.l.s8.bf16 %v1117
    %v1538 = vunpack.c.h.s8.bf16 %v1114
    %v1539 = vunpack.c.h.s8.bf16 %v1115
    %v1540 = vunpack.c.h.s8.bf16 %v1116
    %v1541 = vunpack.c.h.s8.bf16 %v1117
    %v1542 = vunpack.c.l.s8.bf16 %v1118
    %v1543 = vunpack.c.l.s8.bf16 %v1119
    %v1544 = vunpack.c.l.s8.bf16 %v1120
    %v1545 = vunpack.c.l.s8.bf16 %v1121
    %v1546 = vunpack.c.h.s8.bf16 %v1118
    %v1547 = vunpack.c.h.s8.bf16 %v1119
    %v1548 = vunpack.c.h.s8.bf16 %v1120
    %v1549 = vunpack.c.h.s8.bf16 %v1121
    %v1550 = vunpack.c.l.s8.bf16 %v1122
    %v1551 = vunpack.c.l.s8.bf16 %v1123
    %v1552 = vunpack.c.l.s8.bf16 %v1124
    %v1553 = vunpack.c.l.s8.bf16 %v1125
    %v1554 = vunpack.c.h.s8.bf16 %v1122
    %v1555 = vunpack.c.h.s8.bf16 %v1123
    %v1556 = vunpack.c.h.s8.bf16 %v1124
    %v1557 = vunpack.c.h.s8.bf16 %v1125
    %v1558 = vunpack.c.l.s8.bf16 %v1126
    %v1559 = vunpack.c.l.s8.bf16 %v1127
    %v1560 = vunpack.c.l.s8.bf16 %v1128
    %v1561 = vunpack.c.l.s8.bf16 %v1129
    %v1562 = vunpack.c.h.s8.bf16 %v1126
    %v1563 = vunpack.c.h.s8.bf16 %v1127
    %v1564 = vunpack.c.h.s8.bf16 %v1128
    %v1565 = vunpack.c.h.s8.bf16 %v1129
    %v1566 = vunpack.c.l.s8.bf16 %v1130
    %v1567 = vunpack.c.l.s8.bf16 %v1131
    %v1568 = vunpack.c.l.s8.bf16 %v1132
    %v1569 = vunpack.c.l.s8.bf16 %v1133
    %v1570 = vunpack.c.h.s8.bf16 %v1130
    %v1571 = vunpack.c.h.s8.bf16 %v1131
    %v1572 = vunpack.c.h.s8.bf16 %v1132
    %v1573 = vunpack.c.h.s8.bf16 %v1133
    %v1574 = vunpack.c.l.s8.bf16 %v1134
    %v1575 = vunpack.c.l.s8.bf16 %v1135
    %v1576 = vunpack.c.l.s8.bf16 %v1136
    %v1577 = vunpack.c.l.s8.bf16 %v1137
    %v1578 = vunpack.c.h.s8.bf16 %v1134
    %v1579 = vunpack.c.h.s8.bf16 %v1135
    %v1580 = vunpack.c.h.s8.bf16 %v1136
    %v1581 = vunpack.c.h.s8.bf16 %v1137
    %v1582 = vunpack.c.l.s8.bf16 %v1138
    %v1583 = vunpack.c.l.s8.bf16 %v1139
    %v1584 = vunpack.c.l.s8.bf16 %v1140
    %v1585 = vunpack.c.l.s8.bf16 %v1141
    %v1586 = vunpack.c.h.s8.bf16 %v1138
    %v1587 = vunpack.c.h.s8.bf16 %v1139
    %v1588 = vunpack.c.h.s8.bf16 %v1140
    %v1589 = vunpack.c.h.s8.bf16 %v1141
    %v1590 = vunpack.c.l.s8.bf16 %v1142
    %v1591 = vunpack.c.l.s8.bf16 %v1143
    %v1592 = vunpack.c.l.s8.bf16 %v1144
    %v1593 = vunpack.c.l.s8.bf16 %v1145
    %v1594 = vunpack.c.h.s8.bf16 %v1142
    %v1595 = vunpack.c.h.s8.bf16 %v1143
    %v1596 = vunpack.c.h.s8.bf16 %v1144
    %v1597 = vunpack.c.h.s8.bf16 %v1145
    %v1598 = vunpack.c.l.s8.bf16 %v1146
    %v1599 = vunpack.c.l.s8.bf16 %v1147
    %v1600 = vunpack.c.l.s8.bf16 %v1148
    %v1601 = vunpack.c.l.s8.bf16 %v1149
    %v1602 = vunpack.c.h.s8.bf16 %v1146
    %v1603 = vunpack.c.h.s8.bf16 %v1147
    %v1604 = vunpack.c.h.s8.bf16 %v1148
    %v1605 = vunpack.c.h.s8.bf16 %v1149
    %v1606 = vunpack.c.l.s8.bf16 %v1150
    %v1607 = vunpack.c.l.s8.bf16 %v1151
    %v1608 = vunpack.c.l.s8.bf16 %v1152
    %v1609 = vunpack.c.l.s8.bf16 %v1153
    %v1610 = vunpack.c.h.s8.bf16 %v1150
    %v1611 = vunpack.c.h.s8.bf16 %v1151
    %v1612 = vunpack.c.h.s8.bf16 %v1152
    %v1613 = vunpack.c.h.s8.bf16 %v1153
    %v1614 = vunpack.c.l.s8.bf16 %v1154
    %v1615 = vunpack.c.l.s8.bf16 %v1155
    %v1616 = vunpack.c.l.s8.bf16 %v1156
    %v1617 = vunpack.c.l.s8.bf16 %v1157
    %v1618 = vunpack.c.h.s8.bf16 %v1154
    %v1619 = vunpack.c.h.s8.bf16 %v1155
    %v1620 = vunpack.c.h.s8.bf16 %v1156
    %v1621 = vunpack.c.h.s8.bf16 %v1157
    %v1622 = vunpack.c.l.s8.bf16 %v1158
    %v1623 = vunpack.c.l.s8.bf16 %v1159
    %v1624 = vunpack.c.l.s8.bf16 %v1160
    %v1625 = vunpack.c.l.s8.bf16 %v1161
    %v1626 = vunpack.c.h.s8.bf16 %v1158
    %v1627 = vunpack.c.h.s8.bf16 %v1159
    %v1628 = vunpack.c.h.s8.bf16 %v1160
    %v1629 = vunpack.c.h.s8.bf16 %v1161
    %v1630 = vunpack.c.l.s8.bf16 %v1162
    %v1631 = vunpack.c.l.s8.bf16 %v1163
    %v1632 = vunpack.c.l.s8.bf16 %v1164
    %v1633 = vunpack.c.l.s8.bf16 %v1165
    %v1634 = vunpack.c.h.s8.bf16 %v1162
    %v1635 = vunpack.c.h.s8.bf16 %v1163
    %v1636 = vunpack.c.h.s8.bf16 %v1164
    %v1637 = vunpack.c.h.s8.bf16 %v1165
    %v1638 = vunpack.c.l.s8.bf16 %v1166
    %v1639 = vunpack.c.l.s8.bf16 %v1167
    %v1640 = vunpack.c.l.s8.bf16 %v1168
    %v1641 = vunpack.c.l.s8.bf16 %v1169
    %v1642 = vunpack.c.h.s8.bf16 %v1166
    %v1643 = vunpack.c.h.s8.bf16 %v1167
    %v1644 = vunpack.c.h.s8.bf16 %v1168
    %v1645 = vunpack.c.h.s8.bf16 %v1169
    %v1646 = vunpack.c.l.s8.bf16 %v1170
    %v1647 = vunpack.c.l.s8.bf16 %v1171
    %v1648 = vunpack.c.l.s8.bf16 %v1172
    %v1649 = vunpack.c.l.s8.bf16 %v1173
    %v1650 = vunpack.c.h.s8.bf16 %v1170
    %v1651 = vunpack.c.h.s8.bf16 %v1171
    %v1652 = vunpack.c.h.s8.bf16 %v1172
    %v1653 = vunpack.c.h.s8.bf16 %v1173
    %v1654 = vunpack.c.l.s8.bf16 %v1174
    %v1655 = vunpack.c.l.s8.bf16 %v1175
    %v1656 = vunpack.c.l.s8.bf16 %v1176
    %v1657 = vunpack.c.l.s8.bf16 %v1177
    %v1658 = vunpack.c.h.s8.bf16 %v1174
    %v1659 = vunpack.c.h.s8.bf16 %v1175
    %v1660 = vunpack.c.h.s8.bf16 %v1176
    %v1661 = vunpack.c.h.s8.bf16 %v1177
    %v1662 = vunpack.c.l.s8.bf16 %v1178
    %v1663 = vunpack.c.l.s8.bf16 %v1179
    %v1664 = vunpack.c.l.s8.bf16 %v1180
    %v1665 = vunpack.c.l.s8.bf16 %v1181
    %v1666 = vunpack.c.h.s8.bf16 %v1178
    %v1667 = vunpack.c.h.s8.bf16 %v1179
    %v1668 = vunpack.c.h.s8.bf16 %v1180
    %v1669 = vunpack.c.h.s8.bf16 %v1181
    %v1670 = vunpack.c.l.s8.bf16 %v1182
    %v1671 = vunpack.c.l.s8.bf16 %v1183
    %v1672 = vunpack.c.l.s8.bf16 %v1184
    %v1673 = vunpack.c.l.s8.bf16 %v1185
    %v1674 = vunpack.c.h.s8.bf16 %v1182
    %v1675 = vunpack.c.h.s8.bf16 %v1183
    %v1676 = vunpack.c.h.s8.bf16 %v1184
    %v1677 = vunpack.c.h.s8.bf16 %v1185
    %v1678 = vunpack.c.l.s8.bf16 %v1186
    %v1679 = vunpack.c.l.s8.bf16 %v1187
    %v1680 = vunpack.c.l.s8.bf16 %v1188
    %v1681 = vunpack.c.l.s8.bf16 %v1189
    %v1682 = vunpack.c.h.s8.bf16 %v1186
    %v1683 = vunpack.c.h.s8.bf16 %v1187
    %v1684 = vunpack.c.h.s8.bf16 %v1188
    %v1685 = vunpack.c.h.s8.bf16 %v1189
    %v1686 = vunpack.c.l.s8.bf16 %v1190
    %v1687 = vunpack.c.l.s8.bf16 %v1191
    %v1688 = vunpack.c.l.s8.bf16 %v1192
    %v1689 = vunpack.c.l.s8.bf16 %v1193
    %v1690 = vunpack.c.h.s8.bf16 %v1190
    %v1691 = vunpack.c.h.s8.bf16 %v1191
    %v1692 = vunpack.c.h.s8.bf16 %v1192
    %v1693 = vunpack.c.h.s8.bf16 %v1193
    %v1694 = vunpack.c.l.s8.bf16 %v1194
    %v1695 = vunpack.c.l.s8.bf16 %v1195
    %v1696 = vunpack.c.l.s8.bf16 %v1196
    %v1697 = vunpack.c.l.s8.bf16 %v1197
    %v1698 = vunpack.c.h.s8.bf16 %v1194
    %v1699 = vunpack.c.h.s8.bf16 %v1195
    %v1700 = vunpack.c.h.s8.bf16 %v1196
    %v1701 = vunpack.c.h.s8.bf16 %v1197
    %v1702 = vunpack.c.l.s8.bf16 %v1198
    %v1703 = vunpack.c.l.s8.bf16 %v1199
    %v1704 = vunpack.c.l.s8.bf16 %v1200
    %v1705 = vunpack.c.l.s8.bf16 %v1201
    %v1706 = vunpack.c.h.s8.bf16 %v1198
    %v1707 = vunpack.c.h.s8.bf16 %v1199
    %v1708 = vunpack.c.h.s8.bf16 %v1200
    %v1709 = vunpack.c.h.s8.bf16 %v1201
    %v1710 = vunpack.c.l.s8.bf16 %v1202
    %v1711 = vunpack.c.l.s8.bf16 %v1203
    %v1712 = vunpack.c.l.s8.bf16 %v1204
    %v1713 = vunpack.c.l.s8.bf16 %v1205
    %v1714 = vunpack.c.h.s8.bf16 %v1202
    %v1715 = vunpack.c.h.s8.bf16 %v1203
    %v1716 = vunpack.c.h.s8.bf16 %v1204
    %v1717 = vunpack.c.h.s8.bf16 %v1205
    %1718 = vmatprep.subr.bf16.mxu0 %v1207
    %1719 = vmatpush1.bf16.msra.mxu0 %v1206
    %1720 = vmatprep.subr.bf16.mxu0 %v1211
    %1721 = vmatpush1.bf16.msra.mxu0 %v1210
    %1722 = vmatprep.subr.bf16.mxu0 %v1215
    %1723 = vmatpush1.bf16.msra.mxu0 %v1214
    %1724 = vmatprep.subr.bf16.mxu0 %v1219
    %1725 = vmatpush1.bf16.msra.mxu0 %v1218
    %1726 = vmatprep.subr.bf16.mxu0 %v1223
    %1727 = vmatpush1.bf16.msra.mxu0 %v1222
    %1728 = vmatprep.subr.bf16.mxu0 %v1227
    %1729 = vmatpush1.bf16.msra.mxu0 %v1226
    %1730 = vmatprep.subr.bf16.mxu0 %v1231
    %1731 = vmatpush1.bf16.msra.mxu0 %v1230
    %1732 = vmatprep.subr.bf16.mxu0 %v1235
    %1733 = vmatpush1.bf16.msra.mxu0 %v1234
    %1734 = vmatprep.subr.bf16.mxu0 %v1239
    %1735 = vmatpush1.bf16.msra.mxu0 %v1238
    %1736 = vmatprep.subr.bf16.mxu0 %v1243
    %1737 = vmatpush1.bf16.msra.mxu0 %v1242
    %1738 = vmatprep.subr.bf16.mxu0 %v1247
    %1739 = vmatpush1.bf16.msra.mxu0 %v1246
    %1740 = vmatprep.subr.bf16.mxu0 %v1251
    %1741 = vmatpush1.bf16.msra.mxu0 %v1250
    %1742 = vmatprep.subr.bf16.mxu0 %v1255
    %1743 = vmatpush1.bf16.msra.mxu0 %v1254
    %1744 = vmatprep.subr.bf16.mxu0 %v1259
    %1745 = vmatpush1.bf16.msra.mxu0 %v1258
    %1746 = vmatprep.subr.bf16.mxu0 %v1263
    %1747 = vmatpush1.bf16.msra.mxu0 %v1262
    %1748 = vmatprep.subr.bf16.mxu0 %v1267
    %1749 = vmatpush1.bf16.msra.mxu0 %v1266
    %1750 = vmatprep.mubr.bf16.mxu0 %v935
    %1751 = vmatmul.mubr.bf16.gmra.mrb[0].mxu0 %v934
    %v1752 = vpop.f32.mrb[0].mxu0
    %v1753 = vadd.f32 0.0, %v1752
    %v1754 = vpop.f32.mrb[0].mxu0
    %v1755 = vadd.f32 0.0, %v1754
    %v1756 = vpop.f32.mrb[0].mxu0
    %v1757 = vadd.f32 0.0, %v1756
    %v1758 = vpop.f32.mrb[0].mxu0
    %v1759 = vadd.f32 0.0, %v1758
    %1760 = vdwg.mxu0
    %1761 = vmatprep.subr.bf16.mxu0 %v1271
    %1762 = vmatpush1.bf16.msra.mxu0 %v1270
    %1763 = vmatprep.subr.bf16.mxu0 %v1275
    %1764 = vmatpush1.bf16.msra.mxu0 %v1274
    %1765 = vmatprep.subr.bf16.mxu0 %v1279
    %1766 = vmatpush1.bf16.msra.mxu0 %v1278
    %1767 = vmatprep.subr.bf16.mxu0 %v1283
    %1768 = vmatpush1.bf16.msra.mxu0 %v1282
    %1769 = vmatprep.subr.bf16.mxu0 %v1287
    %1770 = vmatpush1.bf16.msra.mxu0 %v1286
    %1771 = vmatprep.subr.bf16.mxu0 %v1291
    %1772 = vmatpush1.bf16.msra.mxu0 %v1290
    %1773 = vmatprep.subr.bf16.mxu0 %v1295
    %1774 = vmatpush1.bf16.msra.mxu0 %v1294
    %1775 = vmatprep.subr.bf16.mxu0 %v1299
    %1776 = vmatpush1.bf16.msra.mxu0 %v1298
    %1777 = vmatprep.subr.bf16.mxu0 %v1303
    %1778 = vmatpush1.bf16.msra.mxu0 %v1302
    %1779 = vmatprep.subr.bf16.mxu0 %v1307
    %1780 = vmatpush1.bf16.msra.mxu0 %v1306
    %1781 = vmatprep.subr.bf16.mxu0 %v1311
    %1782 = vmatpush1.bf16.msra.mxu0 %v1310
    %1783 = vmatprep.subr.bf16.mxu0 %v1315
    %1784 = vmatpush1.bf16.msra.mxu0 %v1314
    %1785 = vmatprep.subr.bf16.mxu0 %v1319
    %1786 = vmatpush1.bf16.msra.mxu0 %v1318
    %1787 = vmatprep.subr.bf16.mxu0 %v1323
    %1788 = vmatpush1.bf16.msra.mxu0 %v1322
    %1789 = vmatprep.subr.bf16.mxu0 %v1327
    %1790 = vmatpush1.bf16.msra.mxu0 %v1326
    %1791 = vmatprep.subr.bf16.mxu0 %v1331
    %1792 = vmatpush1.bf16.msra.mxu0 %v1330
    %1793 = vmatprep.mubr.bf16.mxu0 %v937
    %1794 = vmatmul.mubr.bf16.gmra.mrb[0].mxu0 %v936
    %v1795 = vpop.f32.mrb[0].mxu0
    %v1796 = vadd.f32 %v1753, %v1795
    %v1797 = vpop.f32.mrb[0].mxu0
    %v1798 = vadd.f32 %v1755, %v1797
    %v1799 = vpop.f32.mrb[0].mxu0
    %v1800 = vadd.f32 %v1757, %v1799
    %v1801 = vpop.f32.mrb[0].mxu0
    %v1802 = vadd.f32 %v1759, %v1801
    %1803 = vdwg.mxu0
    %1804 = vmatprep.subr.bf16.mxu0 %v1335
    %1805 = vmatpush1.bf16.msra.mxu0 %v1334
    %1806 = vmatprep.subr.bf16.mxu0 %v1339
    %1807 = vmatpush1.bf16.msra.mxu0 %v1338
    %1808 = vmatprep.subr.bf16.mxu0 %v1343
    %1809 = vmatpush1.bf16.msra.mxu0 %v1342
    %1810 = vmatprep.subr.bf16.mxu0 %v1347
    %1811 = vmatpush1.bf16.msra.mxu0 %v1346
    %1812 = vmatprep.subr.bf16.mxu0 %v1351
    %1813 = vmatpush1.bf16.msra.mxu0 %v1350
    %1814 = vmatprep.subr.bf16.mxu0 %v1355
    %1815 = vmatpush1.bf16.msra.mxu0 %v1354
    %1816 = vmatprep.subr.bf16.mxu0 %v1359
    %1817 = vmatpush1.bf16.msra.mxu0 %v1358
    %1818 = vmatprep.subr.bf16.mxu0 %v1363
    %1819 = vmatpush1.bf16.msra.mxu0 %v1362
    %1820 = vmatprep.subr.bf16.mxu0 %v1367
    %1821 = vmatpush1.bf16.msra.mxu0 %v1366
    %1822 = vmatprep.subr.bf16.mxu0 %v1371
    %1823 = vmatpush1.bf16.msra.mxu0 %v1370
    %1824 = vmatprep.subr.bf16.mxu0 %v1375
    %1825 = vmatpush1.bf16.msra.mxu0 %v1374
    %1826 = vmatprep.subr.bf16.mxu0 %v1379
    %1827 = vmatpush1.bf16.msra.mxu0 %v1378
    %1828 = vmatprep.subr.bf16.mxu0 %v1383
    %1829 = vmatpush1.bf16.msra.mxu0 %v1382
    %1830 = vmatprep.subr.bf16.mxu0 %v1387
    %1831 = vmatpush1.bf16.msra.mxu0 %v1386
    %1832 = vmatprep.subr.bf16.mxu0 %v1391
    %1833 = vmatpush1.bf16.msra.mxu0 %v1390
    %1834 = vmatprep.subr.bf16.mxu0 %v1395
    %1835 = vmatpush1.bf16.msra.mxu0 %v1394
    %1836 = vmatprep.mubr.bf16.mxu0 %v939
    %1837 = vmatmul.mubr.bf16.gmra.mrb[0].mxu0 %v938
    %v1838 = vpop.f32.mrb[0].mxu0
    %v1839 = vadd.f32 %v1796, %v1838
    %v1840 = vpop.f32.mrb[0].mxu0
    %v1841 = vadd.f32 %v1798, %v1840
    %v1842 = vpop.f32.mrb[0].mxu0
    %v1843 = vadd.f32 %v1800, %v1842
    %v1844 = vpop.f32.mrb[0].mxu0
    %v1845 = vadd.f32 %v1802, %v1844
    %1846 = vdwg.mxu0
    %1847 = vmatprep.subr.bf16.mxu0 %v1399
    %1848 = vmatpush1.bf16.msra.mxu0 %v1398
    %1849 = vmatprep.subr.bf16.mxu0 %v1403
    %1850 = vmatpush1.bf16.msra.mxu0 %v1402
    %1851 = vmatprep.subr.bf16.mxu0 %v1407
    %1852 = vmatpush1.bf16.msra.mxu0 %v1406
    %1853 = vmatprep.subr.bf16.mxu0 %v1411
    %1854 = vmatpush1.bf16.msra.mxu0 %v1410
    %1855 = vmatprep.subr.bf16.mxu0 %v1415
    %1856 = vmatpush1.bf16.msra.mxu0 %v1414
    %1857 = vmatprep.subr.bf16.mxu0 %v1419
    %1858 = vmatpush1.bf16.msra.mxu0 %v1418
    %1859 = vmatprep.subr.bf16.mxu0 %v1423
    %1860 = vmatpush1.bf16.msra.mxu0 %v1422
    %1861 = vmatprep.subr.bf16.mxu0 %v1427
    %1862 = vmatpush1.bf16.msra.mxu0 %v1426
    %1863 = vmatprep.subr.bf16.mxu0 %v1431
    %1864 = vmatpush1.bf16.msra.mxu0 %v1430
    %1865 = vmatprep.subr.bf16.mxu0 %v1435
    %1866 = vmatpush1.bf16.msra.mxu0 %v1434
    %1867 = vmatprep.subr.bf16.mxu0 %v1439
    %1868 = vmatpush1.bf16.msra.mxu0 %v1438
    %1869 = vmatprep.subr.bf16.mxu0 %v1443
    %1870 = vmatpush1.bf16.msra.mxu0 %v1442
    %1871 = vmatprep.subr.bf16.mxu0 %v1447
    %1872 = vmatpush1.bf16.msra.mxu0 %v1446
    %1873 = vmatprep.subr.bf16.mxu0 %v1451
    %1874 = vmatpush1.bf16.msra.mxu0 %v1450
    %1875 = vmatprep.subr.bf16.mxu0 %v1455
    %1876 = vmatpush1.bf16.msra.mxu0 %v1454
    %1877 = vmatprep.subr.bf16.mxu0 %v1459
    %1878 = vmatpush1.bf16.msra.mxu0 %v1458
    %1879 = vmatprep.mubr.bf16.mxu0 %v941
    %1880 = vmatmul.mubr.bf16.gmra.mrb[0].mxu0 %v940
    %v1881 = vpop.f32.mrb[0].mxu0
    %v1882 = vadd.f32 %v1839, %v1881
    %v1883 = vpop.f32.mrb[0].mxu0
    %v1884 = vadd.f32 %v1841, %v1883
    %v1885 = vpop.f32.mrb[0].mxu0
    %v1886 = vadd.f32 %v1843, %v1885
    %v1887 = vpop.f32.mrb[0].mxu0
    %v1888 = vadd.f32 %v1845, %v1887
    %1889 = vdwg.mxu0
    %1890 = vmatprep.subr.bf16.mxu0 %v1463
    %1891 = vmatpush1.bf16.msra.mxu0 %v1462
    %1892 = vmatprep.subr.bf16.mxu0 %v1467
    %1893 = vmatpush1.bf16.msra.mxu0 %v1466
    %1894 = vmatprep.subr.bf16.mxu0 %v1471
    %1895 = vmatpush1.bf16.msra.mxu0 %v1470
    %1896 = vmatprep.subr.bf16.mxu0 %v1475
    %1897 = vmatpush1.bf16.msra.mxu0 %v1474
    %1898 = vmatprep.subr.bf16.mxu0 %v1479
    %1899 = vmatpush1.bf16.msra.mxu0 %v1478
    %1900 = vmatprep.subr.bf16.mxu0 %v1483
    %1901 = vmatpush1.bf16.msra.mxu0 %v1482
    %1902 = vmatprep.subr.bf16.mxu0 %v1487
    %1903 = vmatpush1.bf16.msra.mxu0 %v1486
    %1904 = vmatprep.subr.bf16.mxu0 %v1491
    %1905 = vmatpush1.bf16.msra.mxu0 %v1490
    %1906 = vmatprep.subr.bf16.mxu0 %v1495
    %1907 = vmatpush1.bf16.msra.mxu0 %v1494
    %1908 = vmatprep.subr.bf16.mxu0 %v1499
    %1909 = vmatpush1.bf16.msra.mxu0 %v1498
    %1910 = vmatprep.subr.bf16.mxu0 %v1503
    %1911 = vmatpush1.bf16.msra.mxu0 %v1502
    %1912 = vmatprep.subr.bf16.mxu0 %v1507
    %1913 = vmatpush1.bf16.msra.mxu0 %v1506
    %1914 = vmatprep.subr.bf16.mxu0 %v1511
    %1915 = vmatpush1.bf16.msra.mxu0 %v1510
    %1916 = vmatprep.subr.bf16.mxu0 %v1515
    %1917 = vmatpush1.bf16.msra.mxu0 %v1514
    %1918 = vmatprep.subr.bf16.mxu0 %v1519
    %1919 = vmatpush1.bf16.msra.mxu0 %v1518
    %1920 = vmatprep.subr.bf16.mxu0 %v1523
    %1921 = vmatpush1.bf16.msra.mxu0 %v1522
    %1922 = vmatprep.mubr.bf16.mxu0 %v943
    %1923 = vmatmul.mubr.bf16.gmra.mrb[0].mxu0 %v942
    %v1924 = vpop.f32.mrb[0].mxu0
    %v1925 = vadd.f32 %v1882, %v1924
    %v1926 = vpop.f32.mrb[0].mxu0
    %v1927 = vadd.f32 %v1884, %v1926
    %v1928 = vpop.f32.mrb[0].mxu0
    %v1929 = vadd.f32 %v1886, %v1928
    %v1930 = vpop.f32.mrb[0].mxu0
    %v1931 = vadd.f32 %v1888, %v1930
    %1932 = vdwg.mxu0
    %1933 = vmatprep.subr.bf16.mxu0 %v1527
    %1934 = vmatpush1.bf16.msra.mxu0 %v1526
    %1935 = vmatprep.subr.bf16.mxu0 %v1531
    %1936 = vmatpush1.bf16.msra.mxu0 %v1530
    %1937 = vmatprep.subr.bf16.mxu0 %v1535
    %1938 = vmatpush1.bf16.msra.mxu0 %v1534
    %1939 = vmatprep.subr.bf16.mxu0 %v1539
    %1940 = vmatpush1.bf16.msra.mxu0 %v1538
    %1941 = vmatprep.subr.bf16.mxu0 %v1543
    %1942 = vmatpush1.bf16.msra.mxu0 %v1542
    %1943 = vmatprep.subr.bf16.mxu0 %v1547
    %1944 = vmatpush1.bf16.msra.mxu0 %v1546
    %1945 = vmatprep.subr.bf16.mxu0 %v1551
    %1946 = vmatpush1.bf16.msra.mxu0 %v1550
    %1947 = vmatprep.subr.bf16.mxu0 %v1555
    %1948 = vmatpush1.bf16.msra.mxu0 %v1554
    %1949 = vmatprep.subr.bf16.mxu0 %v1559
    %1950 = vmatpush1.bf16.msra.mxu0 %v1558
    %1951 = vmatprep.subr.bf16.mxu0 %v1563
    %1952 = vmatpush1.bf16.msra.mxu0 %v1562
    %1953 = vmatprep.subr.bf16.mxu0 %v1567
    %1954 = vmatpush1.bf16.msra.mxu0 %v1566
    %1955 = vmatprep.subr.bf16.mxu0 %v1571
    %1956 = vmatpush1.bf16.msra.mxu0 %v1570
    %1957 = vmatprep.subr.bf16.mxu0 %v1575
    %1958 = vmatpush1.bf16.msra.mxu0 %v1574
    %1959 = vmatprep.subr.bf16.mxu0 %v1579
    %1960 = vmatpush1.bf16.msra.mxu0 %v1578
    %1961 = vmatprep.subr.bf16.mxu0 %v1583
    %1962 = vmatpush1.bf16.msra.mxu0 %v1582
    %1963 = vmatprep.subr.bf16.mxu0 %v1587
    %1964 = vmatpush1.bf16.msra.mxu0 %v1586
    %1965 = vmatprep.mubr.bf16.mxu0 %v945
    %1966 = vmatmul.mubr.bf16.gmra.mrb[0].mxu0 %v944
    %v1967 = vpop.f32.mrb[0].mxu0
    %v1968 = vadd.f32 %v1925, %v1967
    %v1969 = vpop.f32.mrb[0].mxu0
    %v1970 = vadd.f32 %v1927, %v1969
    %v1971 = vpop.f32.mrb[0].mxu0
    %v1972 = vadd.f32 %v1929, %v1971
    %v1973 = vpop.f32.mrb[0].mxu0
    %v1974 = vadd.f32 %v1931, %v1973
    %1975 = vdwg.mxu0
    %1976 = vmatprep.subr.bf16.mxu0 %v1591
    %1977 = vmatpush1.bf16.msra.mxu0 %v1590
    %1978 = vmatprep.subr.bf16.mxu0 %v1595
    %1979 = vmatpush1.bf16.msra.mxu0 %v1594
    %1980 = vmatprep.subr.bf16.mxu0 %v1599
    %1981 = vmatpush1.bf16.msra.mxu0 %v1598
    %1982 = vmatprep.subr.bf16.mxu0 %v1603
    %1983 = vmatpush1.bf16.msra.mxu0 %v1602
    %1984 = vmatprep.subr.bf16.mxu0 %v1607
    %1985 = vmatpush1.bf16.msra.mxu0 %v1606
    %1986 = vmatprep.subr.bf16.mxu0 %v1611
    %1987 = vmatpush1.bf16.msra.mxu0 %v1610
    %1988 = vmatprep.subr.bf16.mxu0 %v1615
    %1989 = vmatpush1.bf16.msra.mxu0 %v1614
    %1990 = vmatprep.subr.bf16.mxu0 %v1619
    %1991 = vmatpush1.bf16.msra.mxu0 %v1618
    %1992 = vmatprep.subr.bf16.mxu0 %v1623
    %1993 = vmatpush1.bf16.msra.mxu0 %v1622
    %1994 = vmatprep.subr.bf16.mxu0 %v1627
    %1995 = vmatpush1.bf16.msra.mxu0 %v1626
    %1996 = vmatprep.subr.bf16.mxu0 %v1631
    %1997 = vmatpush1.bf16.msra.mxu0 %v1630
    %1998 = vmatprep.subr.bf16.mxu0 %v1635
    %1999 = vmatpush1.bf16.msra.mxu0 %v1634
    %2000 = vmatprep.subr.bf16.mxu0 %v1639
    %2001 = vmatpush1.bf16.msra.mxu0 %v1638
    %2002 = vmatprep.subr.bf16.mxu0 %v1643
    %2003 = vmatpush1.bf16.msra.mxu0 %v1642
    %2004 = vmatprep.subr.bf16.mxu0 %v1647
    %2005 = vmatpush1.bf16.msra.mxu0 %v1646
    %2006 = vmatprep.subr.bf16.mxu0 %v1651
    %2007 = vmatpush1.bf16.msra.mxu0 %v1650
    %2008 = vmatprep.mubr.bf16.mxu0 %v947
    %2009 = vmatmul.mubr.bf16.gmra.mrb[0].mxu0 %v946
    %v2010 = vpop.f32.mrb[0].mxu0
    %v2011 = vadd.f32 %v1968, %v2010
    %v2012 = vpop.f32.mrb[0].mxu0
    %v2013 = vadd.f32 %v1970, %v2012
    %v2014 = vpop.f32.mrb[0].mxu0
    %v2015 = vadd.f32 %v1972, %v2014
    %v2016 = vpop.f32.mrb[0].mxu0
    %v2017 = vadd.f32 %v1974, %v2016
    %2018 = vdwg.mxu0
    %2019 = vmatprep.subr.bf16.mxu0 %v1655
    %2020 = vmatpush1.bf16.msra.mxu0 %v1654
    %2021 = vmatprep.subr.bf16.mxu0 %v1659
    %2022 = vmatpush1.bf16.msra.mxu0 %v1658
    %2023 = vmatprep.subr.bf16.mxu0 %v1663
    %2024 = vmatpush1.bf16.msra.mxu0 %v1662
    %2025 = vmatprep.subr.bf16.mxu0 %v1667
    %2026 = vmatpush1.bf16.msra.mxu0 %v1666
    %2027 = vmatprep.subr.bf16.mxu0 %v1671
    %2028 = vmatpush1.bf16.msra.mxu0 %v1670
    %2029 = vmatprep.subr.bf16.mxu0 %v1675
    %2030 = vmatpush1.bf16.msra.mxu0 %v1674
    %2031 = vmatprep.subr.bf16.mxu0 %v1679
    %2032 = vmatpush1.bf16.msra.mxu0 %v1678
    %2033 = vmatprep.subr.bf16.mxu0 %v1683
    %2034 = vmatpush1.bf16.msra.mxu0 %v1682
    %2035 = vmatprep.subr.bf16.mxu0 %v1687
    %2036 = vmatpush1.bf16.msra.mxu0 %v1686
    %2037 = vmatprep.subr.bf16.mxu0 %v1691
    %2038 = vmatpush1.bf16.msra.mxu0 %v1690
    %2039 = vmatprep.subr.bf16.mxu0 %v1695
    %2040 = vmatpush1.bf16.msra.mxu0 %v1694
    %2041 = vmatprep.subr.bf16.mxu0 %v1699
    %2042 = vmatpush1.bf16.msra.mxu0 %v1698
    %2043 = vmatprep.subr.bf16.mxu0 %v1703
    %2044 = vmatpush1.bf16.msra.mxu0 %v1702
    %2045 = vmatprep.subr.bf16.mxu0 %v1707
    %2046 = vmatpush1.bf16.msra.mxu0 %v1706
    %2047 = vmatprep.subr.bf16.mxu0 %v1711
    %2048 = vmatpush1.bf16.msra.mxu0 %v1710
    %2049 = vmatprep.subr.bf16.mxu0 %v1715
    %2050 = vmatpush1.bf16.msra.mxu0 %v1714
    %2051 = vmatprep.mubr.bf16.mxu0 %v949
    %2052 = vmatmul.mubr.bf16.gmra.mrb[0].mxu0 %v948
    %v2053 = vpop.f32.mrb[0].mxu0
    %v2054 = vadd.f32 %v2011, %v2053
    %v2055 = vpop.f32.mrb[0].mxu0
    %v2056 = vadd.f32 %v2013, %v2055
    %v2057 = vpop.f32.mrb[0].mxu0
    %v2058 = vadd.f32 %v2015, %v2057
    %v2059 = vpop.f32.mrb[0].mxu0
    %v2060 = vadd.f32 %v2017, %v2059
    %2061 = vdwg.mxu0
    %2062 = vmatprep.subr.bf16.mxu0 %v1209
    %2063 = vmatpush1.bf16.msra.mxu0 %v1208
    %2064 = vmatprep.subr.bf16.mxu0 %v1213
    %2065 = vmatpush1.bf16.msra.mxu0 %v1212
    %2066 = vmatprep.subr.bf16.mxu0 %v1217
    %2067 = vmatpush1.bf16.msra.mxu0 %v1216
    %2068 = vmatprep.subr.bf16.mxu0 %v1221
    %2069 = vmatpush1.bf16.msra.mxu0 %v1220
    %2070 = vmatprep.subr.bf16.mxu0 %v1225
    %2071 = vmatpush1.bf16.msra.mxu0 %v1224
    %2072 = vmatprep.subr.bf16.mxu0 %v1229
    %2073 = vmatpush1.bf16.msra.mxu0 %v1228
    %2074 = vmatprep.subr.bf16.mxu0 %v1233
    %2075 = vmatpush1.bf16.msra.mxu0 %v1232
    %2076 = vmatprep.subr.bf16.mxu0 %v1237
    %2077 = vmatpush1.bf16.msra.mxu0 %v1236
    %2078 = vmatprep.subr.bf16.mxu0 %v1241
    %2079 = vmatpush1.bf16.msra.mxu0 %v1240
    %2080 = vmatprep.subr.bf16.mxu0 %v1245
    %2081 = vmatpush1.bf16.msra.mxu0 %v1244
    %2082 = vmatprep.subr.bf16.mxu0 %v1249
    %2083 = vmatpush1.bf16.msra.mxu0 %v1248
    %2084 = vmatprep.subr.bf16.mxu0 %v1253
    %2085 = vmatpush1.bf16.msra.mxu0 %v1252
    %2086 = vmatprep.subr.bf16.mxu0 %v1257
    %2087 = vmatpush1.bf16.msra.mxu0 %v1256
    %2088 = vmatprep.subr.bf16.mxu0 %v1261
    %2089 = vmatpush1.bf16.msra.mxu0 %v1260
    %2090 = vmatprep.subr.bf16.mxu0 %v1265
    %2091 = vmatpush1.bf16.msra.mxu0 %v1264
    %2092 = vmatprep.subr.bf16.mxu0 %v1269
    %2093 = vmatpush1.bf16.msra.mxu0 %v1268
    %2094 = vmatprep.mubr.bf16.mxu0 %v935
    %2095 = vmatmul.mubr.bf16.gmra.mrb[0].mxu0 %v934
    %v2096 = vpop.f32.mrb[0].mxu0
    %v2097 = vadd.f32 0.0, %v2096
    %v2098 = vpop.f32.mrb[0].mxu0
    %v2099 = vadd.f32 0.0, %v2098
    %v2100 = vpop.f32.mrb[0].mxu0
    %v2101 = vadd.f32 0.0, %v2100
    %v2102 = vpop.f32.mrb[0].mxu0
    %v2103 = vadd.f32 0.0, %v2102
    %2104 = vdwg.mxu0
    %2105 = vmatprep.subr.bf16.mxu0 %v1273
    %2106 = vmatpush1.bf16.msra.mxu0 %v1272
    %2107 = vmatprep.subr.bf16.mxu0 %v1277
    %2108 = vmatpush1.bf16.msra.mxu0 %v1276
    %2109 = vmatprep.subr.bf16.mxu0 %v1281
    %2110 = vmatpush1.bf16.msra.mxu0 %v1280
    %2111 = vmatprep.subr.bf16.mxu0 %v1285
    %2112 = vmatpush1.bf16.msra.mxu0 %v1284
    %2113 = vmatprep.subr.bf16.mxu0 %v1289
    %2114 = vmatpush1.bf16.msra.mxu0 %v1288
    %2115 = vmatprep.subr.bf16.mxu0 %v1293
    %2116 = vmatpush1.bf16.msra.mxu0 %v1292
    %2117 = vmatprep.subr.bf16.mxu0 %v1297
    %2118 = vmatpush1.bf16.msra.mxu0 %v1296
    %2119 = vmatprep.subr.bf16.mxu0 %v1301
    %2120 = vmatpush1.bf16.msra.mxu0 %v1300
    %2121 = vmatprep.subr.bf16.mxu0 %v1305
    %2122 = vmatpush1.bf16.msra.mxu0 %v1304
    %2123 = vmatprep.subr.bf16.mxu0 %v1309
    %2124 = vmatpush1.bf16.msra.mxu0 %v1308
    %2125 = vmatprep.subr.bf16.mxu0 %v1313
    %2126 = vmatpush1.bf16.msra.mxu0 %v1312
    %2127 = vmatprep.subr.bf16.mxu0 %v1317
    %2128 = vmatpush1.bf16.msra.mxu0 %v1316
    %2129 = vmatprep.subr.bf16.mxu0 %v1321
    %2130 = vmatpush1.bf16.msra.mxu0 %v1320
    %2131 = vmatprep.subr.bf16.mxu0 %v1325
    %2132 = vmatpush1.bf16.msra.mxu0 %v1324
    %2133 = vmatprep.subr.bf16.mxu0 %v1329
    %2134 = vmatpush1.bf16.msra.mxu0 %v1328
    %2135 = vmatprep.subr.bf16.mxu0 %v1333
    %2136 = vmatpush1.bf16.msra.mxu0 %v1332
    %2137 = vmatprep.mubr.bf16.mxu0 %v937
    %2138 = vmatmul.mubr.bf16.gmra.mrb[0].mxu0 %v936
    %v2139 = vpop.f32.mrb[0].mxu0
    %v2140 = vadd.f32 %v2097, %v2139
    %v2141 = vpop.f32.mrb[0].mxu0
    %v2142 = vadd.f32 %v2099, %v2141
    %v2143 = vpop.f32.mrb[0].mxu0
    %v2144 = vadd.f32 %v2101, %v2143
    %v2145 = vpop.f32.mrb[0].mxu0
    %v2146 = vadd.f32 %v2103, %v2145
    %2147 = vdwg.mxu0
    %2148 = vmatprep.subr.bf16.mxu0 %v1337
    %2149 = vmatpush1.bf16.msra.mxu0 %v1336
    %2150 = vmatprep.subr.bf16.mxu0 %v1341
    %2151 = vmatpush1.bf16.msra.mxu0 %v1340
    %2152 = vmatprep.subr.bf16.mxu0 %v1345
    %2153 = vmatpush1.bf16.msra.mxu0 %v1344
    %2154 = vmatprep.subr.bf16.mxu0 %v1349
    %2155 = vmatpush1.bf16.msra.mxu0 %v1348
    %2156 = vmatprep.subr.bf16.mxu0 %v1353
    %2157 = vmatpush1.bf16.msra.mxu0 %v1352
    %2158 = vmatprep.subr.bf16.mxu0 %v1357
    %2159 = vmatpush1.bf16.msra.mxu0 %v1356
    %2160 = vmatprep.subr.bf16.mxu0 %v1361
    %2161 = vmatpush1.bf16.msra.mxu0 %v1360
    %2162 = vmatprep.subr.bf16.mxu0 %v1365
    %2163 = vmatpush1.bf16.msra.mxu0 %v1364
    %2164 = vmatprep.subr.bf16.mxu0 %v1369
    %2165 = vmatpush1.bf16.msra.mxu0 %v1368
    %2166 = vmatprep.subr.bf16.mxu0 %v1373
    %2167 = vmatpush1.bf16.msra.mxu0 %v1372
    %2168 = vmatprep.subr.bf16.mxu0 %v1377
    %2169 = vmatpush1.bf16.msra.mxu0 %v1376
    %2170 = vmatprep.subr.bf16.mxu0 %v1381
    %2171 = vmatpush1.bf16.msra.mxu0 %v1380
    %2172 = vmatprep.subr.bf16.mxu0 %v1385
    %2173 = vmatpush1.bf16.msra.mxu0 %v1384
    %2174 = vmatprep.subr.bf16.mxu0 %v1389
    %2175 = vmatpush1.bf16.msra.mxu0 %v1388
    %2176 = vmatprep.subr.bf16.mxu0 %v1393
    %2177 = vmatpush1.bf16.msra.mxu0 %v1392
    %2178 = vmatprep.subr.bf16.mxu0 %v1397
    %2179 = vmatpush1.bf16.msra.mxu0 %v1396
    %2180 = vmatprep.mubr.bf16.mxu0 %v939
    %2181 = vmatmul.mubr.bf16.gmra.mrb[0].mxu0 %v938
    %v2182 = vpop.f32.mrb[0].mxu0
    %v2183 = vadd.f32 %v2140, %v2182
    %v2184 = vpop.f32.mrb[0].mxu0
    %v2185 = vadd.f32 %v2142, %v2184
    %v2186 = vpop.f32.mrb[0].mxu0
    %v2187 = vadd.f32 %v2144, %v2186
    %v2188 = vpop.f32.mrb[0].mxu0
    %v2189 = vadd.f32 %v2146, %v2188
    %2190 = vdwg.mxu0
    %2191 = vmatprep.subr.bf16.mxu0 %v1401
    %2192 = vmatpush1.bf16.msra.mxu0 %v1400
    %2193 = vmatprep.subr.bf16.mxu0 %v1405
    %2194 = vmatpush1.bf16.msra.mxu0 %v1404
    %2195 = vmatprep.subr.bf16.mxu0 %v1409
    %2196 = vmatpush1.bf16.msra.mxu0 %v1408
    %2197 = vmatprep.subr.bf16.mxu0 %v1413
    %2198 = vmatpush1.bf16.msra.mxu0 %v1412
    %2199 = vmatprep.subr.bf16.mxu0 %v1417
    %2200 = vmatpush1.bf16.msra.mxu0 %v1416
    %2201 = vmatprep.subr.bf16.mxu0 %v1421
    %2202 = vmatpush1.bf16.msra.mxu0 %v1420
    %2203 = vmatprep.subr.bf16.mxu0 %v1425
    %2204 = vmatpush1.bf16.msra.mxu0 %v1424
    %2205 = vmatprep.subr.bf16.mxu0 %v1429
    %2206 = vmatpush1.bf16.msra.mxu0 %v1428
    %2207 = vmatprep.subr.bf16.mxu0 %v1433
    %2208 = vmatpush1.bf16.msra.mxu0 %v1432
    %2209 = vmatprep.subr.bf16.mxu0 %v1437
    %2210 = vmatpush1.bf16.msra.mxu0 %v1436
    %2211 = vmatprep.subr.bf16.mxu0 %v1441
    %2212 = vmatpush1.bf16.msra.mxu0 %v1440
    %2213 = vmatprep.subr.bf16.mxu0 %v1445
    %2214 = vmatpush1.bf16.msra.mxu0 %v1444
    %2215 = vmatprep.subr.bf16.mxu0 %v1449
    %2216 = vmatpush1.bf16.msra.mxu0 %v1448
    %2217 = vmatprep.subr.bf16.mxu0 %v1453
    %2218 = vmatpush1.bf16.msra.mxu0 %v1452
    %2219 = vmatprep.subr.bf16.mxu0 %v1457
    %2220 = vmatpush1.bf16.msra.mxu0 %v1456
    %2221 = vmatprep.subr.bf16.mxu0 %v1461
    %2222 = vmatpush1.bf16.msra.mxu0 %v1460
    %2223 = vmatprep.mubr.bf16.mxu0 %v941
    %2224 = vmatmul.mubr.bf16.gmra.mrb[0].mxu0 %v940
    %v2225 = vpop.f32.mrb[0].mxu0
    %v2226 = vadd.f32 %v2183, %v2225
    %v2227 = vpop.f32.mrb[0].mxu0
    %v2228 = vadd.f32 %v2185, %v2227
    %v2229 = vpop.f32.mrb[0].mxu0
    %v2230 = vadd.f32 %v2187, %v2229
    %v2231 = vpop.f32.mrb[0].mxu0
    %v2232 = vadd.f32 %v2189, %v2231
    %2233 = vdwg.mxu0
    %2234 = vmatprep.subr.bf16.mxu0 %v1465
    %2235 = vmatpush1.bf16.msra.mxu0 %v1464
    %2236 = vmatprep.subr.bf16.mxu0 %v1469
    %2237 = vmatpush1.bf16.msra.mxu0 %v1468
    %2238 = vmatprep.subr.bf16.mxu0 %v1473
    %2239 = vmatpush1.bf16.msra.mxu0 %v1472
    %2240 = vmatprep.subr.bf16.mxu0 %v1477
    %2241 = vmatpush1.bf16.msra.mxu0 %v1476
    %2242 = vmatprep.subr.bf16.mxu0 %v1481
    %2243 = vmatpush1.bf16.msra.mxu0 %v1480
    %2244 = vmatprep.subr.bf16.mxu0 %v1485
    %2245 = vmatpush1.bf16.msra.mxu0 %v1484
    %2246 = vmatprep.subr.bf16.mxu0 %v1489
    %2247 = vmatpush1.bf16.msra.mxu0 %v1488
    %2248 = vmatprep.subr.bf16.mxu0 %v1493
    %2249 = vmatpush1.bf16.msra.mxu0 %v1492
    %2250 = vmatprep.subr.bf16.mxu0 %v1497
    %2251 = vmatpush1.bf16.msra.mxu0 %v1496
    %2252 = vmatprep.subr.bf16.mxu0 %v1501
    %2253 = vmatpush1.bf16.msra.mxu0 %v1500
    %2254 = vmatprep.subr.bf16.mxu0 %v1505
    %2255 = vmatpush1.bf16.msra.mxu0 %v1504
    %2256 = vmatprep.subr.bf16.mxu0 %v1509
    %2257 = vmatpush1.bf16.msra.mxu0 %v1508
    %2258 = vmatprep.subr.bf16.mxu0 %v1513
    %2259 = vmatpush1.bf16.msra.mxu0 %v1512
    %2260 = vmatprep.subr.bf16.mxu0 %v1517
    %2261 = vmatpush1.bf16.msra.mxu0 %v1516
    %2262 = vmatprep.subr.bf16.mxu0 %v1521
    %2263 = vmatpush1.bf16.msra.mxu0 %v1520
    %2264 = vmatprep.subr.bf16.mxu0 %v1525
    %2265 = vmatpush1.bf16.msra.mxu0 %v1524
    %2266 = vmatprep.mubr.bf16.mxu0 %v943
    %2267 = vmatmul.mubr.bf16.gmra.mrb[0].mxu0 %v942
    %v2268 = vpop.f32.mrb[0].mxu0
    %v2269 = vadd.f32 %v2226, %v2268
    %v2270 = vpop.f32.mrb[0].mxu0
    %v2271 = vadd.f32 %v2228, %v2270
    %v2272 = vpop.f32.mrb[0].mxu0
    %v2273 = vadd.f32 %v2230, %v2272
    %v2274 = vpop.f32.mrb[0].mxu0
    %v2275 = vadd.f32 %v2232, %v2274
    %2276 = vdwg.mxu0
    %2277 = vmatprep.subr.bf16.mxu0 %v1529
    %2278 = vmatpush1.bf16.msra.mxu0 %v1528
    %2279 = vmatprep.subr.bf16.mxu0 %v1533
    %2280 = vmatpush1.bf16.msra.mxu0 %v1532
    %2281 = vmatprep.subr.bf16.mxu0 %v1537
    %2282 = vmatpush1.bf16.msra.mxu0 %v1536
    %2283 = vmatprep.subr.bf16.mxu0 %v1541
    %2284 = vmatpush1.bf16.msra.mxu0 %v1540
    %2285 = vmatprep.subr.bf16.mxu0 %v1545
    %2286 = vmatpush1.bf16.msra.mxu0 %v1544
    %2287 = vmatprep.subr.bf16.mxu0 %v1549
    %2288 = vmatpush1.bf16.msra.mxu0 %v1548
    %2289 = vmatprep.subr.bf16.mxu0 %v1553
    %2290 = vmatpush1.bf16.msra.mxu0 %v1552
    %2291 = vmatprep.subr.bf16.mxu0 %v1557
    %2292 = vmatpush1.bf16.msra.mxu0 %v1556
    %2293 = vmatprep.subr.bf16.mxu0 %v1561
    %2294 = vmatpush1.bf16.msra.mxu0 %v1560
    %2295 = vmatprep.subr.bf16.mxu0 %v1565
    %2296 = vmatpush1.bf16.msra.mxu0 %v1564
    %2297 = vmatprep.subr.bf16.mxu0 %v1569
    %2298 = vmatpush1.bf16.msra.mxu0 %v1568
    %2299 = vmatprep.subr.bf16.mxu0 %v1573
    %2300 = vmatpush1.bf16.msra.mxu0 %v1572
    %2301 = vmatprep.subr.bf16.mxu0 %v1577
    %2302 = vmatpush1.bf16.msra.mxu0 %v1576
    %2303 = vmatprep.subr.bf16.mxu0 %v1581
    %2304 = vmatpush1.bf16.msra.mxu0 %v1580
    %2305 = vmatprep.subr.bf16.mxu0 %v1585
    %2306 = vmatpush1.bf16.msra.mxu0 %v1584
    %2307 = vmatprep.subr.bf16.mxu0 %v1589
    %2308 = vmatpush1.bf16.msra.mxu0 %v1588
    %2309 = vmatprep.mubr.bf16.mxu0 %v945
    %2310 = vmatmul.mubr.bf16.gmra.mrb[0].mxu0 %v944
    %v2311 = vpop.f32.mrb[0].mxu0
    %v2312 = vadd.f32 %v2269, %v2311
    %v2313 = vpop.f32.mrb[0].mxu0
    %v2314 = vadd.f32 %v2271, %v2313
    %v2315 = vpop.f32.mrb[0].mxu0
    %v2316 = vadd.f32 %v2273, %v2315
    %v2317 = vpop.f32.mrb[0].mxu0
    %v2318 = vadd.f32 %v2275, %v2317
    %2319 = vdwg.mxu0
    %2320 = vmatprep.subr.bf16.mxu0 %v1593
    %2321 = vmatpush1.bf16.msra.mxu0 %v1592
    %2322 = vmatprep.subr.bf16.mxu0 %v1597
    %2323 = vmatpush1.bf16.msra.mxu0 %v1596
    %2324 = vmatprep.subr.bf16.mxu0 %v1601
    %2325 = vmatpush1.bf16.msra.mxu0 %v1600
    %2326 = vmatprep.subr.bf16.mxu0 %v1605
    %2327 = vmatpush1.bf16.msra.mxu0 %v1604
    %2328 = vmatprep.subr.bf16.mxu0 %v1609
    %2329 = vmatpush1.bf16.msra.mxu0 %v1608
    %2330 = vmatprep.subr.bf16.mxu0 %v1613
    %2331 = vmatpush1.bf16.msra.mxu0 %v1612
    %2332 = vmatprep.subr.bf16.mxu0 %v1617
    %2333 = vmatpush1.bf16.msra.mxu0 %v1616
    %2334 = vmatprep.subr.bf16.mxu0 %v1621
    %2335 = vmatpush1.bf16.msra.mxu0 %v1620
    %2336 = vmatprep.subr.bf16.mxu0 %v1625
    %2337 = vmatpush1.bf16.msra.mxu0 %v1624
    %2338 = vmatprep.subr.bf16.mxu0 %v1629
    %2339 = vmatpush1.bf16.msra.mxu0 %v1628
    %2340 = vmatprep.subr.bf16.mxu0 %v1633
    %2341 = vmatpush1.bf16.msra.mxu0 %v1632
    %2342 = vmatprep.subr.bf16.mxu0 %v1637
    %2343 = vmatpush1.bf16.msra.mxu0 %v1636
    %2344 = vmatprep.subr.bf16.mxu0 %v1641
    %2345 = vmatpush1.bf16.msra.mxu0 %v1640
    %2346 = vmatprep.subr.bf16.mxu0 %v1645
    %2347 = vmatpush1.bf16.msra.mxu0 %v1644
    %2348 = vmatprep.subr.bf16.mxu0 %v1649
    %2349 = vmatpush1.bf16.msra.mxu0 %v1648
    %2350 = vmatprep.subr.bf16.mxu0 %v1653
    %2351 = vmatpush1.bf16.msra.mxu0 %v1652
    %2352 = vmatprep.mubr.bf16.mxu0 %v947
    %2353 = vmatmul.mubr.bf16.gmra.mrb[0].mxu0 %v946
    %v2354 = vpop.f32.mrb[0].mxu0
    %v2355 = vadd.f32 %v2312, %v2354
    %v2356 = vpop.f32.mrb[0].mxu0
    %v2357 = vadd.f32 %v2314, %v2356
    %v2358 = vpop.f32.mrb[0].mxu0
    %v2359 = vadd.f32 %v2316, %v2358
    %v2360 = vpop.f32.mrb[0].mxu0
    %v2361 = vadd.f32 %v2318, %v2360
    %2362 = vdwg.mxu0
    %2363 = vmatprep.subr.bf16.mxu0 %v1657
    %2364 = vmatpush1.bf16.msra.mxu0 %v1656
    %2365 = vmatprep.subr.bf16.mxu0 %v1661
    %2366 = vmatpush1.bf16.msra.mxu0 %v1660
    %2367 = vmatprep.subr.bf16.mxu0 %v1665
    %2368 = vmatpush1.bf16.msra.mxu0 %v1664
    %2369 = vmatprep.subr.bf16.mxu0 %v1669
    %2370 = vmatpush1.bf16.msra.mxu0 %v1668
    %2371 = vmatprep.subr.bf16.mxu0 %v1673
    %2372 = vmatpush1.bf16.msra.mxu0 %v1672
    %2373 = vmatprep.subr.bf16.mxu0 %v1677
    %2374 = vmatpush1.bf16.msra.mxu0 %v1676
    %2375 = vmatprep.subr.bf16.mxu0 %v1681
    %2376 = vmatpush1.bf16.msra.mxu0 %v1680
    %2377 = vmatprep.subr.bf16.mxu0 %v1685
    %2378 = vmatpush1.bf16.msra.mxu0 %v1684
    %2379 = vmatprep.subr.bf16.mxu0 %v1689
    %2380 = vmatpush1.bf16.msra.mxu0 %v1688
    %2381 = vmatprep.subr.bf16.mxu0 %v1693
    %2382 = vmatpush1.bf16.msra.mxu0 %v1692
    %2383 = vmatprep.subr.bf16.mxu0 %v1697
    %2384 = vmatpush1.bf16.msra.mxu0 %v1696
    %2385 = vmatprep.subr.bf16.mxu0 %v1701
    %2386 = vmatpush1.bf16.msra.mxu0 %v1700
    %2387 = vmatprep.subr.bf16.mxu0 %v1705
    %2388 = vmatpush1.bf16.msra.mxu0 %v1704
    %2389 = vmatprep.subr.bf16.mxu0 %v1709
    %2390 = vmatpush1.bf16.msra.mxu0 %v1708
    %2391 = vmatprep.subr.bf16.mxu0 %v1713
    %2392 = vmatpush1.bf16.msra.mxu0 %v1712
    %2393 = vmatprep.subr.bf16.mxu0 %v1717
    %2394 = vmatpush1.bf16.msra.mxu0 %v1716
    %2395 = vmatprep.mubr.bf16.mxu0 %v949
    %2396 = vmatmul.mubr.bf16.gmra.mrb[0].mxu0 %v948
    %v2397 = vpop.f32.mrb[0].mxu0
    %v2398 = vadd.f32 %v2355, %v2397
    %v2399 = vpop.f32.mrb[0].mxu0
    %v2400 = vadd.f32 %v2357, %v2399
    %v2401 = vpop.f32.mrb[0].mxu0
    %v2402 = vadd.f32 %v2359, %v2401
    %v2403 = vpop.f32.mrb[0].mxu0
    %v2404 = vadd.f32 %v2361, %v2403
    %2405 = vdwg.mxu0
    %v2406 = vld [vmem:[%s4] sm:$0xf]
    %v2408 = vlaneseq
    %v2409 = vshrl.u32 %v2408, 7
    %v2410 = vsub.s32 0, %v2409
    %v2411 = vrot.slane %v2406, %v2410
    %v2412 = vlaneseq
    %v2413 = vshrl.u32 %v2412, 7
    %v2414 = vsub.s32 1, %v2413
    %v2415 = vrot.slane %v2406, %v2414
    %v2416 = vlaneseq
    %v2417 = vshrl.u32 %v2416, 7
    %v2418 = vsub.s32 2, %v2417
    %v2419 = vrot.slane %v2406, %v2418
    %v2420 = vlaneseq
    %v2421 = vshrl.u32 %v2420, 7
    %v2422 = vsub.s32 3, %v2421
    %v2423 = vrot.slane %v2406, %v2422
    %v2428 = vmul.f32 %v2054, %v2411
    %v2429 = vmul.f32 %v2056, %v2415
    %v2430 = vmul.f32 %v2398, %v2419
    %v2431 = vmul.f32 %v2400, %v2423
    %v2432 = vmul.f32 %v2058, %v2411
    %v2433 = vmul.f32 %v2060, %v2415
    %v2434 = vmul.f32 %v2402, %v2419
    %v2435 = vmul.f32 %v2404, %v2423
    %v2436 = vld [vmem:[%s5] sm:$0xf]
    %v2438 = vlaneseq
    %v2439 = vshrl.u32 %v2438, 7
    %v2440 = vsub.s32 0, %v2439
    %v2441 = vrot.slane %v2436, %v2440
    %v2442 = vlaneseq
    %v2443 = vshrl.u32 %v2442, 7
    %v2444 = vsub.s32 1, %v2443
    %v2445 = vrot.slane %v2436, %v2444
    %v2446 = vlaneseq
    %v2447 = vshrl.u32 %v2446, 7
    %v2448 = vsub.s32 2, %v2447
    %v2449 = vrot.slane %v2436, %v2448
    %v2450 = vlaneseq
    %v2451 = vshrl.u32 %v2450, 7
    %v2452 = vsub.s32 3, %v2451
    %v2453 = vrot.slane %v2436, %v2452
    %v2458 = vadd.f32 %v2428, %v2441
    %v2459 = vadd.f32 %v2429, %v2445
    %v2460 = vadd.f32 %v2430, %v2449
    %v2461 = vadd.f32 %v2431, %v2453
    %v2462 = vadd.f32 %v2432, %v2441
    %v2463 = vadd.f32 %v2433, %v2445
    %v2464 = vadd.f32 %v2434, %v2449
    %v2465 = vadd.f32 %v2435, %v2453
    %vm2466 = vcmp.gt.f32.partialorder %v2458, 0.0
    %vm2467 = vcmp.gt.f32.partialorder %v2459, 0.0
    %vm2468 = vcmp.gt.f32.partialorder %v2460, 0.0
    %vm2469 = vcmp.gt.f32.partialorder %v2461, 0.0
    %vm2470 = vcmp.gt.f32.partialorder %v2462, 0.0
    %vm2471 = vcmp.gt.f32.partialorder %v2463, 0.0
    %vm2472 = vcmp.gt.f32.partialorder %v2464, 0.0
    %vm2473 = vcmp.gt.f32.partialorder %v2465, 0.0
    %v2474 = vmul.f32 %v2458, 0.01
    %v2475 = vmul.f32 %v2459, 0.01
    %v2476 = vmul.f32 %v2460, 0.01
    %v2477 = vmul.f32 %v2461, 0.01
    %v2478 = vmul.f32 %v2462, 0.01
    %v2479 = vmul.f32 %v2463, 0.01
    %v2480 = vmul.f32 %v2464, 0.01
    %v2481 = vmul.f32 %v2465, 0.01
    %v2482 = vsel %vm2466, %v2458, %v2474
    %v2483 = vsel %vm2467, %v2459, %v2475
    %v2484 = vsel %vm2468, %v2460, %v2476
    %v2485 = vsel %vm2469, %v2461, %v2477
    %v2486 = vsel %vm2470, %v2462, %v2478
    %v2487 = vsel %vm2471, %v2463, %v2479
    %v2488 = vsel %vm2472, %v2464, %v2480
    %v2489 = vsel %vm2473, %v2465, %v2481
    %v2490 = vpack.c.bf16 %v2486, %v2482
    %v2491 = vpack.c.bf16 %v2487, %v2483
    %v2492 = vpack.c.bf16 %v2488, %v2484
    %v2493 = vpack.c.bf16 %v2489, %v2485
    %v2494 = vld [vmem:[#allocation6] sm:$0xff]
    %v2495 = vld [vmem:[#allocation6 + $0x8] sm:$0xff]
    %v2496 = vld [vmem:[#allocation6 + $0x10] sm:$0xff]
    %v2497 = vld [vmem:[#allocation6 + $0x18] sm:$0xff]
    %v2498 = vld [vmem:[#allocation6 + $0x20] sm:$0xff]
    %v2499 = vld [vmem:[#allocation6 + $0x28] sm:$0xff]
    %v2500 = vld [vmem:[#allocation6 + $0x30] sm:$0xff]
    %v2501 = vld [vmem:[#allocation6 + $0x38] sm:$0xff]
    %v2502 = vld [vmem:[#allocation6 + $0x40] sm:$0xff]
    %v2503 = vld [vmem:[#allocation6 + $0x48] sm:$0xff]
    %v2504 = vld [vmem:[#allocation6 + $0x50] sm:$0xff]
    %v2505 = vld [vmem:[#allocation6 + $0x58] sm:$0xff]
    %v2506 = vld [vmem:[#allocation6 + $0x60] sm:$0xff]
    %v2507 = vld [vmem:[#allocation6 + $0x68] sm:$0xff]
    %v2508 = vld [vmem:[#allocation6 + $0x70] sm:$0xff]
    %v2509 = vld [vmem:[#allocation6 + $0x78] sm:$0xff]
    %v2510 = vld [vmem:[#allocation6 + $0x80] sm:$0xff]
    %v2511 = vld [vmem:[#allocation6 + $0x88] sm:$0xff]
    %v2512 = vld [vmem:[#allocation6 + $0x90] sm:$0xff]
    %v2513 = vld [vmem:[#allocation6 + $0x98] sm:$0xff]
    %v2514 = vld [vmem:[#allocation6 + $0xa0] sm:$0xff]
    %v2515 = vld [vmem:[#allocation6 + $0xa8] sm:$0xff]
    %v2516 = vld [vmem:[#allocation6 + $0xb0] sm:$0xff]
    %v2517 = vld [vmem:[#allocation6 + $0xb8] sm:$0xff]
    %v2518 = vld [vmem:[#allocation6 + $0xc0] sm:$0xff]
    %v2519 = vld [vmem:[#allocation6 + $0xc8] sm:$0xff]
    %v2520 = vld [vmem:[#allocation6 + $0xd0] sm:$0xff]
    %v2521 = vld [vmem:[#allocation6 + $0xd8] sm:$0xff]
    %v2522 = vld [vmem:[#allocation6 + $0xe0] sm:$0xff]
    %v2523 = vld [vmem:[#allocation6 + $0xe8] sm:$0xff]
    %v2524 = vld [vmem:[#allocation6 + $0xf0] sm:$0xff]
    %v2525 = vld [vmem:[#allocation6 + $0xf8] sm:$0xff]
    %v2526 = vld [vmem:[#allocation6 + $0x100] sm:$0xff]
    %v2527 = vld [vmem:[#allocation6 + $0x108] sm:$0xff]
    %v2528 = vld [vmem:[#allocation6 + $0x110] sm:$0xff]
    %v2529 = vld [vmem:[#allocation6 + $0x118] sm:$0xff]
    %v2530 = vld [vmem:[#allocation6 + $0x120] sm:$0xff]
    %v2531 = vld [vmem:[#allocation6 + $0x128] sm:$0xff]
    %v2532 = vld [vmem:[#allocation6 + $0x130] sm:$0xff]
    %v2533 = vld [vmem:[#allocation6 + $0x138] sm:$0xff]
    %v2534 = vld [vmem:[#allocation6 + $0x140] sm:$0xff]
    %v2535 = vld [vmem:[#allocation6 + $0x148] sm:$0xff]
    %v2536 = vld [vmem:[#allocation6 + $0x150] sm:$0xff]
    %v2537 = vld [vmem:[#allocation6 + $0x158] sm:$0xff]
    %v2538 = vld [vmem:[#allocation6 + $0x160] sm:$0xff]
    %v2539 = vld [vmem:[#allocation6 + $0x168] sm:$0xff]
    %v2540 = vld [vmem:[#allocation6 + $0x170] sm:$0xff]
    %v2541 = vld [vmem:[#allocation6 + $0x178] sm:$0xff]
    %v2542 = vld [vmem:[#allocation6 + $0x180] sm:$0xff]
    %v2543 = vld [vmem:[#allocation6 + $0x188] sm:$0xff]
    %v2544 = vld [vmem:[#allocation6 + $0x190] sm:$0xff]
    %v2545 = vld [vmem:[#allocation6 + $0x198] sm:$0xff]
    %v2546 = vld [vmem:[#allocation6 + $0x1a0] sm:$0xff]
    %v2547 = vld [vmem:[#allocation6 + $0x1a8] sm:$0xff]
    %v2548 = vld [vmem:[#allocation6 + $0x1b0] sm:$0xff]
    %v2549 = vld [vmem:[#allocation6 + $0x1b8] sm:$0xff]
    %v2550 = vld [vmem:[#allocation6 + $0x1c0] sm:$0xff]
    %v2551 = vld [vmem:[#allocation6 + $0x1c8] sm:$0xff]
    %v2552 = vld [vmem:[#allocation6 + $0x1d0] sm:$0xff]
    %v2553 = vld [vmem:[#allocation6 + $0x1d8] sm:$0xff]
    %v2554 = vld [vmem:[#allocation6 + $0x1e0] sm:$0xff]
    %v2555 = vld [vmem:[#allocation6 + $0x1e8] sm:$0xff]
    %v2556 = vld [vmem:[#allocation6 + $0x1f0] sm:$0xff]
    %v2557 = vld [vmem:[#allocation6 + $0x1f8] sm:$0xff]
    %v2558 = vunpack.c.l.s8.bf16 %v2494
    %v2559 = vunpack.c.l.s8.bf16 %v2495
    %v2560 = vunpack.c.l.s8.bf16 %v2496
    %v2561 = vunpack.c.l.s8.bf16 %v2497
    %v2562 = vunpack.c.h.s8.bf16 %v2494
    %v2563 = vunpack.c.h.s8.bf16 %v2495
    %v2564 = vunpack.c.h.s8.bf16 %v2496
    %v2565 = vunpack.c.h.s8.bf16 %v2497
    %v2566 = vunpack.c.l.s8.bf16 %v2498
    %v2567 = vunpack.c.l.s8.bf16 %v2499
    %v2568 = vunpack.c.l.s8.bf16 %v2500
    %v2569 = vunpack.c.l.s8.bf16 %v2501
    %v2570 = vunpack.c.h.s8.bf16 %v2498
    %v2571 = vunpack.c.h.s8.bf16 %v2499
    %v2572 = vunpack.c.h.s8.bf16 %v2500
    %v2573 = vunpack.c.h.s8.bf16 %v2501
    %v2574 = vunpack.c.l.s8.bf16 %v2502
    %v2575 = vunpack.c.l.s8.bf16 %v2503
    %v2576 = vunpack.c.l.s8.bf16 %v2504
    %v2577 = vunpack.c.l.s8.bf16 %v2505
    %v2578 = vunpack.c.h.s8.bf16 %v2502
    %v2579 = vunpack.c.h.s8.bf16 %v2503
    %v2580 = vunpack.c.h.s8.bf16 %v2504
    %v2581 = vunpack.c.h.s8.bf16 %v2505
    %v2582 = vunpack.c.l.s8.bf16 %v2506
    %v2583 = vunpack.c.l.s8.bf16 %v2507
    %v2584 = vunpack.c.l.s8.bf16 %v2508
    %v2585 = vunpack.c.l.s8.bf16 %v2509
    %v2586 = vunpack.c.h.s8.bf16 %v2506
    %v2587 = vunpack.c.h.s8.bf16 %v2507
    %v2588 = vunpack.c.h.s8.bf16 %v2508
    %v2589 = vunpack.c.h.s8.bf16 %v2509
    %v2590 = vunpack.c.l.s8.bf16 %v2510
    %v2591 = vunpack.c.l.s8.bf16 %v2511
    %v2592 = vunpack.c.l.s8.bf16 %v2512
    %v2593 = vunpack.c.l.s8.bf16 %v2513
    %v2594 = vunpack.c.h.s8.bf16 %v2510
    %v2595 = vunpack.c.h.s8.bf16 %v2511
    %v2596 = vunpack.c.h.s8.bf16 %v2512
    %v2597 = vunpack.c.h.s8.bf16 %v2513
    %v2598 = vunpack.c.l.s8.bf16 %v2514
    %v2599 = vunpack.c.l.s8.bf16 %v2515
    %v2600 = vunpack.c.l.s8.bf16 %v2516
    %v2601 = vunpack.c.l.s8.bf16 %v2517
    %v2602 = vunpack.c.h.s8.bf16 %v2514
    %v2603 = vunpack.c.h.s8.bf16 %v2515
    %v2604 = vunpack.c.h.s8.bf16 %v2516
    %v2605 = vunpack.c.h.s8.bf16 %v2517
    %v2606 = vunpack.c.l.s8.bf16 %v2518
    %v2607 = vunpack.c.l.s8.bf16 %v2519
    %v2608 = vunpack.c.l.s8.bf16 %v2520
    %v2609 = vunpack.c.l.s8.bf16 %v2521
    %v2610 = vunpack.c.h.s8.bf16 %v2518
    %v2611 = vunpack.c.h.s8.bf16 %v2519
    %v2612 = vunpack.c.h.s8.bf16 %v2520
    %v2613 = vunpack.c.h.s8.bf16 %v2521
    %v2614 = vunpack.c.l.s8.bf16 %v2522
    %v2615 = vunpack.c.l.s8.bf16 %v2523
    %v2616 = vunpack.c.l.s8.bf16 %v2524
    %v2617 = vunpack.c.l.s8.bf16 %v2525
    %v2618 = vunpack.c.h.s8.bf16 %v2522
    %v2619 = vunpack.c.h.s8.bf16 %v2523
    %v2620 = vunpack.c.h.s8.bf16 %v2524
    %v2621 = vunpack.c.h.s8.bf16 %v2525
    %v2622 = vunpack.c.l.s8.bf16 %v2526
    %v2623 = vunpack.c.l.s8.bf16 %v2527
    %v2624 = vunpack.c.l.s8.bf16 %v2528
    %v2625 = vunpack.c.l.s8.bf16 %v2529
    %v2626 = vunpack.c.h.s8.bf16 %v2526
    %v2627 = vunpack.c.h.s8.bf16 %v2527
    %v2628 = vunpack.c.h.s8.bf16 %v2528
    %v2629 = vunpack.c.h.s8.bf16 %v2529
    %v2630 = vunpack.c.l.s8.bf16 %v2530
    %v2631 = vunpack.c.l.s8.bf16 %v2531
    %v2632 = vunpack.c.l.s8.bf16 %v2532
    %v2633 = vunpack.c.l.s8.bf16 %v2533
    %v2634 = vunpack.c.h.s8.bf16 %v2530
    %v2635 = vunpack.c.h.s8.bf16 %v2531
    %v2636 = vunpack.c.h.s8.bf16 %v2532
    %v2637 = vunpack.c.h.s8.bf16 %v2533
    %v2638 = vunpack.c.l.s8.bf16 %v2534
    %v2639 = vunpack.c.l.s8.bf16 %v2535
    %v2640 = vunpack.c.l.s8.bf16 %v2536
    %v2641 = vunpack.c.l.s8.bf16 %v2537
    %v2642 = vunpack.c.h.s8.bf16 %v2534
    %v2643 = vunpack.c.h.s8.bf16 %v2535
    %v2644 = vunpack.c.h.s8.bf16 %v2536
    %v2645 = vunpack.c.h.s8.bf16 %v2537
    %v2646 = vunpack.c.l.s8.bf16 %v2538
    %v2647 = vunpack.c.l.s8.bf16 %v2539
    %v2648 = vunpack.c.l.s8.bf16 %v2540
    %v2649 = vunpack.c.l.s8.bf16 %v2541
    %v2650 = vunpack.c.h.s8.bf16 %v2538
    %v2651 = vunpack.c.h.s8.bf16 %v2539
    %v2652 = vunpack.c.h.s8.bf16 %v2540
    %v2653 = vunpack.c.h.s8.bf16 %v2541
    %v2654 = vunpack.c.l.s8.bf16 %v2542
    %v2655 = vunpack.c.l.s8.bf16 %v2543
    %v2656 = vunpack.c.l.s8.bf16 %v2544
    %v2657 = vunpack.c.l.s8.bf16 %v2545
    %v2658 = vunpack.c.h.s8.bf16 %v2542
    %v2659 = vunpack.c.h.s8.bf16 %v2543
    %v2660 = vunpack.c.h.s8.bf16 %v2544
    %v2661 = vunpack.c.h.s8.bf16 %v2545
    %v2662 = vunpack.c.l.s8.bf16 %v2546
    %v2663 = vunpack.c.l.s8.bf16 %v2547
    %v2664 = vunpack.c.l.s8.bf16 %v2548
    %v2665 = vunpack.c.l.s8.bf16 %v2549
    %v2666 = vunpack.c.h.s8.bf16 %v2546
    %v2667 = vunpack.c.h.s8.bf16 %v2547
    %v2668 = vunpack.c.h.s8.bf16 %v2548
    %v2669 = vunpack.c.h.s8.bf16 %v2549
    %v2670 = vunpack.c.l.s8.bf16 %v2550
    %v2671 = vunpack.c.l.s8.bf16 %v2551
    %v2672 = vunpack.c.l.s8.bf16 %v2552
    %v2673 = vunpack.c.l.s8.bf16 %v2553
    %v2674 = vunpack.c.h.s8.bf16 %v2550
    %v2675 = vunpack.c.h.s8.bf16 %v2551
    %v2676 = vunpack.c.h.s8.bf16 %v2552
    %v2677 = vunpack.c.h.s8.bf16 %v2553
    %v2678 = vunpack.c.l.s8.bf16 %v2554
    %v2679 = vunpack.c.l.s8.bf16 %v2555
    %v2680 = vunpack.c.l.s8.bf16 %v2556
    %v2681 = vunpack.c.l.s8.bf16 %v2557
    %v2682 = vunpack.c.h.s8.bf16 %v2554
    %v2683 = vunpack.c.h.s8.bf16 %v2555
    %v2684 = vunpack.c.h.s8.bf16 %v2556
    %v2685 = vunpack.c.h.s8.bf16 %v2557
    %2686 = vmatprep.subr.bf16.mxu0 %v2559
    %2687 = vmatpush1.bf16.msra.mxu0 %v2558
    %2688 = vmatprep.subr.bf16.mxu0 %v2563
    %2689 = vmatpush1.bf16.msra.mxu0 %v2562
    %2690 = vmatprep.subr.bf16.mxu0 %v2567
    %2691 = vmatpush1.bf16.msra.mxu0 %v2566
    %2692 = vmatprep.subr.bf16.mxu0 %v2571
    %2693 = vmatpush1.bf16.msra.mxu0 %v2570
    %2694 = vmatprep.subr.bf16.mxu0 %v2575
    %2695 = vmatpush1.bf16.msra.mxu0 %v2574
    %2696 = vmatprep.subr.bf16.mxu0 %v2579
    %2697 = vmatpush1.bf16.msra.mxu0 %v2578
    %2698 = vmatprep.subr.bf16.mxu0 %v2583
    %2699 = vmatpush1.bf16.msra.mxu0 %v2582
    %2700 = vmatprep.subr.bf16.mxu0 %v2587
    %2701 = vmatpush1.bf16.msra.mxu0 %v2586
    %2702 = vmatprep.subr.bf16.mxu0 %v2591
    %2703 = vmatpush1.bf16.msra.mxu0 %v2590
    %2704 = vmatprep.subr.bf16.mxu0 %v2595
    %2705 = vmatpush1.bf16.msra.mxu0 %v2594
    %2706 = vmatprep.subr.bf16.mxu0 %v2599
    %2707 = vmatpush1.bf16.msra.mxu0 %v2598
    %2708 = vmatprep.subr.bf16.mxu0 %v2603
    %2709 = vmatpush1.bf16.msra.mxu0 %v2602
    %2710 = vmatprep.subr.bf16.mxu0 %v2607
    %2711 = vmatpush1.bf16.msra.mxu0 %v2606
    %2712 = vmatprep.subr.bf16.mxu0 %v2611
    %2713 = vmatpush1.bf16.msra.mxu0 %v2610
    %2714 = vmatprep.subr.bf16.mxu0 %v2615
    %2715 = vmatpush1.bf16.msra.mxu0 %v2614
    %2716 = vmatprep.subr.bf16.mxu0 %v2619
    %2717 = vmatpush1.bf16.msra.mxu0 %v2618
    %2718 = vmatprep.mubr.bf16.mxu0 %v2491
    %2719 = vmatmul.mubr.bf16.gmra.mrb[0].mxu0 %v2490
    %v2720 = vpop.f32.mrb[0].mxu0
    %v2721 = vadd.f32 0.0, %v2720
    %v2722 = vpop.f32.mrb[0].mxu0
    %v2723 = vadd.f32 0.0, %v2722
    %v2724 = vpop.f32.mrb[0].mxu0
    %v2725 = vadd.f32 0.0, %v2724
    %v2726 = vpop.f32.mrb[0].mxu0
    %v2727 = vadd.f32 0.0, %v2726
    %2728 = vdwg.mxu0
    %2729 = vmatprep.subr.bf16.mxu0 %v2623
    %2730 = vmatpush1.bf16.msra.mxu0 %v2622
    %2731 = vmatprep.subr.bf16.mxu0 %v2627
    %2732 = vmatpush1.bf16.msra.mxu0 %v2626
    %2733 = vmatprep.subr.bf16.mxu0 %v2631
    %2734 = vmatpush1.bf16.msra.mxu0 %v2630
    %2735 = vmatprep.subr.bf16.mxu0 %v2635
    %2736 = vmatpush1.bf16.msra.mxu0 %v2634
    %2737 = vmatprep.subr.bf16.mxu0 %v2639
    %2738 = vmatpush1.bf16.msra.mxu0 %v2638
    %2739 = vmatprep.subr.bf16.mxu0 %v2643
    %2740 = vmatpush1.bf16.msra.mxu0 %v2642
    %2741 = vmatprep.subr.bf16.mxu0 %v2647
    %2742 = vmatpush1.bf16.msra.mxu0 %v2646
    %2743 = vmatprep.subr.bf16.mxu0 %v2651
    %2744 = vmatpush1.bf16.msra.mxu0 %v2650
    %2745 = vmatprep.subr.bf16.mxu0 %v2655
    %2746 = vmatpush1.bf16.msra.mxu0 %v2654
    %2747 = vmatprep.subr.bf16.mxu0 %v2659
    %2748 = vmatpush1.bf16.msra.mxu0 %v2658
    %2749 = vmatprep.subr.bf16.mxu0 %v2663
    %2750 = vmatpush1.bf16.msra.mxu0 %v2662
    %2751 = vmatprep.subr.bf16.mxu0 %v2667
    %2752 = vmatpush1.bf16.msra.mxu0 %v2666
    %2753 = vmatprep.subr.bf16.mxu0 %v2671
    %2754 = vmatpush1.bf16.msra.mxu0 %v2670
    %2755 = vmatprep.subr.bf16.mxu0 %v2675
    %2756 = vmatpush1.bf16.msra.mxu0 %v2674
    %2757 = vmatprep.subr.bf16.mxu0 %v2679
    %2758 = vmatpush1.bf16.msra.mxu0 %v2678
    %2759 = vmatprep.subr.bf16.mxu0 %v2683
    %2760 = vmatpush1.bf16.msra.mxu0 %v2682
    %2761 = vmatprep.mubr.bf16.mxu0 %v2493
    %2762 = vmatmul.mubr.bf16.gmra.mrb[0].mxu0 %v2492
    %v2763 = vpop.f32.mrb[0].mxu0
    %v2764 = vadd.f32 %v2721, %v2763
    %v2765 = vpop.f32.mrb[0].mxu0
    %v2766 = vadd.f32 %v2723, %v2765
    %v2767 = vpop.f32.mrb[0].mxu0
    %v2768 = vadd.f32 %v2725, %v2767
    %v2769 = vpop.f32.mrb[0].mxu0
    %v2770 = vadd.f32 %v2727, %v2769
    %2771 = vdwg.mxu0
    %2772 = vmatprep.subr.bf16.mxu0 %v2561
    %2773 = vmatpush1.bf16.msra.mxu0 %v2560
    %2774 = vmatprep.subr.bf16.mxu0 %v2565
    %2775 = vmatpush1.bf16.msra.mxu0 %v2564
    %2776 = vmatprep.subr.bf16.mxu0 %v2569
    %2777 = vmatpush1.bf16.msra.mxu0 %v2568
    %2778 = vmatprep.subr.bf16.mxu0 %v2573
    %2779 = vmatpush1.bf16.msra.mxu0 %v2572
    %2780 = vmatprep.subr.bf16.mxu0 %v2577
    %2781 = vmatpush1.bf16.msra.mxu0 %v2576
    %2782 = vmatprep.subr.bf16.mxu0 %v2581
    %2783 = vmatpush1.bf16.msra.mxu0 %v2580
    %2784 = vmatprep.subr.bf16.mxu0 %v2585
    %2785 = vmatpush1.bf16.msra.mxu0 %v2584
    %2786 = vmatprep.subr.bf16.mxu0 %v2589
    %2787 = vmatpush1.bf16.msra.mxu0 %v2588
    %2788 = vmatprep.subr.bf16.mxu0 %v2593
    %2789 = vmatpush1.bf16.msra.mxu0 %v2592
    %2790 = vmatprep.subr.bf16.mxu0 %v2597
    %2791 = vmatpush1.bf16.msra.mxu0 %v2596
    %2792 = vmatprep.subr.bf16.mxu0 %v2601
    %2793 = vmatpush1.bf16.msra.mxu0 %v2600
    %2794 = vmatprep.subr.bf16.mxu0 %v2605
    %2795 = vmatpush1.bf16.msra.mxu0 %v2604
    %2796 = vmatprep.subr.bf16.mxu0 %v2609
    %2797 = vmatpush1.bf16.msra.mxu0 %v2608
    %2798 = vmatprep.subr.bf16.mxu0 %v2613
    %2799 = vmatpush1.bf16.msra.mxu0 %v2612
    %2800 = vmatprep.subr.bf16.mxu0 %v2617
    %2801 = vmatpush1.bf16.msra.mxu0 %v2616
    %2802 = vmatprep.subr.bf16.mxu0 %v2621
    %2803 = vmatpush1.bf16.msra.mxu0 %v2620
    %2804 = vmatprep.mubr.bf16.mxu0 %v2491
    %2805 = vmatmul.mubr.bf16.gmra.mrb[0].mxu0 %v2490
    %v2806 = vpop.f32.mrb[0].mxu0
    %v2807 = vadd.f32 0.0, %v2806
    %v2808 = vpop.f32.mrb[0].mxu0
    %v2809 = vadd.f32 0.0, %v2808
    %v2810 = vpop.f32.mrb[0].mxu0
    %v2811 = vadd.f32 0.0, %v2810
    %v2812 = vpop.f32.mrb[0].mxu0
    %v2813 = vadd.f32 0.0, %v2812
    %2814 = vdwg.mxu0
    %2815 = vmatprep.subr.bf16.mxu0 %v2625
    %2816 = vmatpush1.bf16.msra.mxu0 %v2624
    %2817 = vmatprep.subr.bf16.mxu0 %v2629
    %2818 = vmatpush1.bf16.msra.mxu0 %v2628
    %2819 = vmatprep.subr.bf16.mxu0 %v2633
    %2820 = vmatpush1.bf16.msra.mxu0 %v2632
    %2821 = vmatprep.subr.bf16.mxu0 %v2637
    %2822 = vmatpush1.bf16.msra.mxu0 %v2636
    %2823 = vmatprep.subr.bf16.mxu0 %v2641
    %2824 = vmatpush1.bf16.msra.mxu0 %v2640
    %2825 = vmatprep.subr.bf16.mxu0 %v2645
    %2826 = vmatpush1.bf16.msra.mxu0 %v2644
    %2827 = vmatprep.subr.bf16.mxu0 %v2649
    %2828 = vmatpush1.bf16.msra.mxu0 %v2648
    %2829 = vmatprep.subr.bf16.mxu0 %v2653
    %2830 = vmatpush1.bf16.msra.mxu0 %v2652
    %2831 = vmatprep.subr.bf16.mxu0 %v2657
    %2832 = vmatpush1.bf16.msra.mxu0 %v2656
    %2833 = vmatprep.subr.bf16.mxu0 %v2661
    %2834 = vmatpush1.bf16.msra.mxu0 %v2660
    %2835 = vmatprep.subr.bf16.mxu0 %v2665
    %2836 = vmatpush1.bf16.msra.mxu0 %v2664
    %2837 = vmatprep.subr.bf16.mxu0 %v2669
    %2838 = vmatpush1.bf16.msra.mxu0 %v2668
    %2839 = vmatprep.subr.bf16.mxu0 %v2673
    %2840 = vmatpush1.bf16.msra.mxu0 %v2672
    %2841 = vmatprep.subr.bf16.mxu0 %v2677
    %2842 = vmatpush1.bf16.msra.mxu0 %v2676
    %2843 = vmatprep.subr.bf16.mxu0 %v2681
    %2844 = vmatpush1.bf16.msra.mxu0 %v2680
    %2845 = vmatprep.subr.bf16.mxu0 %v2685
    %2846 = vmatpush1.bf16.msra.mxu0 %v2684
    %2847 = vmatprep.mubr.bf16.mxu0 %v2493
    %2848 = vmatmul.mubr.bf16.gmra.mrb[0].mxu0 %v2492
    %v2849 = vpop.f32.mrb[0].mxu0
    %v2850 = vadd.f32 %v2807, %v2849
    %v2851 = vpop.f32.mrb[0].mxu0
    %v2852 = vadd.f32 %v2809, %v2851
    %v2853 = vpop.f32.mrb[0].mxu0
    %v2854 = vadd.f32 %v2811, %v2853
    %v2855 = vpop.f32.mrb[0].mxu0
    %v2856 = vadd.f32 %v2813, %v2855
    %2857 = vdwg.mxu0
    %v2858 = vld [vmem:[%s7] sm:$0xf]
    %v2860 = vlaneseq
    %v2861 = vshrl.u32 %v2860, 7
    %v2862 = vsub.s32 0, %v2861
    %v2863 = vrot.slane %v2858, %v2862
    %v2864 = vlaneseq
    %v2865 = vshrl.u32 %v2864, 7
    %v2866 = vsub.s32 1, %v2865
    %v2867 = vrot.slane %v2858, %v2866
    %v2868 = vlaneseq
    %v2869 = vshrl.u32 %v2868, 7
    %v2870 = vsub.s32 2, %v2869
    %v2871 = vrot.slane %v2858, %v2870
    %v2872 = vlaneseq
    %v2873 = vshrl.u32 %v2872, 7
    %v2874 = vsub.s32 3, %v2873
    %v2875 = vrot.slane %v2858, %v2874
    %v2880 = vmul.f32 %v2764, %v2863
    %v2881 = vmul.f32 %v2766, %v2867
    %v2882 = vmul.f32 %v2850, %v2871
    %v2883 = vmul.f32 %v2852, %v2875
    %v2884 = vmul.f32 %v2768, %v2863
    %v2885 = vmul.f32 %v2770, %v2867
    %v2886 = vmul.f32 %v2854, %v2871
    %v2887 = vmul.f32 %v2856, %v2875
    %v2888 = vld [vmem:[%s8] sm:$0xf]
    %v2890 = vlaneseq
    %v2891 = vshrl.u32 %v2890, 7
    %v2892 = vsub.s32 0, %v2891
    %v2893 = vrot.slane %v2888, %v2892
    %v2894 = vlaneseq
    %v2895 = vshrl.u32 %v2894, 7
    %v2896 = vsub.s32 1, %v2895
    %v2897 = vrot.slane %v2888, %v2896
    %v2898 = vlaneseq
    %v2899 = vshrl.u32 %v2898, 7
    %v2900 = vsub.s32 2, %v2899
    %v2901 = vrot.slane %v2888, %v2900
    %v2902 = vlaneseq
    %v2903 = vshrl.u32 %v2902, 7
    %v2904 = vsub.s32 3, %v2903
    %v2905 = vrot.slane %v2888, %v2904
    %v2910 = vadd.f32 %v2880, %v2893
    %v2911 = vadd.f32 %v2881, %v2897
    %v2912 = vadd.f32 %v2882, %v2901
    %v2913 = vadd.f32 %v2883, %v2905
    %v2914 = vadd.f32 %v2884, %v2893
    %v2915 = vadd.f32 %v2885, %v2897
    %v2916 = vadd.f32 %v2886, %v2901
    %v2917 = vadd.f32 %v2887, %v2905
    %vm2918 = vcmp.gt.f32.partialorder %v2910, 0.0
    %vm2919 = vcmp.gt.f32.partialorder %v2911, 0.0
    %vm2920 = vcmp.gt.f32.partialorder %v2912, 0.0
    %vm2921 = vcmp.gt.f32.partialorder %v2913, 0.0
    %vm2922 = vcmp.gt.f32.partialorder %v2914, 0.0
    %vm2923 = vcmp.gt.f32.partialorder %v2915, 0.0
    %vm2924 = vcmp.gt.f32.partialorder %v2916, 0.0
    %vm2925 = vcmp.gt.f32.partialorder %v2917, 0.0
    %v2926 = vmul.f32 %v2910, 0.01
    %v2927 = vmul.f32 %v2911, 0.01
    %v2928 = vmul.f32 %v2912, 0.01
    %v2929 = vmul.f32 %v2913, 0.01
    %v2930 = vmul.f32 %v2914, 0.01
    %v2931 = vmul.f32 %v2915, 0.01
    %v2932 = vmul.f32 %v2916, 0.01
    %v2933 = vmul.f32 %v2917, 0.01
    %v2934 = vsel %vm2918, %v2910, %v2926
    %v2935 = vsel %vm2919, %v2911, %v2927
    %v2936 = vsel %vm2920, %v2912, %v2928
    %v2937 = vsel %vm2921, %v2913, %v2929
    %v2938 = vsel %vm2922, %v2914, %v2930
    %v2939 = vsel %vm2923, %v2915, %v2931
    %v2940 = vsel %vm2924, %v2916, %v2932
    %v2941 = vsel %vm2925, %v2917, %v2933
    %v2942 = vpack.c.bf16 %v2938, %v2934
    %v2943 = vpack.c.bf16 %v2939, %v2935
    %v2944 = vpack.c.bf16 %v2940, %v2936
    %v2945 = vpack.c.bf16 %v2941, %v2937
    %v2946 = vld [vmem:[#allocation7] sm:$0xff]
    %v2947 = vld [vmem:[#allocation7 + $0x8] sm:$0xff]
    %v2948 = vld [vmem:[#allocation7 + $0x10] sm:$0xff]
    %v2949 = vld [vmem:[#allocation7 + $0x18] sm:$0xff]
    %v2950 = vld [vmem:[#allocation7 + $0x20] sm:$0xff]
    %v2951 = vld [vmem:[#allocation7 + $0x28] sm:$0xff]
    %v2952 = vld [vmem:[#allocation7 + $0x30] sm:$0xff]
    %v2953 = vld [vmem:[#allocation7 + $0x38] sm:$0xff]
    %v2954 = vld [vmem:[#allocation7 + $0x40] sm:$0xff]
    %v2955 = vld [vmem:[#allocation7 + $0x48] sm:$0xff]
    %v2956 = vld [vmem:[#allocation7 + $0x50] sm:$0xff]
    %v2957 = vld [vmem:[#allocation7 + $0x58] sm:$0xff]
    %v2958 = vld [vmem:[#allocation7 + $0x60] sm:$0xff]
    %v2959 = vld [vmem:[#allocation7 + $0x68] sm:$0xff]
    %v2960 = vld [vmem:[#allocation7 + $0x70] sm:$0xff]
    %v2961 = vld [vmem:[#allocation7 + $0x78] sm:$0xff]
    %v2962 = vunpack.c.l.s8.bf16 %v2946
    %v2963 = vunpack.c.h.s8.bf16 %v2946
    %v2964 = vunpack.c.l.s8.bf16 %v2947
    %v2965 = vunpack.c.h.s8.bf16 %v2947
    %v2966 = vunpack.c.l.s8.bf16 %v2948
    %v2967 = vunpack.c.h.s8.bf16 %v2948
    %v2968 = vunpack.c.l.s8.bf16 %v2949
    %v2969 = vunpack.c.h.s8.bf16 %v2949
    %v2970 = vunpack.c.l.s8.bf16 %v2950
    %v2971 = vunpack.c.h.s8.bf16 %v2950
    %v2972 = vunpack.c.l.s8.bf16 %v2951
    %v2973 = vunpack.c.h.s8.bf16 %v2951
    %v2974 = vunpack.c.l.s8.bf16 %v2952
    %v2975 = vunpack.c.h.s8.bf16 %v2952
    %v2976 = vunpack.c.l.s8.bf16 %v2953
    %v2977 = vunpack.c.h.s8.bf16 %v2953
    %v2978 = vunpack.c.l.s8.bf16 %v2954
    %v2979 = vunpack.c.h.s8.bf16 %v2954
    %v2980 = vunpack.c.l.s8.bf16 %v2955
    %v2981 = vunpack.c.h.s8.bf16 %v2955
    %v2982 = vunpack.c.l.s8.bf16 %v2956
    %v2983 = vunpack.c.h.s8.bf16 %v2956
    %v2984 = vunpack.c.l.s8.bf16 %v2957
    %v2985 = vunpack.c.h.s8.bf16 %v2957
    %v2986 = vunpack.c.l.s8.bf16 %v2958
    %v2987 = vunpack.c.h.s8.bf16 %v2958
    %v2988 = vunpack.c.l.s8.bf16 %v2959
    %v2989 = vunpack.c.h.s8.bf16 %v2959
    %v2990 = vunpack.c.l.s8.bf16 %v2960
    %v2991 = vunpack.c.h.s8.bf16 %v2960
    %v2992 = vunpack.c.l.s8.bf16 %v2961
    %v2993 = vunpack.c.h.s8.bf16 %v2961
    %2994 = vmatprep.subr.bf16.mxu0 0
    %2995 = vmatpush1.bf16.msra.mxu0 %v2962
    %2996 = vmatprep.subr.bf16.mxu0 0
    %2997 = vmatpush1.bf16.msra.mxu0 %v2963
    %2998 = vmatprep.subr.bf16.mxu0 0
    %2999 = vmatpush1.bf16.msra.mxu0 %v2964
    %3000 = vmatprep.subr.bf16.mxu0 0
    %3001 = vmatpush1.bf16.msra.mxu0 %v2965
    %3002 = vmatprep.subr.bf16.mxu0 0
    %3003 = vmatpush1.bf16.msra.mxu0 %v2966
    %3004 = vmatprep.subr.bf16.mxu0 0
    %3005 = vmatpush1.bf16.msra.mxu0 %v2967
    %3006 = vmatprep.subr.bf16.mxu0 0
    %3007 = vmatpush1.bf16.msra.mxu0 %v2968
    %3008 = vmatprep.subr.bf16.mxu0 0
    %3009 = vmatpush1.bf16.msra.mxu0 %v2969
    %3010 = vmatprep.subr.bf16.mxu0 0
    %3011 = vmatpush1.bf16.msra.mxu0 %v2970
    %3012 = vmatprep.subr.bf16.mxu0 0
    %3013 = vmatpush1.bf16.msra.mxu0 %v2971
    %3014 = vmatprep.subr.bf16.mxu0 0
    %3015 = vmatpush1.bf16.msra.mxu0 %v2972
    %3016 = vmatprep.subr.bf16.mxu0 0
    %3017 = vmatpush1.bf16.msra.mxu0 %v2973
    %3018 = vmatprep.subr.bf16.mxu0 0
    %3019 = vmatpush1.bf16.msra.mxu0 %v2974
    %3020 = vmatprep.subr.bf16.mxu0 0
    %3021 = vmatpush1.bf16.msra.mxu0 %v2975
    %3022 = vmatprep.subr.bf16.mxu0 0
    %3023 = vmatpush1.bf16.msra.mxu0 %v2976
    %3024 = vmatprep.subr.bf16.mxu0 0
    %3025 = vmatpush1.bf16.msra.mxu0 %v2977
    %3026 = vmatprep.mubr.bf16.mxu0 %v2943
    %3027 = vmatmul.mubr.bf16.gmra.mrb[0].mxu0 %v2942
    %v3028 = vpop.f32.mrb[0].mxu0
    %v3029 = vadd.f32 0.0, %v3028
    %v3030 = vpop.f32.mrb[0].mxu0
    %v3031 = vpop.f32.mrb[0].mxu0
    %v3032 = vadd.f32 0.0, %v3031
    %v3033 = vpop.f32.mrb[0].mxu0
    %3034 = vdwg.mxu0
    %3035 = vmatprep.subr.bf16.mxu0 0
    %3036 = vmatpush1.bf16.msra.mxu0 %v2978
    %3037 = vmatprep.subr.bf16.mxu0 0
    %3038 = vmatpush1.bf16.msra.mxu0 %v2979
    %3039 = vmatprep.subr.bf16.mxu0 0
    %3040 = vmatpush1.bf16.msra.mxu0 %v2980
    %3041 = vmatprep.subr.bf16.mxu0 0
    %3042 = vmatpush1.bf16.msra.mxu0 %v2981
    %3043 = vmatprep.subr.bf16.mxu0 0
    %3044 = vmatpush1.bf16.msra.mxu0 %v2982
    %3045 = vmatprep.subr.bf16.mxu0 0
    %3046 = vmatpush1.bf16.msra.mxu0 %v2983
    %3047 = vmatprep.subr.bf16.mxu0 0
    %3048 = vmatpush1.bf16.msra.mxu0 %v2984
    %3049 = vmatprep.subr.bf16.mxu0 0
    %3050 = vmatpush1.bf16.msra.mxu0 %v2985
    %3051 = vmatprep.subr.bf16.mxu0 0
    %3052 = vmatpush1.bf16.msra.mxu0 %v2986
    %3053 = vmatprep.subr.bf16.mxu0 0
    %3054 = vmatpush1.bf16.msra.mxu0 %v2987
    %3055 = vmatprep.subr.bf16.mxu0 0
    %3056 = vmatpush1.bf16.msra.mxu0 %v2988
    %3057 = vmatprep.subr.bf16.mxu0 0
    %3058 = vmatpush1.bf16.msra.mxu0 %v2989
    %3059 = vmatprep.subr.bf16.mxu0 0
    %3060 = vmatpush1.bf16.msra.mxu0 %v2990
    %3061 = vmatprep.subr.bf16.mxu0 0
    %3062 = vmatpush1.bf16.msra.mxu0 %v2991
    %3063 = vmatprep.subr.bf16.mxu0 0
    %3064 = vmatpush1.bf16.msra.mxu0 %v2992
    %3065 = vmatprep.subr.bf16.mxu0 0
    %3066 = vmatpush1.bf16.msra.mxu0 %v2993
    %3067 = vmatprep.mubr.bf16.mxu0 %v2945
    %3068 = vmatmul.mubr.bf16.gmra.mrb[0].mxu0 %v2944
    %v3069 = vpop.f32.mrb[0].mxu0
    %v3070 = vadd.f32 %v3029, %v3069
    %v3071 = vpop.f32.mrb[0].mxu0
    %v3072 = vpop.f32.mrb[0].mxu0
    %v3073 = vadd.f32 %v3032, %v3072
    %v3074 = vpop.f32.mrb[0].mxu0
    %3075 = vdwg.mxu0
    %v3076 = vld [vmem:[%s10] sm:$0x1]
    %v3078 = vlaneseq
    %v3079 = vshrl.u32 %v3078, 7
    %v3080 = vsub.s32 0, %v3079
    %v3081 = vrot.slane %v3076, %v3080
    %v3083 = vmul.f32 %v3070, %v3081
    %v3084 = vmul.f32 %v3073, %v3081
    %v3085 = vld [vmem:[%s11] sm:$0x1]
    %v3087 = vlaneseq
    %v3088 = vshrl.u32 %v3087, 7
    %v3089 = vsub.s32 0, %v3088
    %v3090 = vrot.slane %v3085, %v3089
    %v3092 = vadd.f32 %v3083, %v3090
    %v3093 = vadd.f32 %v3084, %v3090
    %v3094 = vtanh.pop %v3092
    %v3095 = vtanh.pop %v3093
    %v3096 = vpack.c.bf16 %v3095, %v3094
    %v3098 = vunpack.c.l.b16 %v3096
    %v3099 = vunpack.c.h.b16 %v3096
    %v3100 = vpack.c.b16 %v3098, %v3098
    %v3101 = vpack.c.b16 %v3099, %v3099
    %3104 = vst [vmem:[%s12] sm:$0xf] %v3100
    %3105 = vst [vmem:[%s12 + $0x4] sm:$0xf] %v3101
    // Predicated region
    $region66: #{mlp_forward.1} parent=1 // pred_check
      _
    $region67: #{mlp_forward.1} parent=1 // pred_check_branch
      %3107 = sbr.rel (0) target = $region69
    $region68: #{mlp_forward.1} parent=1 // pred_region
      _
    $region69: #{mlp_forward.1} parent=1 // pred_fallthru
      _
    // Predicated region
    $region70: #{mlp_forward.1} parent=1 // pred_check
      _
    $region71: #{mlp_forward.1} parent=1 // pred_check_branch
      %3109 = sbr.rel (0) target = $region73
    $region72: #{mlp_forward.1} parent=1 // pred_region
      _
    $region73: #{mlp_forward.1} parent=1 // pred_fallthru
      _
    %3110 = vsyncpa [#allocation3], 1
    %3111 = vsyncpa [#allocation5], 1
    %3112 = vsyncpa [#allocation8], 1

</llo_original>
